<compile_context>
chip_gen: v7x
topology: tpu7x:2x2x1
jax: 0.10.0
libtpu: 0.0.40
codegen_flags: <defaults>
</compile_context>

<pallas_src>
import functools
import math

import jax
import jax.numpy as jnp
from jax import lax
from jax.experimental import pallas as pl
from jax.experimental.pallas import tpu as pltpu


def _layernorm(x, gamma, beta, eps):
    mean = jnp.mean(x, axis=-1, keepdims=True)
    var = jnp.mean((x - mean) ** 2, axis=-1, keepdims=True)
    return (x - mean) / jnp.sqrt(var + eps) * gamma + beta


# ----------------------------------------------------------------------------
# Fused encoder-layer kernel.  Grid = (B, S // block_q).
# ----------------------------------------------------------------------------
def _encoder_layer_kernel(x_ref,
                          wq_ref, bq_ref, wkv_ref, bkv_ref, wo_ref, bo_ref,
                          ln1g_ref, ln1b_ref,
                          w1_ref, b1_ref, w2_ref, b2_ref,
                          ln2g_ref, ln2b_ref,
                          o_ref,
                          k_scr, v_scr, ctx_scr,
                          *, h, d_k, block_q, kv_slab, eps,
                          compute_dtype, approx_recip):
    qi = pl.program_id(1)
    D = h * d_k
    S = x_ref.shape[1]
    cd = compute_dtype

    # ---- per-batch prologue: LN1 + fused K/V projection over the full sequence,
    #      chunked into kv_slab-row slabs so f32 transients stay small.  Runs once
    #      per batch element (the q-tile axis is "arbitrary"/sequential, so the
    #      scratch-carried dependency is legal); the x block is not re-DMA'd across
    #      q-tiles because its block index only depends on the batch axis.
    @pl.when(qi == 0)
    def _():
        @pl.loop(0, S // kv_slab)
        def _(si):
            r0 = pl.multiple_of(si * kv_slab, kv_slab)
            xs = x_ref[0, pl.ds(r0, kv_slab), :].astype(jnp.float32)      # (slab, D)
            xn = _layernorm(xs, ln1g_ref[...], ln1b_ref[...], eps)
            kv = jnp.dot(xn.astype(cd), wkv_ref[...],
                         preferred_element_type=jnp.float32) + bkv_ref[...]  # (slab, 2D)
            k_scr[pl.ds(r0, kv_slab), :] = kv[:, 0:D].astype(cd)
            v_scr[pl.ds(r0, kv_slab), :] = kv[:, D:2 * D].astype(cd)

    # ---- per-q-tile body ----
    row0 = pl.multiple_of(qi * block_q, block_q)
    x_tile = x_ref[0, pl.ds(row0, block_q), :].astype(jnp.float32)        # (TQ, D)
    xn_tile = _layernorm(x_tile, ln1g_ref[...], ln1b_ref[...], eps)
    # Q only for this tile: each Q row is consumed exactly once, so a full-sequence
    # Q scratch would be pure VMEM / bandwidth cost.
    q_tile = (jnp.dot(xn_tile.astype(cd), wq_ref[...],
                      preferred_element_type=jnp.float32) + bq_ref[...]).astype(cd)

    scale = 1.0 / math.sqrt(d_k)
    # Per-head attention; each head's context is stored through a VMEM scratch slice
    # so its (TQ, S) score/prob tensors go dead before the next head starts.
    # TODO(synk): for very long S (>~1-2K) switch to a flash-style KV-tile loop
    #             (online softmax) so the live score tile is (TQ, block_k).
    # TODO(synk): for d_k < 128 a head-major (h, S, d_k) K/V scratch layout would
    #             keep per-head slices 128-lane aligned (fewer relayouts).
    for i in range(h):
        lo = i * d_k
        q_h = q_tile[:, lo:lo + d_k]                                      # (TQ, d_k)
        k_h = k_scr[:, lo:lo + d_k]                                       # (S,  d_k)
        v_h = v_scr[:, lo:lo + d_k]                                       # (S,  d_k)
        # scores = q_h @ k_h.T  (contract on d_k; no explicit transpose)
        s = lax.dot_general(q_h, k_h, (((1,), (1,)), ((), ())),
                            preferred_element_type=jnp.float32) * scale   # (TQ, S) f32
        m = jnp.max(s, axis=-1, keepdims=True)
        p = jnp.exp(s - m)                                                # unnormalized
        l = jnp.sum(p, axis=-1, keepdims=True)
        ctx_h = jnp.dot(p.astype(cd), v_h,
                        preferred_element_type=jnp.float32)               # (TQ, d_k) f32
        # normalize the small (TQ, d_k) context, not the (TQ, S) probabilities
        ctx_scr[:, lo:lo + d_k] = ctx_h * pl.reciprocal(l, approx=approx_recip)

    attn_out = jnp.dot(ctx_scr[...].astype(cd), wo_ref[...],
                       preferred_element_type=jnp.float32) + bo_ref[...]
    y = x_tile + attn_out                                   # residual 1 (dropout = id)

    # ---- positionwise FFN sublayer (fused, y never leaves VMEM) ----
    yn = _layernorm(y, ln2g_ref[...], ln2b_ref[...], eps)
    hdn = jnp.dot(yn.astype(cd), w1_ref[...],
                  preferred_element_type=jnp.float32) + b1_ref[...]
    hdn = jnp.maximum(hdn, 0.0)                                           # ReLU
    ffn_out = jnp.dot(hdn.astype(cd), w2_ref[...],
                      preferred_element_type=jnp.float32) + b2_ref[...]
    z = y + ffn_out                                          # residual 2 (dropout = id)

    o_ref[0] = z.astype(o_ref.dtype)


# ----------------------------------------------------------------------------
# Wrapper helpers
# ----------------------------------------------------------------------------
def _largest_divisor(n, candidates):
    for c in candidates:
        if n % c == 0:
            return c
    return n


def _vmem_capacity_bytes():
    try:
        return int(pltpu.get_tpu_info().vmem_capacity_bytes)
    except Exception:
        return 64 * 1024 * 1024      # conservative (v7x-sized) fallback


def _build_call(*, B, S, D, d_ff, h, d_k, block_q, kv_slab, eps, cd,
                approx_recip, out_dtype, use_buffered, small_vmem, vmem_limit):
    kernel = functools.partial(
        _encoder_layer_kernel, h=h, d_k=d_k, block_q=block_q, kv_slab=kv_slab,
        eps=eps, compute_dtype=cd, approx_recip=approx_recip)

    def weight_spec(shape):
        # Weight / bias / LN index maps are constant across the grid, so a single
        # buffer suffices; double-buffering them only doubles their VMEM footprint.
        if use_buffered:
            return pl.BlockSpec(shape, lambda b, qi: (0, 0),
                                pipeline_mode=pl.Buffered(1))
        return pl.BlockSpec(shape, lambda b, qi: (0, 0))

    if use_buffered:
        # On small-VMEM parts (v7x, 64 MiB) single-buffer x: one exposed DMA per
        # batch element is negligible next to the per-batch compute.  On 128 MiB
        # parts keep double-buffering so the next batch's x fetch stays hidden.
        x_spec = pl.BlockSpec((1, S, D), lambda b, qi: (b, 0, 0),
                              pipeline_mode=pl.Buffered(1 if small_vmem else 2))
    else:
        x_spec = pl.BlockSpec((1, S, D), lambda b, qi: (b, 0, 0))
    out_spec = pl.BlockSpec((1, block_q, D), lambda b, qi: (b, qi, 0))

    # Advisory cost estimate for XLA's scheduler.
    itemsize = cd.itemsize
    flops = int(B * (8 * S * D * D          # QKV + output projections
                     + 4 * S * S * D        # QK^T + PV over all heads
                     + 4 * S * D * d_ff))   # FFN matmuls
    transcendentals = int(B * h * S * S)    # softmax exp
    bytes_accessed = int(2 * B * S * D * 4
                         + (4 * D * D + 2 * D * d_ff) * itemsize
                         + (10 * D + d_ff) * 4)

    return pl.pallas_call(
        kernel,
        out_shape=jax.ShapeDtypeStruct((B, S, D), out_dtype),
        grid_spec=pltpu.PrefetchScalarGridSpec(
            num_scalar_prefetch=0,
            grid=(B, S // block_q),
            in_specs=[x_spec,
                      weight_spec((D, D)), weight_spec((1, D)),            # wq, bq
                      weight_spec((D, 2 * D)), weight_spec((1, 2 * D)),    # wkv, bkv
                      weight_spec((D, D)), weight_spec((1, D)),            # wo, bo
                      weight_spec((1, D)), weight_spec((1, D)),            # ln1 g/b
                      weight_spec((D, d_ff)), weight_spec((1, d_ff)),      # w1, b1
                      weight_spec((d_ff, D)), weight_spec((1, D)),         # w2, b2
                      weight_spec((1, D)), weight_spec((1, D))],           # ln2 g/b
            out_specs=out_spec,
            scratch_shapes=[pltpu.VMEM((S, D), cd),                 # K (full seq)
                            pltpu.VMEM((S, D), cd),                 # V (full seq)
                            pltpu.VMEM((block_q, D), jnp.float32)]),  # per-tile ctx
        compiler_params=pltpu.CompilerParams(
            # batch axis is megacore-parallel; the q-tile axis carries the per-batch
            # K/V scratch dependency so it must stay sequential ("arbitrary").
            # TODO(synk): for B == 1 on v7x, compute K/V redundantly per core so the
            #             q-tile axis can be made parallel across the 2 TensorCores.
            dimension_semantics=("parallel", "arbitrary"),
            vmem_limit_bytes=vmem_limit),
        cost_estimate=pl.CostEstimate(flops=flops,
                                      transcendentals=transcendentals,
                                      bytes_accessed=bytes_accessed),
    )


def encoder_layer(x, params, *, h, eps=1e-6, compute_dtype=jnp.bfloat16,
                  block_q=None, kv_slab=None):
    B, S, D = x.shape
    assert D % h == 0
    d_k = D // h
    d_ff = params['w1'].shape[1]

    if block_q is None:
        block_q = _largest_divisor(S, (256, 128, 64, 32, 16, 8)) if S % 8 == 0 else S
    assert S % block_q == 0, "block_q must divide the sequence length"
    if kv_slab is None:
        kv_slab = _largest_divisor(S, (512, 256, 128, 64, 32, 16, 8)) if S % 8 == 0 else S
    assert S % kv_slab == 0, "kv_slab must divide the sequence length"

    cd = jnp.dtype(compute_dtype)
    approx_recip = (cd != jnp.dtype(jnp.float32))

    vmem_cap = _vmem_capacity_bytes()
    small_vmem = vmem_cap < (96 << 20)                   # v7x (64 MiB) vs v5e/v6e (128 MiB)
    vmem_limit = int(min(vmem_cap * 0.85, 112 * 1024 * 1024))

    # Fused K/V weights; weights pre-cast to the MXU operand dtype (halves weight
    # DMA bytes and VMEM footprint in the bf16 path).
    wq = params['wq'].astype(cd)
    wkv = jnp.concatenate([params['wk'], params['wv']], axis=1).astype(cd)
    bkv = jnp.concatenate([params['bk'], params['bv']], axis=1)
    wo = params['wo'].astype(cd)
    w1 = params['w1'].astype(cd)
    w2 = params['w2'].astype(cd)

    args = (x, wq, params['bq'], wkv, bkv, wo, params['bo'],
            params['ln1_g'], params['ln1_b'],
            w1, params['b1'], w2, params['b2'],
            params['ln2_g'], params['ln2_b'])

    common = dict(B=B, S=S, D=D, d_ff=d_ff, h=h, d_k=d_k, block_q=block_q,
                  kv_slab=kv_slab, eps=eps, cd=cd, approx_recip=approx_recip,
                  out_dtype=x.dtype, small_vmem=small_vmem, vmem_limit=vmem_limit)
    try:
        return _build_call(use_buffered=True, **common)(*args)
    except Exception:
        # pipeline_mode / pl.Buffered(1) unsupported on this jax version: fall back
        # to default (double-buffered) BlockSpecs -- same kernel, same semantics.
        return _build_call(use_buffered=False, **common)(*args)


# ----------------------------------------------------------------------------
# Pure-JAX reference (correctness check)
# ----------------------------------------------------------------------------
def encoder_layer_ref(x, params, *, h, eps=1e-6):
    B, S, D = x.shape
    d_k = D // h

    def ln(v, g, b):
        m = jnp.mean(v, -1, keepdims=True)
        s = jnp.mean((v - m) ** 2, -1, keepdims=True)
        return (v - m) / jnp.sqrt(s + eps) * g + b

    xn = ln(x, params['ln1_g'], params['ln1_b'])
    q = xn @ params['wq'] + params['bq']
    k = xn @ params['wk'] + params['bk']
    v = xn @ params['wv'] + params['bv']
    qh = q.reshape(B, S, h, d_k)
    kh = k.reshape(B, S, h, d_k)
    vh = v.reshape(B, S, h, d_k)
    sc = jnp.einsum('bqhd,bkhd->bhqk', qh, kh) / math.sqrt(d_k)
    p = jax.nn.softmax(sc, axis=-1)
    ctx = jnp.einsum('bhqk,bkhd->bqhd', p, vh).reshape(B, S, D)
    y = x + (ctx @ params['wo'] + params['bo'])

    yn = ln(y, params['ln2_g'], params['ln2_b'])
    hdn = jnp.maximum(yn @ params['w1'] + params['b1'], 0.0)
    z = y + (hdn @ params['w2'] + params['b2'])
    return z


if __name__ == "__main__":
    # small shapes consistent with the module: h heads, d_model, d_ff
    B, S, D, H, DFF = 2, 16, 32, 4, 64
    dropout_prob = 0.1  # unused (eval-mode dropout = identity)

    key = jax.random.PRNGKey(0)
    ks = jax.random.split(key, 8)
    init = lambda k, shape: (0.02 * jax.random.normal(k, shape)).astype(jnp.float32)

    params = dict(
        wq=init(ks[0], (D, D)), wk=init(ks[1], (D, D)),
        wv=init(ks[2], (D, D)), wo=init(ks[3], (D, D)),
        bq=jnp.zeros((1, D), jnp.float32), bk=jnp.zeros((1, D), jnp.float32),
        bv=jnp.zeros((1, D), jnp.float32), bo=jnp.zeros((1, D), jnp.float32),
        ln1_g=jnp.ones((1, D), jnp.float32), ln1_b=jnp.zeros((1, D), jnp.float32),
        w1=init(ks[4], (D, DFF)), b1=jnp.zeros((1, DFF), jnp.float32),
        w2=init(ks[5], (DFF, D)), b2=jnp.zeros((1, D), jnp.float32),
        ln2_g=jnp.ones((1, D), jnp.float32), ln2_b=jnp.zeros((1, D), jnp.float32),
    )

    x = jax.random.normal(ks[6], (B, S, D), jnp.float32)
    ref = encoder_layer_ref(x, params, h=H)

    # f32 compute path (tight tolerance); block_q=8, kv_slab=8 -> grid (B, 2) and a
    # 2-slab prologue, exercising both the q-tiling and the chunked K/V projection.
    out_f32 = jax.block_until_ready(
        encoder_layer(x, params, h=H, compute_dtype=jnp.float32,
                      block_q=8, kv_slab=8))
    assert out_f32.shape == (B, S, D)
    assert jnp.allclose(out_f32, ref, atol=2e-4, rtol=2e-4), "f32 mismatch vs JAX reference"

    # bf16 MXU-operand path (recommended perf configuration); looser tolerance.
    out_bf16 = jax.block_until_ready(
        encoder_layer(x, params, h=H, compute_dtype=jnp.bfloat16,
                      block_q=8, kv_slab=8))
    assert out_bf16.shape == (B, S, D)
    assert jnp.allclose(out_bf16, ref, atol=2e-2, rtol=2e-2), "bf16 mismatch vs JAX reference"

    print("KERNEL_OK")
</pallas_src>

<mosaic_0001>
module attributes {stable_mosaic.version = 11 : i64} {
  func.func @_encoder_layer_kernel(%arg0: i32, %arg1: i32, %arg2: memref<1x16x32xf32, #tpu.memory_space<vmem>>, %arg3: memref<32x32xf32, #tpu.memory_space<vmem>>, %arg4: memref<1x32xf32, #tpu.memory_space<vmem>>, %arg5: memref<32x64xf32, #tpu.memory_space<vmem>>, %arg6: memref<1x64xf32, #tpu.memory_space<vmem>>, %arg7: memref<32x32xf32, #tpu.memory_space<vmem>>, %arg8: memref<1x32xf32, #tpu.memory_space<vmem>>, %arg9: memref<1x32xf32, #tpu.memory_space<vmem>>, %arg10: memref<1x32xf32, #tpu.memory_space<vmem>>, %arg11: memref<32x64xf32, #tpu.memory_space<vmem>>, %arg12: memref<1x64xf32, #tpu.memory_space<vmem>>, %arg13: memref<64x32xf32, #tpu.memory_space<vmem>>, %arg14: memref<1x32xf32, #tpu.memory_space<vmem>>, %arg15: memref<1x32xf32, #tpu.memory_space<vmem>>, %arg16: memref<1x32xf32, #tpu.memory_space<vmem>>, %arg17: memref<1x8x32xf32, #tpu.memory_space<vmem>>, %arg18: memref<16x32xf32, #tpu.memory_space<vmem>>, %arg19: memref<16x32xf32, #tpu.memory_space<vmem>>, %arg20: memref<8x32xf32, #tpu.memory_space<vmem>>) attributes {dimension_semantics = [#tpu.dimension_semantics<parallel>, #tpu.dimension_semantics<arbitrary>], iteration_bounds = array<i64: 2, 2>, scalar_prefetch = 0 : i64, scratch_operands = 3 : i64, tpu.core_type = #tpu.core_type<tc>, window_params = [{pipeline_mode = #tpu.pipeline_mode<synchronous>, transform_indices = @transform_0, window_bounds = array<i64: 1, 16, 32>}, {pipeline_mode = #tpu.pipeline_mode<synchronous>, transform_indices = @transform_1, window_bounds = array<i64: 32, 32>}, {pipeline_mode = #tpu.pipeline_mode<synchronous>, transform_indices = @transform_2, window_bounds = array<i64: 1, 32>}, {pipeline_mode = #tpu.pipeline_mode<synchronous>, transform_indices = @transform_3, window_bounds = array<i64: 32, 64>}, {pipeline_mode = #tpu.pipeline_mode<synchronous>, transform_indices = @transform_4, window_bounds = array<i64: 1, 64>}, {pipeline_mode = #tpu.pipeline_mode<synchronous>, transform_indices = @transform_5, window_bounds = array<i64: 32, 32>}, {pipeline_mode = #tpu.pipeline_mode<synchronous>, transform_indices = @transform_6, window_bounds = array<i64: 1, 32>}, {pipeline_mode = #tpu.pipeline_mode<synchronous>, transform_indices = @transform_7, window_bounds = array<i64: 1, 32>}, {pipeline_mode = #tpu.pipeline_mode<synchronous>, transform_indices = @transform_8, window_bounds = array<i64: 1, 32>}, {pipeline_mode = #tpu.pipeline_mode<synchronous>, transform_indices = @transform_9, window_bounds = array<i64: 32, 64>}, {pipeline_mode = #tpu.pipeline_mode<synchronous>, transform_indices = @transform_10, window_bounds = array<i64: 1, 64>}, {pipeline_mode = #tpu.pipeline_mode<synchronous>, transform_indices = @transform_11, window_bounds = array<i64: 64, 32>}, {pipeline_mode = #tpu.pipeline_mode<synchronous>, transform_indices = @transform_12, window_bounds = array<i64: 1, 32>}, {pipeline_mode = #tpu.pipeline_mode<synchronous>, transform_indices = @transform_13, window_bounds = array<i64: 1, 32>}, {pipeline_mode = #tpu.pipeline_mode<synchronous>, transform_indices = @transform_14, window_bounds = array<i64: 1, 32>}, {transform_indices = @transform_15, window_bounds = array<i64: 1, 8, 32>}]} {
    %c0_i32 = arith.constant 0 : i32
    %0 = arith.cmpi eq, %arg1, %c0_i32 : i32
    %1 = arith.extui %0 : i1 to i32
    %c0_i32_0 = arith.constant 0 : i32
    %2 = arith.cmpi ne, %1, %c0_i32_0 : i32
    scf.if %2 {
      %c0_i32_86 = arith.constant 0 : i32
      %c2_i32 = arith.constant 2 : i32
      %156 = arith.addi %c0_i32_86, %c2_i32 : i32
      %c1_i32 = arith.constant 1 : i32
      scf.for %arg21 = %c0_i32_86 to %156 step %c1_i32  : i32 {
        %c1_i32_88 = arith.constant 1 : i32
        %157 = arith.muli %arg21, %c1_i32_88 : i32
        %c0_i32_89 = arith.constant 0 : i32
        %158 = arith.addi %c0_i32_89, %157 : i32
        %c8_i32_90 = arith.constant 8 : i32
        %159 = arith.muli %158, %c8_i32_90 : i32
        %160 = tpu.assume_multiple %159, 8 : i32
        %c0_91 = arith.constant 0 : index
        %161 = arith.index_cast %160 : i32 to index
        %c0_92 = arith.constant 0 : index
        %162 = vector.load %arg2[%c0_91, %161, %c0_92] : memref<1x16x32xf32, #tpu.memory_space<vmem>>, vector<1x8x32xf32>
        %163 = vector.shape_cast %162 : vector<1x8x32xf32> to vector<8x32xf32>
        %c0_93 = arith.constant 0 : index
        %c0_94 = arith.constant 0 : index
        %164 = vector.load %arg9[%c0_93, %c0_94] : memref<1x32xf32, #tpu.memory_space<vmem>>, vector<1x32xf32>
        %c0_95 = arith.constant 0 : index
        %c0_96 = arith.constant 0 : index
        %165 = vector.load %arg10[%c0_95, %c0_96] : memref<1x32xf32, #tpu.memory_space<vmem>>, vector<1x32xf32>
        %cst_97 = arith.constant dense<0.000000e+00> : vector<8xf32>
        %166 = vector.multi_reduction <add>, %163, %cst_97 [1] : vector<8x32xf32> to vector<8xf32>
        %167 = vector.shape_cast %166 : vector<8xf32> to vector<8x1xf32>
        %cst_98 = arith.constant 3.200000e+01 : f32
        %168 = vector.broadcast %cst_98 : f32 to vector<8x1xf32>
        %169 = arith.divf %167, %168 : vector<8x1xf32>
        %170 = vector.broadcast %169 : vector<8x1xf32> to vector<8x32xf32>
        %171 = arith.subf %163, %170 : vector<8x32xf32>
        %172 = arith.mulf %171, %171 : vector<8x32xf32>
        %cst_99 = arith.constant dense<0.000000e+00> : vector<8xf32>
        %173 = vector.multi_reduction <add>, %172, %cst_99 [1] : vector<8x32xf32> to vector<8xf32>
        %174 = vector.shape_cast %173 : vector<8xf32> to vector<8x1xf32>
        %cst_100 = arith.constant 3.200000e+01 : f32
        %175 = vector.broadcast %cst_100 : f32 to vector<8x1xf32>
        %176 = arith.divf %174, %175 : vector<8x1xf32>
        %177 = vector.broadcast %169 : vector<8x1xf32> to vector<8x32xf32>
        %178 = arith.subf %163, %177 : vector<8x32xf32>
        %cst_101 = arith.constant 9.99999997E-7 : f32
        %179 = vector.broadcast %cst_101 : f32 to vector<8x1xf32>
        %180 = arith.addf %176, %179 : vector<8x1xf32>
        %181 = math.sqrt %180 : vector<8x1xf32>
        %182 = vector.broadcast %181 : vector<8x1xf32> to vector<8x32xf32>
        %183 = arith.divf %178, %182 : vector<8x32xf32>
        %184 = vector.broadcast %164 : vector<1x32xf32> to vector<8x32xf32>
        %185 = arith.mulf %183, %184 : vector<8x32xf32>
        %186 = vector.broadcast %165 : vector<1x32xf32> to vector<8x32xf32>
        %187 = arith.addf %185, %186 : vector<8x32xf32>
        %c0_102 = arith.constant 0 : index
        %c0_103 = arith.constant 0 : index
        %188 = vector.load %arg5[%c0_102, %c0_103] : memref<32x64xf32, #tpu.memory_space<vmem>>, vector<32x64xf32>
        %cst_104 = arith.constant dense<0.000000e+00> : vector<8x64xf32>
        %189 = tpu.matmul %187, %188, %cst_104 {dimension_numbers = #tpu.dot_dimension_numbers<[1], [0], [0], [1], [0, 0, 1, 1], [], []>} : vector<8x32xf32>, vector<32x64xf32>, vector<8x64xf32> -> vector<8x64xf32>
        %c0_105 = arith.constant 0 : index
        %c0_106 = arith.constant 0 : index
        %190 = vector.load %arg6[%c0_105, %c0_106] : memref<1x64xf32, #tpu.memory_space<vmem>>, vector<1x64xf32>
        %191 = vector.broadcast %190 : vector<1x64xf32> to vector<8x64xf32>
        %192 = arith.addf %189, %191 : vector<8x64xf32>
        %193 = vector.extract_strided_slice %192 {offsets = [0, 0], sizes = [8, 32], strides = [1, 1]} : vector<8x64xf32> to vector<8x32xf32>
        %194 = arith.index_cast %160 : i32 to index
        %c0_107 = arith.constant 0 : index
        %195 = vector.load %arg18[%194, %c0_107] : memref<16x32xf32, #tpu.memory_space<vmem>>, vector<8x32xf32>
        tpu.vector_store %arg18[%194, %c0_107], %193 {strides = array<i32>} : memref<16x32xf32, #tpu.memory_space<vmem>>, vector<8x32xf32>,
        %196 = vector.extract_strided_slice %192 {offsets = [0, 32], sizes = [8, 32], strides = [1, 1]} : vector<8x64xf32> to vector<8x32xf32>
        %197 = arith.index_cast %160 : i32 to index
        %c0_108 = arith.constant 0 : index
        %198 = vector.load %arg19[%197, %c0_108] : memref<16x32xf32, #tpu.memory_space<vmem>>, vector<8x32xf32>
        tpu.vector_store %arg19[%197, %c0_108], %196 {strides = array<i32>} : memref<16x32xf32, #tpu.memory_space<vmem>>, vector<8x32xf32>,
      }
      %c2_i32_87 = arith.constant 2 : i32
    } else {
    }
    %c8_i32 = arith.constant 8 : i32
    %3 = arith.muli %arg1, %c8_i32 : i32
    %4 = tpu.assume_multiple %3, 8 : i32
    %c0 = arith.constant 0 : index
    %5 = arith.index_cast %4 : i32 to index
    %c0_1 = arith.constant 0 : index
    %6 = vector.load %arg2[%c0, %5, %c0_1] : memref<1x16x32xf32, #tpu.memory_space<vmem>>, vector<1x8x32xf32>
    %7 = vector.shape_cast %6 : vector<1x8x32xf32> to vector<8x32xf32>
    %c0_2 = arith.constant 0 : index
    %c0_3 = arith.constant 0 : index
    %8 = vector.load %arg9[%c0_2, %c0_3] : memref<1x32xf32, #tpu.memory_space<vmem>>, vector<1x32xf32>
    %c0_4 = arith.constant 0 : index
    %c0_5 = arith.constant 0 : index
    %9 = vector.load %arg10[%c0_4, %c0_5] : memref<1x32xf32, #tpu.memory_space<vmem>>, vector<1x32xf32>
    %cst = arith.constant dense<0.000000e+00> : vector<8xf32>
    %10 = vector.multi_reduction <add>, %7, %cst [1] : vector<8x32xf32> to vector<8xf32>
    %11 = vector.shape_cast %10 : vector<8xf32> to vector<8x1xf32>
    %cst_6 = arith.constant 3.200000e+01 : f32
    %12 = vector.broadcast %cst_6 : f32 to vector<8x1xf32>
    %13 = arith.divf %11, %12 : vector<8x1xf32>
    %14 = vector.broadcast %13 : vector<8x1xf32> to vector<8x32xf32>
    %15 = arith.subf %7, %14 : vector<8x32xf32>
    %16 = arith.mulf %15, %15 : vector<8x32xf32>
    %cst_7 = arith.constant dense<0.000000e+00> : vector<8xf32>
    %17 = vector.multi_reduction <add>, %16, %cst_7 [1] : vector<8x32xf32> to vector<8xf32>
    %18 = vector.shape_cast %17 : vector<8xf32> to vector<8x1xf32>
    %cst_8 = arith.constant 3.200000e+01 : f32
    %19 = vector.broadcast %cst_8 : f32 to vector<8x1xf32>
    %20 = arith.divf %18, %19 : vector<8x1xf32>
    %21 = vector.broadcast %13 : vector<8x1xf32> to vector<8x32xf32>
    %22 = arith.subf %7, %21 : vector<8x32xf32>
    %cst_9 = arith.constant 9.99999997E-7 : f32
    %23 = vector.broadcast %cst_9 : f32 to vector<8x1xf32>
    %24 = arith.addf %20, %23 : vector<8x1xf32>
    %25 = math.sqrt %24 : vector<8x1xf32>
    %26 = vector.broadcast %25 : vector<8x1xf32> to vector<8x32xf32>
    %27 = arith.divf %22, %26 : vector<8x32xf32>
    %28 = vector.broadcast %8 : vector<1x32xf32> to vector<8x32xf32>
    %29 = arith.mulf %27, %28 : vector<8x32xf32>
    %30 = vector.broadcast %9 : vector<1x32xf32> to vector<8x32xf32>
    %31 = arith.addf %29, %30 : vector<8x32xf32>
    %c0_10 = arith.constant 0 : index
    %c0_11 = arith.constant 0 : index
    %32 = vector.load %arg3[%c0_10, %c0_11] : memref<32x32xf32, #tpu.memory_space<vmem>>, vector<32x32xf32>
    %cst_12 = arith.constant dense<0.000000e+00> : vector<8x32xf32>
    %33 = tpu.matmul %31, %32, %cst_12 {dimension_numbers = #tpu.dot_dimension_numbers<[1], [0], [0], [1], [0, 0, 1, 1], [], []>} : vector<8x32xf32>, vector<32x32xf32>, vector<8x32xf32> -> vector<8x32xf32>
    %c0_13 = arith.constant 0 : index
    %c0_14 = arith.constant 0 : index
    %34 = vector.load %arg4[%c0_13, %c0_14] : memref<1x32xf32, #tpu.memory_space<vmem>>, vector<1x32xf32>
    %35 = vector.broadcast %34 : vector<1x32xf32> to vector<8x32xf32>
    %36 = arith.addf %33, %35 : vector<8x32xf32>
    %37 = vector.extract_strided_slice %36 {offsets = [0, 0], sizes = [8, 8], strides = [1, 1]} : vector<8x32xf32> to vector<8x8xf32>
    %c0_15 = arith.constant 0 : index
    %c0_16 = arith.constant 0 : index
    %38 = vector.load %arg18[%c0_15, %c0_16] : memref<16x32xf32, #tpu.memory_space<vmem>>, vector<16x8xf32>
    %c0_17 = arith.constant 0 : index
    %c0_18 = arith.constant 0 : index
    %39 = vector.load %arg19[%c0_17, %c0_18] : memref<16x32xf32, #tpu.memory_space<vmem>>, vector<16x8xf32>
    %cst_19 = arith.constant dense<0.000000e+00> : vector<8x16xf32>
    %40 = tpu.matmul %37, %38, %cst_19 {dimension_numbers = #tpu.dot_dimension_numbers<[1], [1], [0], [0], [0, 0, 1, 0], [], []>} : vector<8x8xf32>, vector<16x8xf32>, vector<8x16xf32> -> vector<8x16xf32>
    %cst_20 = arith.constant 0.353553385 : f32
    %41 = vector.broadcast %cst_20 : f32 to vector<8x16xf32>
    %42 = arith.mulf %40, %41 : vector<8x16xf32>
    %cst_21 = arith.constant dense<0xFF800000> : vector<8xf32>
    %43 = vector.multi_reduction <maximumf>, %42, %cst_21 [1] : vector<8x16xf32> to vector<8xf32>
    %44 = vector.shape_cast %43 : vector<8xf32> to vector<8x1xf32>
    %45 = vector.broadcast %44 : vector<8x1xf32> to vector<8x16xf32>
    %46 = arith.subf %42, %45 : vector<8x16xf32>
    %47 = math.exp %46 : vector<8x16xf32>
    %cst_22 = arith.constant dense<0.000000e+00> : vector<8xf32>
    %48 = vector.multi_reduction <add>, %47, %cst_22 [1] : vector<8x16xf32> to vector<8xf32>
    %49 = vector.shape_cast %48 : vector<8xf32> to vector<8x1xf32>
    %cst_23 = arith.constant dense<0.000000e+00> : vector<8x8xf32>
    %50 = tpu.matmul %47, %39, %cst_23 {dimension_numbers = #tpu.dot_dimension_numbers<[1], [0], [0], [1], [0, 0, 1, 1], [], []>} : vector<8x16xf32>, vector<16x8xf32>, vector<8x8xf32> -> vector<8x8xf32>
    %51 = tpu.reciprocal %49 : vector<8x1xf32> -> vector<8x1xf32>
    %52 = vector.broadcast %51 : vector<8x1xf32> to vector<8x8xf32>
    %53 = arith.mulf %50, %52 : vector<8x8xf32>
    %c0_24 = arith.constant 0 : index
    %c0_25 = arith.constant 0 : index
    %54 = vector.load %arg20[%c0_24, %c0_25] : memref<8x32xf32, #tpu.memory_space<vmem>>, vector<8x8xf32>
    tpu.vector_store %arg20[%c0_24, %c0_25], %53 {strides = array<i32>} : memref<8x32xf32, #tpu.memory_space<vmem>>, vector<8x8xf32>,
    %55 = vector.extract_strided_slice %36 {offsets = [0, 8], sizes = [8, 8], strides = [1, 1]} : vector<8x32xf32> to vector<8x8xf32>
    %c0_26 = arith.constant 0 : index
    %c8 = arith.constant 8 : index
    %56 = vector.load %arg18[%c0_26, %c8] : memref<16x32xf32, #tpu.memory_space<vmem>>, vector<16x8xf32>
    %c0_27 = arith.constant 0 : index
    %c8_28 = arith.constant 8 : index
    %57 = vector.load %arg19[%c0_27, %c8_28] : memref<16x32xf32, #tpu.memory_space<vmem>>, vector<16x8xf32>
    %cst_29 = arith.constant dense<0.000000e+00> : vector<8x16xf32>
    %58 = tpu.matmul %55, %56, %cst_29 {dimension_numbers = #tpu.dot_dimension_numbers<[1], [1], [0], [0], [0, 0, 1, 0], [], []>} : vector<8x8xf32>, vector<16x8xf32>, vector<8x16xf32> -> vector<8x16xf32>
    %cst_30 = arith.constant 0.353553385 : f32
    %59 = vector.broadcast %cst_30 : f32 to vector<8x16xf32>
    %60 = arith.mulf %58, %59 : vector<8x16xf32>
    %cst_31 = arith.constant dense<0xFF800000> : vector<8xf32>
    %61 = vector.multi_reduction <maximumf>, %60, %cst_31 [1] : vector<8x16xf32> to vector<8xf32>
    %62 = vector.shape_cast %61 : vector<8xf32> to vector<8x1xf32>
    %63 = vector.broadcast %62 : vector<8x1xf32> to vector<8x16xf32>
    %64 = arith.subf %60, %63 : vector<8x16xf32>
    %65 = math.exp %64 : vector<8x16xf32>
    %cst_32 = arith.constant dense<0.000000e+00> : vector<8xf32>
    %66 = vector.multi_reduction <add>, %65, %cst_32 [1] : vector<8x16xf32> to vector<8xf32>
    %67 = vector.shape_cast %66 : vector<8xf32> to vector<8x1xf32>
    %cst_33 = arith.constant dense<0.000000e+00> : vector<8x8xf32>
    %68 = tpu.matmul %65, %57, %cst_33 {dimension_numbers = #tpu.dot_dimension_numbers<[1], [0], [0], [1], [0, 0, 1, 1], [], []>} : vector<8x16xf32>, vector<16x8xf32>, vector<8x8xf32> -> vector<8x8xf32>
    %69 = tpu.reciprocal %67 : vector<8x1xf32> -> vector<8x1xf32>
    %70 = vector.broadcast %69 : vector<8x1xf32> to vector<8x8xf32>
    %71 = arith.mulf %68, %70 : vector<8x8xf32>
    %c0_34 = arith.constant 0 : index
    %c8_35 = arith.constant 8 : index
    %72 = vector.load %arg20[%c0_34, %c8_35] : memref<8x32xf32, #tpu.memory_space<vmem>>, vector<8x8xf32>
    tpu.vector_store %arg20[%c0_34, %c8_35], %71 {strides = array<i32>} : memref<8x32xf32, #tpu.memory_space<vmem>>, vector<8x8xf32>,
    %73 = vector.extract_strided_slice %36 {offsets = [0, 16], sizes = [8, 8], strides = [1, 1]} : vector<8x32xf32> to vector<8x8xf32>
    %c0_36 = arith.constant 0 : index
    %c16 = arith.constant 16 : index
    %74 = vector.load %arg18[%c0_36, %c16] : memref<16x32xf32, #tpu.memory_space<vmem>>, vector<16x8xf32>
    %c0_37 = arith.constant 0 : index
    %c16_38 = arith.constant 16 : index
    %75 = vector.load %arg19[%c0_37, %c16_38] : memref<16x32xf32, #tpu.memory_space<vmem>>, vector<16x8xf32>
    %cst_39 = arith.constant dense<0.000000e+00> : vector<8x16xf32>
    %76 = tpu.matmul %73, %74, %cst_39 {dimension_numbers = #tpu.dot_dimension_numbers<[1], [1], [0], [0], [0, 0, 1, 0], [], []>} : vector<8x8xf32>, vector<16x8xf32>, vector<8x16xf32> -> vector<8x16xf32>
    %cst_40 = arith.constant 0.353553385 : f32
    %77 = vector.broadcast %cst_40 : f32 to vector<8x16xf32>
    %78 = arith.mulf %76, %77 : vector<8x16xf32>
    %cst_41 = arith.constant dense<0xFF800000> : vector<8xf32>
    %79 = vector.multi_reduction <maximumf>, %78, %cst_41 [1] : vector<8x16xf32> to vector<8xf32>
    %80 = vector.shape_cast %79 : vector<8xf32> to vector<8x1xf32>
    %81 = vector.broadcast %80 : vector<8x1xf32> to vector<8x16xf32>
    %82 = arith.subf %78, %81 : vector<8x16xf32>
    %83 = math.exp %82 : vector<8x16xf32>
    %cst_42 = arith.constant dense<0.000000e+00> : vector<8xf32>
    %84 = vector.multi_reduction <add>, %83, %cst_42 [1] : vector<8x16xf32> to vector<8xf32>
    %85 = vector.shape_cast %84 : vector<8xf32> to vector<8x1xf32>
    %cst_43 = arith.constant dense<0.000000e+00> : vector<8x8xf32>
    %86 = tpu.matmul %83, %75, %cst_43 {dimension_numbers = #tpu.dot_dimension_numbers<[1], [0], [0], [1], [0, 0, 1, 1], [], []>} : vector<8x16xf32>, vector<16x8xf32>, vector<8x8xf32> -> vector<8x8xf32>
    %87 = tpu.reciprocal %85 : vector<8x1xf32> -> vector<8x1xf32>
    %88 = vector.broadcast %87 : vector<8x1xf32> to vector<8x8xf32>
    %89 = arith.mulf %86, %88 : vector<8x8xf32>
    %c0_44 = arith.constant 0 : index
    %c16_45 = arith.constant 16 : index
    %90 = vector.load %arg20[%c0_44, %c16_45] : memref<8x32xf32, #tpu.memory_space<vmem>>, vector<8x8xf32>
    tpu.vector_store %arg20[%c0_44, %c16_45], %89 {strides = array<i32>} : memref<8x32xf32, #tpu.memory_space<vmem>>, vector<8x8xf32>,
    %91 = vector.extract_strided_slice %36 {offsets = [0, 24], sizes = [8, 8], strides = [1, 1]} : vector<8x32xf32> to vector<8x8xf32>
    %c0_46 = arith.constant 0 : index
    %c24 = arith.constant 24 : index
    %92 = vector.load %arg18[%c0_46, %c24] : memref<16x32xf32, #tpu.memory_space<vmem>>, vector<16x8xf32>
    %c0_47 = arith.constant 0 : index
    %c24_48 = arith.constant 24 : index
    %93 = vector.load %arg19[%c0_47, %c24_48] : memref<16x32xf32, #tpu.memory_space<vmem>>, vector<16x8xf32>
    %cst_49 = arith.constant dense<0.000000e+00> : vector<8x16xf32>
    %94 = tpu.matmul %91, %92, %cst_49 {dimension_numbers = #tpu.dot_dimension_numbers<[1], [1], [0], [0], [0, 0, 1, 0], [], []>} : vector<8x8xf32>, vector<16x8xf32>, vector<8x16xf32> -> vector<8x16xf32>
    %cst_50 = arith.constant 0.353553385 : f32
    %95 = vector.broadcast %cst_50 : f32 to vector<8x16xf32>
    %96 = arith.mulf %94, %95 : vector<8x16xf32>
    %cst_51 = arith.constant dense<0xFF800000> : vector<8xf32>
    %97 = vector.multi_reduction <maximumf>, %96, %cst_51 [1] : vector<8x16xf32> to vector<8xf32>
    %98 = vector.shape_cast %97 : vector<8xf32> to vector<8x1xf32>
    %99 = vector.broadcast %98 : vector<8x1xf32> to vector<8x16xf32>
    %100 = arith.subf %96, %99 : vector<8x16xf32>
    %101 = math.exp %100 : vector<8x16xf32>
    %cst_52 = arith.constant dense<0.000000e+00> : vector<8xf32>
    %102 = vector.multi_reduction <add>, %101, %cst_52 [1] : vector<8x16xf32> to vector<8xf32>
    %103 = vector.shape_cast %102 : vector<8xf32> to vector<8x1xf32>
    %cst_53 = arith.constant dense<0.000000e+00> : vector<8x8xf32>
    %104 = tpu.matmul %101, %93, %cst_53 {dimension_numbers = #tpu.dot_dimension_numbers<[1], [0], [0], [1], [0, 0, 1, 1], [], []>} : vector<8x16xf32>, vector<16x8xf32>, vector<8x8xf32> -> vector<8x8xf32>
    %105 = tpu.reciprocal %103 : vector<8x1xf32> -> vector<8x1xf32>
    %106 = vector.broadcast %105 : vector<8x1xf32> to vector<8x8xf32>
    %107 = arith.mulf %104, %106 : vector<8x8xf32>
    %c0_54 = arith.constant 0 : index
    %c24_55 = arith.constant 24 : index
    %108 = vector.load %arg20[%c0_54, %c24_55] : memref<8x32xf32, #tpu.memory_space<vmem>>, vector<8x8xf32>
    tpu.vector_store %arg20[%c0_54, %c24_55], %107 {strides = array<i32>} : memref<8x32xf32, #tpu.memory_space<vmem>>, vector<8x8xf32>,
    %c0_56 = arith.constant 0 : index
    %c0_57 = arith.constant 0 : index
    %109 = vector.load %arg20[%c0_56, %c0_57] : memref<8x32xf32, #tpu.memory_space<vmem>>, vector<8x32xf32>
    %c0_58 = arith.constant 0 : index
    %c0_59 = arith.constant 0 : index
    %110 = vector.load %arg7[%c0_58, %c0_59] : memref<32x32xf32, #tpu.memory_space<vmem>>, vector<32x32xf32>
    %cst_60 = arith.constant dense<0.000000e+00> : vector<8x32xf32>
    %111 = tpu.matmul %109, %110, %cst_60 {dimension_numbers = #tpu.dot_dimension_numbers<[1], [0], [0], [1], [0, 0, 1, 1], [], []>} : vector<8x32xf32>, vector<32x32xf32>, vector<8x32xf32> -> vector<8x32xf32>
    %c0_61 = arith.constant 0 : index
    %c0_62 = arith.constant 0 : index
    %112 = vector.load %arg8[%c0_61, %c0_62] : memref<1x32xf32, #tpu.memory_space<vmem>>, vector<1x32xf32>
    %113 = vector.broadcast %112 : vector<1x32xf32> to vector<8x32xf32>
    %114 = arith.addf %111, %113 : vector<8x32xf32>
    %115 = arith.addf %7, %114 : vector<8x32xf32>
    %c0_63 = arith.constant 0 : index
    %c0_64 = arith.constant 0 : index
    %116 = vector.load %arg15[%c0_63, %c0_64] : memref<1x32xf32, #tpu.memory_space<vmem>>, vector<1x32xf32>
    %c0_65 = arith.constant 0 : index
    %c0_66 = arith.constant 0 : index
    %117 = vector.load %arg16[%c0_65, %c0_66] : memref<1x32xf32, #tpu.memory_space<vmem>>, vector<1x32xf32>
    %cst_67 = arith.constant dense<0.000000e+00> : vector<8xf32>
    %118 = vector.multi_reduction <add>, %115, %cst_67 [1] : vector<8x32xf32> to vector<8xf32>
    %119 = vector.shape_cast %118 : vector<8xf32> to vector<8x1xf32>
    %cst_68 = arith.constant 3.200000e+01 : f32
    %120 = vector.broadcast %cst_68 : f32 to vector<8x1xf32>
    %121 = arith.divf %119, %120 : vector<8x1xf32>
    %122 = vector.broadcast %121 : vector<8x1xf32> to vector<8x32xf32>
    %123 = arith.subf %115, %122 : vector<8x32xf32>
    %124 = arith.mulf %123, %123 : vector<8x32xf32>
    %cst_69 = arith.constant dense<0.000000e+00> : vector<8xf32>
    %125 = vector.multi_reduction <add>, %124, %cst_69 [1] : vector<8x32xf32> to vector<8xf32>
    %126 = vector.shape_cast %125 : vector<8xf32> to vector<8x1xf32>
    %cst_70 = arith.constant 3.200000e+01 : f32
    %127 = vector.broadcast %cst_70 : f32 to vector<8x1xf32>
    %128 = arith.divf %126, %127 : vector<8x1xf32>
    %129 = vector.broadcast %121 : vector<8x1xf32> to vector<8x32xf32>
    %130 = arith.subf %115, %129 : vector<8x32xf32>
    %cst_71 = arith.constant 9.99999997E-7 : f32
    %131 = vector.broadcast %cst_71 : f32 to vector<8x1xf32>
    %132 = arith.addf %128, %131 : vector<8x1xf32>
    %133 = math.sqrt %132 : vector<8x1xf32>
    %134 = vector.broadcast %133 : vector<8x1xf32> to vector<8x32xf32>
    %135 = arith.divf %130, %134 : vector<8x32xf32>
    %136 = vector.broadcast %116 : vector<1x32xf32> to vector<8x32xf32>
    %137 = arith.mulf %135, %136 : vector<8x32xf32>
    %138 = vector.broadcast %117 : vector<1x32xf32> to vector<8x32xf32>
    %139 = arith.addf %137, %138 : vector<8x32xf32>
    %c0_72 = arith.constant 0 : index
    %c0_73 = arith.constant 0 : index
    %140 = vector.load %arg11[%c0_72, %c0_73] : memref<32x64xf32, #tpu.memory_space<vmem>>, vector<32x64xf32>
    %cst_74 = arith.constant dense<0.000000e+00> : vector<8x64xf32>
    %141 = tpu.matmul %139, %140, %cst_74 {dimension_numbers = #tpu.dot_dimension_numbers<[1], [0], [0], [1], [0, 0, 1, 1], [], []>} : vector<8x32xf32>, vector<32x64xf32>, vector<8x64xf32> -> vector<8x64xf32>
    %c0_75 = arith.constant 0 : index
    %c0_76 = arith.constant 0 : index
    %142 = vector.load %arg12[%c0_75, %c0_76] : memref<1x64xf32, #tpu.memory_space<vmem>>, vector<1x64xf32>
    %143 = vector.broadcast %142 : vector<1x64xf32> to vector<8x64xf32>
    %144 = arith.addf %141, %143 : vector<8x64xf32>
    %cst_77 = arith.constant 0.000000e+00 : f32
    %145 = vector.broadcast %cst_77 : f32 to vector<8x64xf32>
    %146 = arith.maximumf %144, %145 : vector<8x64xf32>
    %c0_78 = arith.constant 0 : index
    %c0_79 = arith.constant 0 : index
    %147 = vector.load %arg13[%c0_78, %c0_79] : memref<64x32xf32, #tpu.memory_space<vmem>>, vector<64x32xf32>
    %cst_80 = arith.constant dense<0.000000e+00> : vector<8x32xf32>
    %148 = tpu.matmul %146, %147, %cst_80 {dimension_numbers = #tpu.dot_dimension_numbers<[1], [0], [0], [1], [0, 0, 1, 1], [], []>} : vector<8x64xf32>, vector<64x32xf32>, vector<8x32xf32> -> vector<8x32xf32>
    %c0_81 = arith.constant 0 : index
    %c0_82 = arith.constant 0 : index
    %149 = vector.load %arg14[%c0_81, %c0_82] : memref<1x32xf32, #tpu.memory_space<vmem>>, vector<1x32xf32>
    %150 = vector.broadcast %149 : vector<1x32xf32> to vector<8x32xf32>
    %151 = arith.addf %148, %150 : vector<8x32xf32>
    %152 = arith.addf %115, %151 : vector<8x32xf32>
    %c0_83 = arith.constant 0 : index
    %c0_84 = arith.constant 0 : index
    %c0_85 = arith.constant 0 : index
    %153 = vector.load %arg17[%c0_83, %c0_84, %c0_85] : memref<1x8x32xf32, #tpu.memory_space<vmem>>, vector<1x8x32xf32>
    %154 = vector.shape_cast %153 : vector<1x8x32xf32> to vector<8x32xf32>
    %155 = vector.shape_cast %152 : vector<8x32xf32> to vector<1x8x32xf32>
    tpu.vector_store %arg17[%c0_83, %c0_84, %c0_85], %155 {strides = array<i32>} : memref<1x8x32xf32, #tpu.memory_space<vmem>>, vector<1x8x32xf32>,
    return
  }
  func.func @transform_0(%arg0: i32, %arg1: i32) -> (i32, i32, i32) {
    %c0_i32 = arith.constant 0 : i32
    %c0_i32_0 = arith.constant 0 : i32
    %c0_i32_1 = arith.constant 0 : i32
    return %arg0, %c0_i32, %c0_i32_0 : i32, i32, i32
  }
  func.func @transform_1(%arg0: i32, %arg1: i32) -> (i32, i32) {
    %c0_i32 = arith.constant 0 : i32
    %c0_i32_0 = arith.constant 0 : i32
    %c0_i32_1 = arith.constant 0 : i32
    return %c0_i32, %c0_i32_0 : i32, i32
  }
  func.func @transform_2(%arg0: i32, %arg1: i32) -> (i32, i32) {
    %c0_i32 = arith.constant 0 : i32
    %c0_i32_0 = arith.constant 0 : i32
    %c0_i32_1 = arith.constant 0 : i32
    return %c0_i32, %c0_i32_0 : i32, i32
  }
  func.func @transform_3(%arg0: i32, %arg1: i32) -> (i32, i32) {
    %c0_i32 = arith.constant 0 : i32
    %c0_i32_0 = arith.constant 0 : i32
    %c0_i32_1 = arith.constant 0 : i32
    return %c0_i32, %c0_i32_0 : i32, i32
  }
  func.func @transform_4(%arg0: i32, %arg1: i32) -> (i32, i32) {
    %c0_i32 = arith.constant 0 : i32
    %c0_i32_0 = arith.constant 0 : i32
    %c0_i32_1 = arith.constant 0 : i32
    return %c0_i32, %c0_i32_0 : i32, i32
  }
  func.func @transform_5(%arg0: i32, %arg1: i32) -> (i32, i32) {
    %c0_i32 = arith.constant 0 : i32
    %c0_i32_0 = arith.constant 0 : i32
    %c0_i32_1 = arith.constant 0 : i32
    return %c0_i32, %c0_i32_0 : i32, i32
  }
  func.func @transform_6(%arg0: i32, %arg1: i32) -> (i32, i32) {
    %c0_i32 = arith.constant 0 : i32
    %c0_i32_0 = arith.constant 0 : i32
    %c0_i32_1 = arith.constant 0 : i32
    return %c0_i32, %c0_i32_0 : i32, i32
  }
  func.func @transform_7(%arg0: i32, %arg1: i32) -> (i32, i32) {
    %c0_i32 = arith.constant 0 : i32
    %c0_i32_0 = arith.constant 0 : i32
    %c0_i32_1 = arith.constant 0 : i32
    return %c0_i32, %c0_i32_0 : i32, i32
  }
  func.func @transform_8(%arg0: i32, %arg1: i32) -> (i32, i32) {
    %c0_i32 = arith.constant 0 : i32
    %c0_i32_0 = arith.constant 0 : i32
    %c0_i32_1 = arith.constant 0 : i32
    return %c0_i32, %c0_i32_0 : i32, i32
  }
  func.func @transform_9(%arg0: i32, %arg1: i32) -> (i32, i32) {
    %c0_i32 = arith.constant 0 : i32
    %c0_i32_0 = arith.constant 0 : i32
    %c0_i32_1 = arith.constant 0 : i32
    return %c0_i32, %c0_i32_0 : i32, i32
  }
  func.func @transform_10(%arg0: i32, %arg1: i32) -> (i32, i32) {
    %c0_i32 = arith.constant 0 : i32
    %c0_i32_0 = arith.constant 0 : i32
    %c0_i32_1 = arith.constant 0 : i32
    return %c0_i32, %c0_i32_0 : i32, i32
  }
  func.func @transform_11(%arg0: i32, %arg1: i32) -> (i32, i32) {
    %c0_i32 = arith.constant 0 : i32
    %c0_i32_0 = arith.constant 0 : i32
    %c0_i32_1 = arith.constant 0 : i32
    return %c0_i32, %c0_i32_0 : i32, i32
  }
  func.func @transform_12(%arg0: i32, %arg1: i32) -> (i32, i32) {
    %c0_i32 = arith.constant 0 : i32
    %c0_i32_0 = arith.constant 0 : i32
    %c0_i32_1 = arith.constant 0 : i32
    return %c0_i32, %c0_i32_0 : i32, i32
  }
  func.func @transform_13(%arg0: i32, %arg1: i32) -> (i32, i32) {
    %c0_i32 = arith.constant 0 : i32
    %c0_i32_0 = arith.constant 0 : i32
    %c0_i32_1 = arith.constant 0 : i32
    return %c0_i32, %c0_i32_0 : i32, i32
  }
  func.func @transform_14(%arg0: i32, %arg1: i32) -> (i32, i32) {
    %c0_i32 = arith.constant 0 : i32
    %c0_i32_0 = arith.constant 0 : i32
    %c0_i32_1 = arith.constant 0 : i32
    return %c0_i32, %c0_i32_0 : i32, i32
  }
  func.func @transform_15(%arg0: i32, %arg1: i32) -> (i32, i32, i32) {
    %c0_i32 = arith.constant 0 : i32
    %c0_i32_0 = arith.constant 0 : i32
    return %arg0, %arg1, %c0_i32 : i32, i32, i32
  }
}

module attributes {stable_mosaic.version = 11 : i64} {
  func.func @_encoder_layer_kernel(%arg0: i32, %arg1: i32, %arg2: memref<1x16x32xf32, #tpu.memory_space<vmem>>, %arg3: memref<32x32xf32, #tpu.memory_space<vmem>>, %arg4: memref<1x32xf32, #tpu.memory_space<vmem>>, %arg5: memref<32x64xf32, #tpu.memory_space<vmem>>, %arg6: memref<1x64xf32, #tpu.memory_space<vmem>>, %arg7: memref<32x32xf32, #tpu.memory_space<vmem>>, %arg8: memref<1x32xf32, #tpu.memory_space<vmem>>, %arg9: memref<1x32xf32, #tpu.memory_space<vmem>>, %arg10: memref<1x32xf32, #tpu.memory_space<vmem>>, %arg11: memref<32x64xf32, #tpu.memory_space<vmem>>, %arg12: memref<1x64xf32, #tpu.memory_space<vmem>>, %arg13: memref<64x32xf32, #tpu.memory_space<vmem>>, %arg14: memref<1x32xf32, #tpu.memory_space<vmem>>, %arg15: memref<1x32xf32, #tpu.memory_space<vmem>>, %arg16: memref<1x32xf32, #tpu.memory_space<vmem>>, %arg17: memref<1x8x32xf32, #tpu.memory_space<vmem>>, %arg18: memref<16x32xf32, #tpu.memory_space<vmem>>, %arg19: memref<16x32xf32, #tpu.memory_space<vmem>>, %arg20: memref<8x32xf32, #tpu.memory_space<vmem>>) attributes {dimension_semantics = [#tpu.dimension_semantics<parallel>, #tpu.dimension_semantics<arbitrary>], iteration_bounds = array<i64: 2, 2>, scalar_prefetch = 0 : i64, scratch_operands = 3 : i64, tpu.core_type = #tpu.core_type<tc>, window_params = [{transform_indices = @transform_0, window_bounds = array<i64: 1, 16, 32>}, {pipeline_mode = #tpu.pipeline_mode<synchronous>, transform_indices = @transform_1, window_bounds = array<i64: 32, 32>}, {pipeline_mode = #tpu.pipeline_mode<synchronous>, transform_indices = @transform_2, window_bounds = array<i64: 1, 32>}, {pipeline_mode = #tpu.pipeline_mode<synchronous>, transform_indices = @transform_3, window_bounds = array<i64: 32, 64>}, {pipeline_mode = #tpu.pipeline_mode<synchronous>, transform_indices = @transform_4, window_bounds = array<i64: 1, 64>}, {pipeline_mode = #tpu.pipeline_mode<synchronous>, transform_indices = @transform_5, window_bounds = array<i64: 32, 32>}, {pipeline_mode = #tpu.pipeline_mode<synchronous>, transform_indices = @transform_6, window_bounds = array<i64: 1, 32>}, {pipeline_mode = #tpu.pipeline_mode<synchronous>, transform_indices = @transform_7, window_bounds = array<i64: 1, 32>}, {pipeline_mode = #tpu.pipeline_mode<synchronous>, transform_indices = @transform_8, window_bounds = array<i64: 1, 32>}, {pipeline_mode = #tpu.pipeline_mode<synchronous>, transform_indices = @transform_9, window_bounds = array<i64: 32, 64>}, {pipeline_mode = #tpu.pipeline_mode<synchronous>, transform_indices = @transform_10, window_bounds = array<i64: 1, 64>}, {pipeline_mode = #tpu.pipeline_mode<synchronous>, transform_indices = @transform_11, window_bounds = array<i64: 64, 32>}, {pipeline_mode = #tpu.pipeline_mode<synchronous>, transform_indices = @transform_12, window_bounds = array<i64: 1, 32>}, {pipeline_mode = #tpu.pipeline_mode<synchronous>, transform_indices = @transform_13, window_bounds = array<i64: 1, 32>}, {pipeline_mode = #tpu.pipeline_mode<synchronous>, transform_indices = @transform_14, window_bounds = array<i64: 1, 32>}, {transform_indices = @transform_15, window_bounds = array<i64: 1, 8, 32>}]} {
    %c0_i32 = arith.constant 0 : i32
    %0 = arith.cmpi eq, %arg1, %c0_i32 : i32
    %1 = arith.extui %0 : i1 to i32
    %c0_i32_0 = arith.constant 0 : i32
    %2 = arith.cmpi ne, %1, %c0_i32_0 : i32
    scf.if %2 {
      %c0_i32_86 = arith.constant 0 : i32
      %c2_i32 = arith.constant 2 : i32
      %156 = arith.addi %c0_i32_86, %c2_i32 : i32
      %c1_i32 = arith.constant 1 : i32
      scf.for %arg21 = %c0_i32_86 to %156 step %c1_i32  : i32 {
        %c1_i32_88 = arith.constant 1 : i32
        %157 = arith.muli %arg21, %c1_i32_88 : i32
        %c0_i32_89 = arith.constant 0 : i32
        %158 = arith.addi %c0_i32_89, %157 : i32
        %c8_i32_90 = arith.constant 8 : i32
        %159 = arith.muli %158, %c8_i32_90 : i32
        %160 = tpu.assume_multiple %159, 8 : i32
        %c0_91 = arith.constant 0 : index
        %161 = arith.index_cast %160 : i32 to index
        %c0_92 = arith.constant 0 : index
        %162 = vector.load %arg2[%c0_91, %161, %c0_92] : memref<1x16x32xf32, #tpu.memory_space<vmem>>, vector<1x8x32xf32>
        %163 = vector.shape_cast %162 : vector<1x8x32xf32> to vector<8x32xf32>
        %c0_93 = arith.constant 0 : index
        %c0_94 = arith.constant 0 : index
        %164 = vector.load %arg9[%c0_93, %c0_94] : memref<1x32xf32, #tpu.memory_space<vmem>>, vector<1x32xf32>
        %c0_95 = arith.constant 0 : index
        %c0_96 = arith.constant 0 : index
        %165 = vector.load %arg10[%c0_95, %c0_96] : memref<1x32xf32, #tpu.memory_space<vmem>>, vector<1x32xf32>
        %cst_97 = arith.constant dense<0.000000e+00> : vector<8xf32>
        %166 = vector.multi_reduction <add>, %163, %cst_97 [1] : vector<8x32xf32> to vector<8xf32>
        %167 = vector.shape_cast %166 : vector<8xf32> to vector<8x1xf32>
        %cst_98 = arith.constant 3.200000e+01 : f32
        %168 = vector.broadcast %cst_98 : f32 to vector<8x1xf32>
        %169 = arith.divf %167, %168 : vector<8x1xf32>
        %170 = vector.broadcast %169 : vector<8x1xf32> to vector<8x32xf32>
        %171 = arith.subf %163, %170 : vector<8x32xf32>
        %172 = arith.mulf %171, %171 : vector<8x32xf32>
        %cst_99 = arith.constant dense<0.000000e+00> : vector<8xf32>
        %173 = vector.multi_reduction <add>, %172, %cst_99 [1] : vector<8x32xf32> to vector<8xf32>
        %174 = vector.shape_cast %173 : vector<8xf32> to vector<8x1xf32>
        %cst_100 = arith.constant 3.200000e+01 : f32
        %175 = vector.broadcast %cst_100 : f32 to vector<8x1xf32>
        %176 = arith.divf %174, %175 : vector<8x1xf32>
        %177 = vector.broadcast %169 : vector<8x1xf32> to vector<8x32xf32>
        %178 = arith.subf %163, %177 : vector<8x32xf32>
        %cst_101 = arith.constant 9.99999997E-7 : f32
        %179 = vector.broadcast %cst_101 : f32 to vector<8x1xf32>
        %180 = arith.addf %176, %179 : vector<8x1xf32>
        %181 = math.sqrt %180 : vector<8x1xf32>
        %182 = vector.broadcast %181 : vector<8x1xf32> to vector<8x32xf32>
        %183 = arith.divf %178, %182 : vector<8x32xf32>
        %184 = vector.broadcast %164 : vector<1x32xf32> to vector<8x32xf32>
        %185 = arith.mulf %183, %184 : vector<8x32xf32>
        %186 = vector.broadcast %165 : vector<1x32xf32> to vector<8x32xf32>
        %187 = arith.addf %185, %186 : vector<8x32xf32>
        %c0_102 = arith.constant 0 : index
        %c0_103 = arith.constant 0 : index
        %188 = vector.load %arg5[%c0_102, %c0_103] : memref<32x64xf32, #tpu.memory_space<vmem>>, vector<32x64xf32>
        %cst_104 = arith.constant dense<0.000000e+00> : vector<8x64xf32>
        %189 = tpu.matmul %187, %188, %cst_104 {dimension_numbers = #tpu.dot_dimension_numbers<[1], [0], [0], [1], [0, 0, 1, 1], [], []>} : vector<8x32xf32>, vector<32x64xf32>, vector<8x64xf32> -> vector<8x64xf32>
        %c0_105 = arith.constant 0 : index
        %c0_106 = arith.constant 0 : index
        %190 = vector.load %arg6[%c0_105, %c0_106] : memref<1x64xf32, #tpu.memory_space<vmem>>, vector<1x64xf32>
        %191 = vector.broadcast %190 : vector<1x64xf32> to vector<8x64xf32>
        %192 = arith.addf %189, %191 : vector<8x64xf32>
        %193 = vector.extract_strided_slice %192 {offsets = [0, 0], sizes = [8, 32], strides = [1, 1]} : vector<8x64xf32> to vector<8x32xf32>
        %194 = arith.index_cast %160 : i32 to index
        %c0_107 = arith.constant 0 : index
        %195 = vector.load %arg18[%194, %c0_107] : memref<16x32xf32, #tpu.memory_space<vmem>>, vector<8x32xf32>
        tpu.vector_store %arg18[%194, %c0_107], %193 {strides = array<i32>} : memref<16x32xf32, #tpu.memory_space<vmem>>, vector<8x32xf32>,
        %196 = vector.extract_strided_slice %192 {offsets = [0, 32], sizes = [8, 32], strides = [1, 1]} : vector<8x64xf32> to vector<8x32xf32>
        %197 = arith.index_cast %160 : i32 to index
        %c0_108 = arith.constant 0 : index
        %198 = vector.load %arg19[%197, %c0_108] : memref<16x32xf32, #tpu.memory_space<vmem>>, vector<8x32xf32>
        tpu.vector_store %arg19[%197, %c0_108], %196 {strides = array<i32>} : memref<16x32xf32, #tpu.memory_space<vmem>>, vector<8x32xf32>,
      }
      %c2_i32_87 = arith.constant 2 : i32
    } else {
    }
    %c8_i32 = arith.constant 8 : i32
    %3 = arith.muli %arg1, %c8_i32 : i32
    %4 = tpu.assume_multiple %3, 8 : i32
    %c0 = arith.constant 0 : index
    %5 = arith.index_cast %4 : i32 to index
    %c0_1 = arith.constant 0 : index
    %6 = vector.load %arg2[%c0, %5, %c0_1] : memref<1x16x32xf32, #tpu.memory_space<vmem>>, vector<1x8x32xf32>
    %7 = vector.shape_cast %6 : vector<1x8x32xf32> to vector<8x32xf32>
    %c0_2 = arith.constant 0 : index
    %c0_3 = arith.constant 0 : index
    %8 = vector.load %arg9[%c0_2, %c0_3] : memref<1x32xf32, #tpu.memory_space<vmem>>, vector<1x32xf32>
    %c0_4 = arith.constant 0 : index
    %c0_5 = arith.constant 0 : index
    %9 = vector.load %arg10[%c0_4, %c0_5] : memref<1x32xf32, #tpu.memory_space<vmem>>, vector<1x32xf32>
    %cst = arith.constant dense<0.000000e+00> : vector<8xf32>
    %10 = vector.multi_reduction <add>, %7, %cst [1] : vector<8x32xf32> to vector<8xf32>
    %11 = vector.shape_cast %10 : vector<8xf32> to vector<8x1xf32>
    %cst_6 = arith.constant 3.200000e+01 : f32
    %12 = vector.broadcast %cst_6 : f32 to vector<8x1xf32>
    %13 = arith.divf %11, %12 : vector<8x1xf32>
    %14 = vector.broadcast %13 : vector<8x1xf32> to vector<8x32xf32>
    %15 = arith.subf %7, %14 : vector<8x32xf32>
    %16 = arith.mulf %15, %15 : vector<8x32xf32>
    %cst_7 = arith.constant dense<0.000000e+00> : vector<8xf32>
    %17 = vector.multi_reduction <add>, %16, %cst_7 [1] : vector<8x32xf32> to vector<8xf32>
    %18 = vector.shape_cast %17 : vector<8xf32> to vector<8x1xf32>
    %cst_8 = arith.constant 3.200000e+01 : f32
    %19 = vector.broadcast %cst_8 : f32 to vector<8x1xf32>
    %20 = arith.divf %18, %19 : vector<8x1xf32>
    %21 = vector.broadcast %13 : vector<8x1xf32> to vector<8x32xf32>
    %22 = arith.subf %7, %21 : vector<8x32xf32>
    %cst_9 = arith.constant 9.99999997E-7 : f32
    %23 = vector.broadcast %cst_9 : f32 to vector<8x1xf32>
    %24 = arith.addf %20, %23 : vector<8x1xf32>
    %25 = math.sqrt %24 : vector<8x1xf32>
    %26 = vector.broadcast %25 : vector<8x1xf32> to vector<8x32xf32>
    %27 = arith.divf %22, %26 : vector<8x32xf32>
    %28 = vector.broadcast %8 : vector<1x32xf32> to vector<8x32xf32>
    %29 = arith.mulf %27, %28 : vector<8x32xf32>
    %30 = vector.broadcast %9 : vector<1x32xf32> to vector<8x32xf32>
    %31 = arith.addf %29, %30 : vector<8x32xf32>
    %c0_10 = arith.constant 0 : index
    %c0_11 = arith.constant 0 : index
    %32 = vector.load %arg3[%c0_10, %c0_11] : memref<32x32xf32, #tpu.memory_space<vmem>>, vector<32x32xf32>
    %cst_12 = arith.constant dense<0.000000e+00> : vector<8x32xf32>
    %33 = tpu.matmul %31, %32, %cst_12 {dimension_numbers = #tpu.dot_dimension_numbers<[1], [0], [0], [1], [0, 0, 1, 1], [], []>} : vector<8x32xf32>, vector<32x32xf32>, vector<8x32xf32> -> vector<8x32xf32>
    %c0_13 = arith.constant 0 : index
    %c0_14 = arith.constant 0 : index
    %34 = vector.load %arg4[%c0_13, %c0_14] : memref<1x32xf32, #tpu.memory_space<vmem>>, vector<1x32xf32>
    %35 = vector.broadcast %34 : vector<1x32xf32> to vector<8x32xf32>
    %36 = arith.addf %33, %35 : vector<8x32xf32>
    %37 = vector.extract_strided_slice %36 {offsets = [0, 0], sizes = [8, 8], strides = [1, 1]} : vector<8x32xf32> to vector<8x8xf32>
    %c0_15 = arith.constant 0 : index
    %c0_16 = arith.constant 0 : index
    %38 = vector.load %arg18[%c0_15, %c0_16] : memref<16x32xf32, #tpu.memory_space<vmem>>, vector<16x8xf32>
    %c0_17 = arith.constant 0 : index
    %c0_18 = arith.constant 0 : index
    %39 = vector.load %arg19[%c0_17, %c0_18] : memref<16x32xf32, #tpu.memory_space<vmem>>, vector<16x8xf32>
    %cst_19 = arith.constant dense<0.000000e+00> : vector<8x16xf32>
    %40 = tpu.matmul %37, %38, %cst_19 {dimension_numbers = #tpu.dot_dimension_numbers<[1], [1], [0], [0], [0, 0, 1, 0], [], []>} : vector<8x8xf32>, vector<16x8xf32>, vector<8x16xf32> -> vector<8x16xf32>
    %cst_20 = arith.constant 0.353553385 : f32
    %41 = vector.broadcast %cst_20 : f32 to vector<8x16xf32>
    %42 = arith.mulf %40, %41 : vector<8x16xf32>
    %cst_21 = arith.constant dense<0xFF800000> : vector<8xf32>
    %43 = vector.multi_reduction <maximumf>, %42, %cst_21 [1] : vector<8x16xf32> to vector<8xf32>
    %44 = vector.shape_cast %43 : vector<8xf32> to vector<8x1xf32>
    %45 = vector.broadcast %44 : vector<8x1xf32> to vector<8x16xf32>
    %46 = arith.subf %42, %45 : vector<8x16xf32>
    %47 = math.exp %46 : vector<8x16xf32>
    %cst_22 = arith.constant dense<0.000000e+00> : vector<8xf32>
    %48 = vector.multi_reduction <add>, %47, %cst_22 [1] : vector<8x16xf32> to vector<8xf32>
    %49 = vector.shape_cast %48 : vector<8xf32> to vector<8x1xf32>
    %cst_23 = arith.constant dense<0.000000e+00> : vector<8x8xf32>
    %50 = tpu.matmul %47, %39, %cst_23 {dimension_numbers = #tpu.dot_dimension_numbers<[1], [0], [0], [1], [0, 0, 1, 1], [], []>} : vector<8x16xf32>, vector<16x8xf32>, vector<8x8xf32> -> vector<8x8xf32>
    %51 = tpu.reciprocal %49 : vector<8x1xf32> -> vector<8x1xf32>
    %52 = vector.broadcast %51 : vector<8x1xf32> to vector<8x8xf32>
    %53 = arith.mulf %50, %52 : vector<8x8xf32>
    %c0_24 = arith.constant 0 : index
    %c0_25 = arith.constant 0 : index
    %54 = vector.load %arg20[%c0_24, %c0_25] : memref<8x32xf32, #tpu.memory_space<vmem>>, vector<8x8xf32>
    tpu.vector_store %arg20[%c0_24, %c0_25], %53 {strides = array<i32>} : memref<8x32xf32, #tpu.memory_space<vmem>>, vector<8x8xf32>,
    %55 = vector.extract_strided_slice %36 {offsets = [0, 8], sizes = [8, 8], strides = [1, 1]} : vector<8x32xf32> to vector<8x8xf32>
    %c0_26 = arith.constant 0 : index
    %c8 = arith.constant 8 : index
    %56 = vector.load %arg18[%c0_26, %c8] : memref<16x32xf32, #tpu.memory_space<vmem>>, vector<16x8xf32>
    %c0_27 = arith.constant 0 : index
    %c8_28 = arith.constant 8 : index
    %57 = vector.load %arg19[%c0_27, %c8_28] : memref<16x32xf32, #tpu.memory_space<vmem>>, vector<16x8xf32>
    %cst_29 = arith.constant dense<0.000000e+00> : vector<8x16xf32>
    %58 = tpu.matmul %55, %56, %cst_29 {dimension_numbers = #tpu.dot_dimension_numbers<[1], [1], [0], [0], [0, 0, 1, 0], [], []>} : vector<8x8xf32>, vector<16x8xf32>, vector<8x16xf32> -> vector<8x16xf32>
    %cst_30 = arith.constant 0.353553385 : f32
    %59 = vector.broadcast %cst_30 : f32 to vector<8x16xf32>
    %60 = arith.mulf %58, %59 : vector<8x16xf32>
    %cst_31 = arith.constant dense<0xFF800000> : vector<8xf32>
    %61 = vector.multi_reduction <maximumf>, %60, %cst_31 [1] : vector<8x16xf32> to vector<8xf32>
    %62 = vector.shape_cast %61 : vector<8xf32> to vector<8x1xf32>
    %63 = vector.broadcast %62 : vector<8x1xf32> to vector<8x16xf32>
    %64 = arith.subf %60, %63 : vector<8x16xf32>
    %65 = math.exp %64 : vector<8x16xf32>
    %cst_32 = arith.constant dense<0.000000e+00> : vector<8xf32>
    %66 = vector.multi_reduction <add>, %65, %cst_32 [1] : vector<8x16xf32> to vector<8xf32>
    %67 = vector.shape_cast %66 : vector<8xf32> to vector<8x1xf32>
    %cst_33 = arith.constant dense<0.000000e+00> : vector<8x8xf32>
    %68 = tpu.matmul %65, %57, %cst_33 {dimension_numbers = #tpu.dot_dimension_numbers<[1], [0], [0], [1], [0, 0, 1, 1], [], []>} : vector<8x16xf32>, vector<16x8xf32>, vector<8x8xf32> -> vector<8x8xf32>
    %69 = tpu.reciprocal %67 : vector<8x1xf32> -> vector<8x1xf32>
    %70 = vector.broadcast %69 : vector<8x1xf32> to vector<8x8xf32>
    %71 = arith.mulf %68, %70 : vector<8x8xf32>
    %c0_34 = arith.constant 0 : index
    %c8_35 = arith.constant 8 : index
    %72 = vector.load %arg20[%c0_34, %c8_35] : memref<8x32xf32, #tpu.memory_space<vmem>>, vector<8x8xf32>
    tpu.vector_store %arg20[%c0_34, %c8_35], %71 {strides = array<i32>} : memref<8x32xf32, #tpu.memory_space<vmem>>, vector<8x8xf32>,
    %73 = vector.extract_strided_slice %36 {offsets = [0, 16], sizes = [8, 8], strides = [1, 1]} : vector<8x32xf32> to vector<8x8xf32>
    %c0_36 = arith.constant 0 : index
    %c16 = arith.constant 16 : index
    %74 = vector.load %arg18[%c0_36, %c16] : memref<16x32xf32, #tpu.memory_space<vmem>>, vector<16x8xf32>
    %c0_37 = arith.constant 0 : index
    %c16_38 = arith.constant 16 : index
    %75 = vector.load %arg19[%c0_37, %c16_38] : memref<16x32xf32, #tpu.memory_space<vmem>>, vector<16x8xf32>
    %cst_39 = arith.constant dense<0.000000e+00> : vector<8x16xf32>
    %76 = tpu.matmul %73, %74, %cst_39 {dimension_numbers = #tpu.dot_dimension_numbers<[1], [1], [0], [0], [0, 0, 1, 0], [], []>} : vector<8x8xf32>, vector<16x8xf32>, vector<8x16xf32> -> vector<8x16xf32>
    %cst_40 = arith.constant 0.353553385 : f32
    %77 = vector.broadcast %cst_40 : f32 to vector<8x16xf32>
    %78 = arith.mulf %76, %77 : vector<8x16xf32>
    %cst_41 = arith.constant dense<0xFF800000> : vector<8xf32>
    %79 = vector.multi_reduction <maximumf>, %78, %cst_41 [1] : vector<8x16xf32> to vector<8xf32>
    %80 = vector.shape_cast %79 : vector<8xf32> to vector<8x1xf32>
    %81 = vector.broadcast %80 : vector<8x1xf32> to vector<8x16xf32>
    %82 = arith.subf %78, %81 : vector<8x16xf32>
    %83 = math.exp %82 : vector<8x16xf32>
    %cst_42 = arith.constant dense<0.000000e+00> : vector<8xf32>
    %84 = vector.multi_reduction <add>, %83, %cst_42 [1] : vector<8x16xf32> to vector<8xf32>
    %85 = vector.shape_cast %84 : vector<8xf32> to vector<8x1xf32>
    %cst_43 = arith.constant dense<0.000000e+00> : vector<8x8xf32>
    %86 = tpu.matmul %83, %75, %cst_43 {dimension_numbers = #tpu.dot_dimension_numbers<[1], [0], [0], [1], [0, 0, 1, 1], [], []>} : vector<8x16xf32>, vector<16x8xf32>, vector<8x8xf32> -> vector<8x8xf32>
    %87 = tpu.reciprocal %85 : vector<8x1xf32> -> vector<8x1xf32>
    %88 = vector.broadcast %87 : vector<8x1xf32> to vector<8x8xf32>
    %89 = arith.mulf %86, %88 : vector<8x8xf32>
    %c0_44 = arith.constant 0 : index
    %c16_45 = arith.constant 16 : index
    %90 = vector.load %arg20[%c0_44, %c16_45] : memref<8x32xf32, #tpu.memory_space<vmem>>, vector<8x8xf32>
    tpu.vector_store %arg20[%c0_44, %c16_45], %89 {strides = array<i32>} : memref<8x32xf32, #tpu.memory_space<vmem>>, vector<8x8xf32>,
    %91 = vector.extract_strided_slice %36 {offsets = [0, 24], sizes = [8, 8], strides = [1, 1]} : vector<8x32xf32> to vector<8x8xf32>
    %c0_46 = arith.constant 0 : index
    %c24 = arith.constant 24 : index
    %92 = vector.load %arg18[%c0_46, %c24] : memref<16x32xf32, #tpu.memory_space<vmem>>, vector<16x8xf32>
    %c0_47 = arith.constant 0 : index
    %c24_48 = arith.constant 24 : index
    %93 = vector.load %arg19[%c0_47, %c24_48] : memref<16x32xf32, #tpu.memory_space<vmem>>, vector<16x8xf32>
    %cst_49 = arith.constant dense<0.000000e+00> : vector<8x16xf32>
    %94 = tpu.matmul %91, %92, %cst_49 {dimension_numbers = #tpu.dot_dimension_numbers<[1], [1], [0], [0], [0, 0, 1, 0], [], []>} : vector<8x8xf32>, vector<16x8xf32>, vector<8x16xf32> -> vector<8x16xf32>
    %cst_50 = arith.constant 0.353553385 : f32
    %95 = vector.broadcast %cst_50 : f32 to vector<8x16xf32>
    %96 = arith.mulf %94, %95 : vector<8x16xf32>
    %cst_51 = arith.constant dense<0xFF800000> : vector<8xf32>
    %97 = vector.multi_reduction <maximumf>, %96, %cst_51 [1] : vector<8x16xf32> to vector<8xf32>
    %98 = vector.shape_cast %97 : vector<8xf32> to vector<8x1xf32>
    %99 = vector.broadcast %98 : vector<8x1xf32> to vector<8x16xf32>
    %100 = arith.subf %96, %99 : vector<8x16xf32>
    %101 = math.exp %100 : vector<8x16xf32>
    %cst_52 = arith.constant dense<0.000000e+00> : vector<8xf32>
    %102 = vector.multi_reduction <add>, %101, %cst_52 [1] : vector<8x16xf32> to vector<8xf32>
    %103 = vector.shape_cast %102 : vector<8xf32> to vector<8x1xf32>
    %cst_53 = arith.constant dense<0.000000e+00> : vector<8x8xf32>
    %104 = tpu.matmul %101, %93, %cst_53 {dimension_numbers = #tpu.dot_dimension_numbers<[1], [0], [0], [1], [0, 0, 1, 1], [], []>} : vector<8x16xf32>, vector<16x8xf32>, vector<8x8xf32> -> vector<8x8xf32>
    %105 = tpu.reciprocal %103 : vector<8x1xf32> -> vector<8x1xf32>
    %106 = vector.broadcast %105 : vector<8x1xf32> to vector<8x8xf32>
    %107 = arith.mulf %104, %106 : vector<8x8xf32>
    %c0_54 = arith.constant 0 : index
    %c24_55 = arith.constant 24 : index
    %108 = vector.load %arg20[%c0_54, %c24_55] : memref<8x32xf32, #tpu.memory_space<vmem>>, vector<8x8xf32>
    tpu.vector_store %arg20[%c0_54, %c24_55], %107 {strides = array<i32>} : memref<8x32xf32, #tpu.memory_space<vmem>>, vector<8x8xf32>,
    %c0_56 = arith.constant 0 : index
    %c0_57 = arith.constant 0 : index
    %109 = vector.load %arg20[%c0_56, %c0_57] : memref<8x32xf32, #tpu.memory_space<vmem>>, vector<8x32xf32>
    %c0_58 = arith.constant 0 : index
    %c0_59 = arith.constant 0 : index
    %110 = vector.load %arg7[%c0_58, %c0_59] : memref<32x32xf32, #tpu.memory_space<vmem>>, vector<32x32xf32>
    %cst_60 = arith.constant dense<0.000000e+00> : vector<8x32xf32>
    %111 = tpu.matmul %109, %110, %cst_60 {dimension_numbers = #tpu.dot_dimension_numbers<[1], [0], [0], [1], [0, 0, 1, 1], [], []>} : vector<8x32xf32>, vector<32x32xf32>, vector<8x32xf32> -> vector<8x32xf32>
    %c0_61 = arith.constant 0 : index
    %c0_62 = arith.constant 0 : index
    %112 = vector.load %arg8[%c0_61, %c0_62] : memref<1x32xf32, #tpu.memory_space<vmem>>, vector<1x32xf32>
    %113 = vector.broadcast %112 : vector<1x32xf32> to vector<8x32xf32>
    %114 = arith.addf %111, %113 : vector<8x32xf32>
    %115 = arith.addf %7, %114 : vector<8x32xf32>
    %c0_63 = arith.constant 0 : index
    %c0_64 = arith.constant 0 : index
    %116 = vector.load %arg15[%c0_63, %c0_64] : memref<1x32xf32, #tpu.memory_space<vmem>>, vector<1x32xf32>
    %c0_65 = arith.constant 0 : index
    %c0_66 = arith.constant 0 : index
    %117 = vector.load %arg16[%c0_65, %c0_66] : memref<1x32xf32, #tpu.memory_space<vmem>>, vector<1x32xf32>
    %cst_67 = arith.constant dense<0.000000e+00> : vector<8xf32>
    %118 = vector.multi_reduction <add>, %115, %cst_67 [1] : vector<8x32xf32> to vector<8xf32>
    %119 = vector.shape_cast %118 : vector<8xf32> to vector<8x1xf32>
    %cst_68 = arith.constant 3.200000e+01 : f32
    %120 = vector.broadcast %cst_68 : f32 to vector<8x1xf32>
    %121 = arith.divf %119, %120 : vector<8x1xf32>
    %122 = vector.broadcast %121 : vector<8x1xf32> to vector<8x32xf32>
    %123 = arith.subf %115, %122 : vector<8x32xf32>
    %124 = arith.mulf %123, %123 : vector<8x32xf32>
    %cst_69 = arith.constant dense<0.000000e+00> : vector<8xf32>
    %125 = vector.multi_reduction <add>, %124, %cst_69 [1] : vector<8x32xf32> to vector<8xf32>
    %126 = vector.shape_cast %125 : vector<8xf32> to vector<8x1xf32>
    %cst_70 = arith.constant 3.200000e+01 : f32
    %127 = vector.broadcast %cst_70 : f32 to vector<8x1xf32>
    %128 = arith.divf %126, %127 : vector<8x1xf32>
    %129 = vector.broadcast %121 : vector<8x1xf32> to vector<8x32xf32>
    %130 = arith.subf %115, %129 : vector<8x32xf32>
    %cst_71 = arith.constant 9.99999997E-7 : f32
    %131 = vector.broadcast %cst_71 : f32 to vector<8x1xf32>
    %132 = arith.addf %128, %131 : vector<8x1xf32>
    %133 = math.sqrt %132 : vector<8x1xf32>
    %134 = vector.broadcast %133 : vector<8x1xf32> to vector<8x32xf32>
    %135 = arith.divf %130, %134 : vector<8x32xf32>
    %136 = vector.broadcast %116 : vector<1x32xf32> to vector<8x32xf32>
    %137 = arith.mulf %135, %136 : vector<8x32xf32>
    %138 = vector.broadcast %117 : vector<1x32xf32> to vector<8x32xf32>
    %139 = arith.addf %137, %138 : vector<8x32xf32>
    %c0_72 = arith.constant 0 : index
    %c0_73 = arith.constant 0 : index
    %140 = vector.load %arg11[%c0_72, %c0_73] : memref<32x64xf32, #tpu.memory_space<vmem>>, vector<32x64xf32>
    %cst_74 = arith.constant dense<0.000000e+00> : vector<8x64xf32>
    %141 = tpu.matmul %139, %140, %cst_74 {dimension_numbers = #tpu.dot_dimension_numbers<[1], [0], [0], [1], [0, 0, 1, 1], [], []>} : vector<8x32xf32>, vector<32x64xf32>, vector<8x64xf32> -> vector<8x64xf32>
    %c0_75 = arith.constant 0 : index
    %c0_76 = arith.constant 0 : index
    %142 = vector.load %arg12[%c0_75, %c0_76] : memref<1x64xf32, #tpu.memory_space<vmem>>, vector<1x64xf32>
    %143 = vector.broadcast %142 : vector<1x64xf32> to vector<8x64xf32>
    %144 = arith.addf %141, %143 : vector<8x64xf32>
    %cst_77 = arith.constant 0.000000e+00 : f32
    %145 = vector.broadcast %cst_77 : f32 to vector<8x64xf32>
    %146 = arith.maximumf %144, %145 : vector<8x64xf32>
    %c0_78 = arith.constant 0 : index
    %c0_79 = arith.constant 0 : index
    %147 = vector.load %arg13[%c0_78, %c0_79] : memref<64x32xf32, #tpu.memory_space<vmem>>, vector<64x32xf32>
    %cst_80 = arith.constant dense<0.000000e+00> : vector<8x32xf32>
    %148 = tpu.matmul %146, %147, %cst_80 {dimension_numbers = #tpu.dot_dimension_numbers<[1], [0], [0], [1], [0, 0, 1, 1], [], []>} : vector<8x64xf32>, vector<64x32xf32>, vector<8x32xf32> -> vector<8x32xf32>
    %c0_81 = arith.constant 0 : index
    %c0_82 = arith.constant 0 : index
    %149 = vector.load %arg14[%c0_81, %c0_82] : memref<1x32xf32, #tpu.memory_space<vmem>>, vector<1x32xf32>
    %150 = vector.broadcast %149 : vector<1x32xf32> to vector<8x32xf32>
    %151 = arith.addf %148, %150 : vector<8x32xf32>
    %152 = arith.addf %115, %151 : vector<8x32xf32>
    %c0_83 = arith.constant 0 : index
    %c0_84 = arith.constant 0 : index
    %c0_85 = arith.constant 0 : index
    %153 = vector.load %arg17[%c0_83, %c0_84, %c0_85] : memref<1x8x32xf32, #tpu.memory_space<vmem>>, vector<1x8x32xf32>
    %154 = vector.shape_cast %153 : vector<1x8x32xf32> to vector<8x32xf32>
    %155 = vector.shape_cast %152 : vector<8x32xf32> to vector<1x8x32xf32>
    tpu.vector_store %arg17[%c0_83, %c0_84, %c0_85], %155 {strides = array<i32>} : memref<1x8x32xf32, #tpu.memory_space<vmem>>, vector<1x8x32xf32>,
    return
  }
  func.func @transform_0(%arg0: i32, %arg1: i32) -> (i32, i32, i32) {
    %c0_i32 = arith.constant 0 : i32
    %c0_i32_0 = arith.constant 0 : i32
    %c0_i32_1 = arith.constant 0 : i32
    return %arg0, %c0_i32, %c0_i32_0 : i32, i32, i32
  }
  func.func @transform_1(%arg0: i32, %arg1: i32) -> (i32, i32) {
    %c0_i32 = arith.constant 0 : i32
    %c0_i32_0 = arith.constant 0 : i32
    %c0_i32_1 = arith.constant 0 : i32
    return %c0_i32, %c0_i32_0 : i32, i32
  }
  func.func @transform_2(%arg0: i32, %arg1: i32) -> (i32, i32) {
    %c0_i32 = arith.constant 0 : i32
    %c0_i32_0 = arith.constant 0 : i32
    %c0_i32_1 = arith.constant 0 : i32
    return %c0_i32, %c0_i32_0 : i32, i32
  }
  func.func @transform_3(%arg0: i32, %arg1: i32) -> (i32, i32) {
    %c0_i32 = arith.constant 0 : i32
    %c0_i32_0 = arith.constant 0 : i32
    %c0_i32_1 = arith.constant 0 : i32
    return %c0_i32, %c0_i32_0 : i32, i32
  }
  func.func @transform_4(%arg0: i32, %arg1: i32) -> (i32, i32) {
    %c0_i32 = arith.constant 0 : i32
    %c0_i32_0 = arith.constant 0 : i32
    %c0_i32_1 = arith.constant 0 : i32
    return %c0_i32, %c0_i32_0 : i32, i32
  }
  func.func @transform_5(%arg0: i32, %arg1: i32) -> (i32, i32) {
    %c0_i32 = arith.constant 0 : i32
    %c0_i32_0 = arith.constant 0 : i32
    %c0_i32_1 = arith.constant 0 : i32
    return %c0_i32, %c0_i32_0 : i32, i32
  }
  func.func @transform_6(%arg0: i32, %arg1: i32) -> (i32, i32) {
    %c0_i32 = arith.constant 0 : i32
    %c0_i32_0 = arith.constant 0 : i32
    %c0_i32_1 = arith.constant 0 : i32
    return %c0_i32, %c0_i32_0 : i32, i32
  }
  func.func @transform_7(%arg0: i32, %arg1: i32) -> (i32, i32) {
    %c0_i32 = arith.constant 0 : i32
    %c0_i32_0 = arith.constant 0 : i32
    %c0_i32_1 = arith.constant 0 : i32
    return %c0_i32, %c0_i32_0 : i32, i32
  }
  func.func @transform_8(%arg0: i32, %arg1: i32) -> (i32, i32) {
    %c0_i32 = arith.constant 0 : i32
    %c0_i32_0 = arith.constant 0 : i32
    %c0_i32_1 = arith.constant 0 : i32
    return %c0_i32, %c0_i32_0 : i32, i32
  }
  func.func @transform_9(%arg0: i32, %arg1: i32) -> (i32, i32) {
    %c0_i32 = arith.constant 0 : i32
    %c0_i32_0 = arith.constant 0 : i32
    %c0_i32_1 = arith.constant 0 : i32
    return %c0_i32, %c0_i32_0 : i32, i32
  }
  func.func @transform_10(%arg0: i32, %arg1: i32) -> (i32, i32) {
    %c0_i32 = arith.constant 0 : i32
    %c0_i32_0 = arith.constant 0 : i32
    %c0_i32_1 = arith.constant 0 : i32
    return %c0_i32, %c0_i32_0 : i32, i32
  }
  func.func @transform_11(%arg0: i32, %arg1: i32) -> (i32, i32) {
    %c0_i32 = arith.constant 0 : i32
    %c0_i32_0 = arith.constant 0 : i32
    %c0_i32_1 = arith.constant 0 : i32
    return %c0_i32, %c0_i32_0 : i32, i32
  }
  func.func @transform_12(%arg0: i32, %arg1: i32) -> (i32, i32) {
    %c0_i32 = arith.constant 0 : i32
    %c0_i32_0 = arith.constant 0 : i32
    %c0_i32_1 = arith.constant 0 : i32
    return %c0_i32, %c0_i32_0 : i32, i32
  }
  func.func @transform_13(%arg0: i32, %arg1: i32) -> (i32, i32) {
    %c0_i32 = arith.constant 0 : i32
    %c0_i32_0 = arith.constant 0 : i32
    %c0_i32_1 = arith.constant 0 : i32
    return %c0_i32, %c0_i32_0 : i32, i32
  }
  func.func @transform_14(%arg0: i32, %arg1: i32) -> (i32, i32) {
    %c0_i32 = arith.constant 0 : i32
    %c0_i32_0 = arith.constant 0 : i32
    %c0_i32_1 = arith.constant 0 : i32
    return %c0_i32, %c0_i32_0 : i32, i32
  }
  func.func @transform_15(%arg0: i32, %arg1: i32) -> (i32, i32, i32) {
    %c0_i32 = arith.constant 0 : i32
    %c0_i32_0 = arith.constant 0 : i32
    return %arg0, %arg1, %c0_i32 : i32, i32, i32
  }
}

</mosaic_0001>

<llo_original>
// kernel: tpu_custom_call.1
$region0: #{tpu_custom_call.1}
  #allocation0 [shape = 'u32[]', space=smem, size = 0x4, offset = 0x4, fixed_abs, tag = 'smem constant byte address 0x4 - core index']
  #allocation1 [shape = 'u32[144,128]{1,0:T(1,128)}', space=vmem, size = 0x12000, scoped, tag = 'internal scratch']
  #allocation2 [shape = 'f32[16,32]{1,0:T(8,128)}', space=vmem, size = 0x2000, scoped, tag = 'scratch operand']
  #allocation3 [shape = 'f32[16,32]{1,0:T(8,128)}', space=vmem, size = 0x2000, scoped, tag = 'scratch operand']
  #allocation4 [shape = 'f32[8,32]{1,0:T(8,128)}', space=vmem, size = 0x1000, scoped, tag = 'scratch operand']
  %s0 = inlined_call_operand.vmem [shape: f32[2,16,32], index: 0, kind: input, shape index: {}]
  %s1 = inlined_call_operand.vmem [shape: f32[32,32], index: 1, kind: input, shape index: {}]
  %s2 = inlined_call_operand.vmem [shape: f32[1,32], index: 2, kind: input, shape index: {}]
  %s3 = inlined_call_operand.vmem [shape: f32[32,64], index: 3, kind: input, shape index: {}]
  %s4 = inlined_call_operand.vmem [shape: f32[1,64], index: 4, kind: input, shape index: {}]
  %s5 = inlined_call_operand.hbm [shape: f32[32,32], index: 5, kind: input, shape index: {}]
  %s6 = inlined_call_operand.vmem [shape: f32[1,32], index: 6, kind: input, shape index: {}]
  %s7 = inlined_call_operand.vmem [shape: f32[1,32], index: 7, kind: input, shape index: {}]
  %s8 = inlined_call_operand.vmem [shape: f32[1,32], index: 8, kind: input, shape index: {}]
  %s9 = inlined_call_operand.hbm [shape: f32[32,64], index: 9, kind: input, shape index: {}]
  %s10 = inlined_call_operand.vmem [shape: f32[1,64], index: 10, kind: input, shape index: {}]
  %s11 = inlined_call_operand.vmem [shape: f32[64,32], index: 11, kind: input, shape index: {}]
  %s12 = inlined_call_operand.vmem [shape: f32[1,32], index: 12, kind: input, shape index: {}]
  %s13 = inlined_call_operand.vmem [shape: f32[1,32], index: 13, kind: input, shape index: {}]
  %s14 = inlined_call_operand.vmem [shape: f32[1,32], index: 14, kind: input, shape index: {}]
  %s15 = inlined_call_operand.hbm [shape: f32[2,16,32], index: 15, kind: output, shape index: {}]
  %s16 = sld [smem:[#allocation0]]
  $region112: #{tpu_custom_call.1} parent=0
    _
  %s18 = ssub.s32 1, %s16
  %s19 = scalar_select 0, %s18, %s16
  $region1: #{tpu_custom_call.1} parent=0
    #allocation5 [shape = 'u8[16384]{0}', space=vmem, size = 0x4000, scoped, tag = 'input window, operand 5, single buffered']
    #allocation6 [shape = 's32[2]{0}', space=sflag, size = 0x8, scoped, tag = 'scoped memory for tpu_custom_call.1']
    #allocation7 [shape = 's32[2]{0}', space=sflag, size = 0x8, scoped, tag = 'scoped memory for tpu_custom_call.1']
    #allocation8 [shape = 'u8[16384]{0}', space=vmem, size = 0x4000, scoped, tag = 'input window, operand 9, single buffered']
    #allocation9 [shape = 's32[1]{0}', space=sflag, size = 0x4, scoped, tag = 'scoped memory for tpu_custom_call.1']
    #allocation10 [shape = 'u8[8192]{0}', space=vmem, size = 0x2000, scoped, tag = 'output window, operand 0']
    %20 = vsyncpa [#allocation6], 0
    %21 = vsyncpa [#allocation9], 0
    %22 = vsyncpa [#allocation7], 0
    %s23 = scalar_lea.sflag [#allocation7], 1
    %24 = vsyncpa %s23, 0
    loop: start=0, step=1, limit=6
    $region2: #{tpu_custom_call.1} parent=1 // loop_pre_header
      _
    $region3: #{tpu_custom_call.1} parent=1 // loop_header
      %s26 = sphi 0, %s30
      %p27 = scmp.ge.s32.totalorder %s26, 6
      %s33 = sphi 0, %s45
      %s34 = sphi 0, %s41
      %s35 = sphi 0, %s33
      %s36 = sphi 0, %s34
      %s37 = sphi 0, %s35
      %s38 = sphi 0, %s36
      %s48 = sphi 0, %s50
      %s51 = sphi 0, %s48
      %s52 = sphi 0, %s51
      %s68 = sphi 0, %s52
      %s72 = sphi 0, %s72
      %s74 = sphi 0, %s72
      %s75 = sphi 0, %s74
      %s89 = sphi 0, %s75
      %s93 = sphi 0, %s93
      %s95 = sphi 0, %s93
      %s96 = sphi 0, %s95
      %s110 = sphi 0, %s96
      %s114 = sphi 0, %s114
      %s116 = sphi 0, %s114
      %s117 = sphi 0, %s116
      %s131 = sphi 0, %s117
      %s135 = sphi 0, %s135
      %s137 = sphi 0, %s135
      %s138 = sphi 0, %s137
      %s152 = sphi 0, %s138
      %s156 = sphi 0, %s156
      %s158 = sphi 0, %s156
      %s159 = sphi 0, %s158
      %s173 = sphi 0, %s159
      %s177 = sphi 0, %s177
      %s179 = sphi 0, %s177
      %s180 = sphi 0, %s179
      %s194 = sphi 0, %s180
      %s198 = sphi 0, %s198
      %s200 = sphi 0, %s198
      %s201 = sphi 0, %s200
      %s215 = sphi 0, %s201
      %s219 = sphi 0, %s219
      %s221 = sphi 0, %s219
      %s222 = sphi 0, %s221
      %s236 = sphi 0, %s222
      %s240 = sphi 0, %s240
      %s242 = sphi 0, %s240
      %s243 = sphi 0, %s242
      %s257 = sphi 0, %s243
      %s261 = sphi 0, %s261
      %s263 = sphi 0, %s261
      %s264 = sphi 0, %s263
      %s278 = sphi 0, %s264
      %s282 = sphi 0, %s282
      %s284 = sphi 0, %s282
      %s285 = sphi 0, %s284
      %s299 = sphi 0, %s285
      %s303 = sphi 0, %s303
      %s305 = sphi 0, %s303
      %s306 = sphi 0, %s305
      %s320 = sphi 0, %s306
      %s324 = sphi 0, %s324
      %s326 = sphi 0, %s324
      %s327 = sphi 0, %s326
      %s341 = sphi 0, %s327
      %s345 = sphi 0, %s345
      %s347 = sphi 0, %s345
      %s348 = sphi 0, %s347
      %s362 = sphi 0, %s348
      %s370 = sphi 0, %s372
      %s373 = sphi 0, %s370
      %s374 = sphi 0, %s373
      %s390 = sphi 0, %s374
    $region4: #{tpu_custom_call.1} parent=1 // loop_header_branch
      %29 = sbr.rel (%p27) target = $region8
    $region5: #{tpu_custom_call.1} parent=1 // loop_body
      %s31 = ssub.s32 %s26, 1
      %s32 = ssub.s32 %s26, 2
      %s39 = sadd.s32 1, %s34
      %p40 = scmp.ge.s32.totalorder %s39, 2
      %s41 = scalar_select %p40, 0, %s39
      %s42 = sadd.s32 1, %s33
      %s43 = scalar_select %p40, %s42, %s33
      %p44 = scmp.ge.s32.totalorder %s43, 2
      %s45 = scalar_select %p44, 0, %s43
      %s46 = ssub.s32 %s33, %s45
      %p47 = scmp.eq.s32.totalorder %s46, 0
      %s49 = sadd.s32 %s48, 1
      %s50 = scalar_select %p47, %s48, %s49
      %p53 = pneg %p47
      %p54 = scmp.eq.s32.totalorder %s26, 3
      %p55 = por %p53, %p54
      %p56 = scmp.ne.s32.totalorder %s48, %s51
      %p57 = scmp.eq.s32.totalorder %s26, 0
      %p58 = por %p56, %p57
      %p59 = scmp.ne.s32.totalorder %s48, %s51
      %p60 = scmp.eq.s32.totalorder %s31, 3
      %p61 = por %p59, %p60
      %p62 = scmp.ne.s32.totalorder %s51, %s52
      %p63 = scmp.eq.s32.totalorder %s31, 0
      %p64 = por %p62, %p63
      %p65 = scmp.ne.s32.totalorder %s51, %s52
      %p66 = scmp.eq.s32.totalorder %s32, 3
      %p67 = por %p65, %p66
      %p69 = scmp.ne.s32.totalorder %s52, %s68
      %p70 = scmp.eq.s32.totalorder %s32, 0
      %p71 = por %p69, %p70
      %s73 = sadd.s32 %s72, 1
      %p76 = scmp.eq.s32.totalorder %s26, 3
      %p77 = scmp.ne.s32.totalorder %s72, %s74
      %p78 = scmp.eq.s32.totalorder %s26, 0
      %p79 = por %p77, %p78
      %p80 = scmp.ne.s32.totalorder %s72, %s74
      %p81 = scmp.eq.s32.totalorder %s31, 3
      %p82 = por %p80, %p81
      %p83 = scmp.ne.s32.totalorder %s74, %s75
      %p84 = scmp.eq.s32.totalorder %s31, 0
      %p85 = por %p83, %p84
      %p86 = scmp.ne.s32.totalorder %s74, %s75
      %p87 = scmp.eq.s32.totalorder %s32, 3
      %p88 = por %p86, %p87
      %p90 = scmp.ne.s32.totalorder %s75, %s89
      %p91 = scmp.eq.s32.totalorder %s32, 0
      %p92 = por %p90, %p91
      %s94 = sadd.s32 %s93, 1
      %p97 = scmp.eq.s32.totalorder %s26, 3
      %p98 = scmp.ne.s32.totalorder %s93, %s95
      %p99 = scmp.eq.s32.totalorder %s26, 0
      %p100 = por %p98, %p99
      %p101 = scmp.ne.s32.totalorder %s93, %s95
      %p102 = scmp.eq.s32.totalorder %s31, 3
      %p103 = por %p101, %p102
      %p104 = scmp.ne.s32.totalorder %s95, %s96
      %p105 = scmp.eq.s32.totalorder %s31, 0
      %p106 = por %p104, %p105
      %p107 = scmp.ne.s32.totalorder %s95, %s96
      %p108 = scmp.eq.s32.totalorder %s32, 3
      %p109 = por %p107, %p108
      %p111 = scmp.ne.s32.totalorder %s96, %s110
      %p112 = scmp.eq.s32.totalorder %s32, 0
      %p113 = por %p111, %p112
      %s115 = sadd.s32 %s114, 1
      %p118 = scmp.eq.s32.totalorder %s26, 3
      %p119 = scmp.ne.s32.totalorder %s114, %s116
      %p120 = scmp.eq.s32.totalorder %s26, 0
      %p121 = por %p119, %p120
      %p122 = scmp.ne.s32.totalorder %s114, %s116
      %p123 = scmp.eq.s32.totalorder %s31, 3
      %p124 = por %p122, %p123
      %p125 = scmp.ne.s32.totalorder %s116, %s117
      %p126 = scmp.eq.s32.totalorder %s31, 0
      %p127 = por %p125, %p126
      %p128 = scmp.ne.s32.totalorder %s116, %s117
      %p129 = scmp.eq.s32.totalorder %s32, 3
      %p130 = por %p128, %p129
      %p132 = scmp.ne.s32.totalorder %s117, %s131
      %p133 = scmp.eq.s32.totalorder %s32, 0
      %p134 = por %p132, %p133
      %s136 = sadd.s32 %s135, 1
      %p139 = scmp.eq.s32.totalorder %s26, 3
      %p140 = scmp.ne.s32.totalorder %s135, %s137
      %p141 = scmp.eq.s32.totalorder %s26, 0
      %p142 = por %p140, %p141
      %p143 = scmp.ne.s32.totalorder %s135, %s137
      %p144 = scmp.eq.s32.totalorder %s31, 3
      %p145 = por %p143, %p144
      %p146 = scmp.ne.s32.totalorder %s137, %s138
      %p147 = scmp.eq.s32.totalorder %s31, 0
      %p148 = por %p146, %p147
      %p149 = scmp.ne.s32.totalorder %s137, %s138
      %p150 = scmp.eq.s32.totalorder %s32, 3
      %p151 = por %p149, %p150
      %p153 = scmp.ne.s32.totalorder %s138, %s152
      %p154 = scmp.eq.s32.totalorder %s32, 0
      %p155 = por %p153, %p154
      %s157 = sadd.s32 %s156, 1
      %p160 = scmp.eq.s32.totalorder %s26, 3
      %p161 = scmp.ne.s32.totalorder %s156, %s158
      %p162 = scmp.eq.s32.totalorder %s26, 0
      %p163 = por %p161, %p162
      %p164 = scmp.ne.s32.totalorder %s156, %s158
      %p165 = scmp.eq.s32.totalorder %s31, 3
      %p166 = por %p164, %p165
      %p167 = scmp.ne.s32.totalorder %s158, %s159
      %p168 = scmp.eq.s32.totalorder %s31, 0
      %p169 = por %p167, %p168
      %p170 = scmp.ne.s32.totalorder %s158, %s159
      %p171 = scmp.eq.s32.totalorder %s32, 3
      %p172 = por %p170, %p171
      %p174 = scmp.ne.s32.totalorder %s159, %s173
      %p175 = scmp.eq.s32.totalorder %s32, 0
      %p176 = por %p174, %p175
      %s178 = sadd.s32 %s177, 1
      %p181 = scmp.eq.s32.totalorder %s26, 3
      %p182 = scmp.ne.s32.totalorder %s177, %s179
      %p183 = scmp.eq.s32.totalorder %s26, 0
      %p184 = por %p182, %p183
      %p185 = scmp.ne.s32.totalorder %s177, %s179
      %p186 = scmp.eq.s32.totalorder %s31, 3
      %p187 = por %p185, %p186
      %p188 = scmp.ne.s32.totalorder %s179, %s180
      %p189 = scmp.eq.s32.totalorder %s31, 0
      %p190 = por %p188, %p189
      %p191 = scmp.ne.s32.totalorder %s179, %s180
      %p192 = scmp.eq.s32.totalorder %s32, 3
      %p193 = por %p191, %p192
      %p195 = scmp.ne.s32.totalorder %s180, %s194
      %p196 = scmp.eq.s32.totalorder %s32, 0
      %p197 = por %p195, %p196
      %s199 = sadd.s32 %s198, 1
      %p202 = scmp.eq.s32.totalorder %s26, 3
      %p203 = scmp.ne.s32.totalorder %s198, %s200
      %p204 = scmp.eq.s32.totalorder %s26, 0
      %p205 = por %p203, %p204
      %p206 = scmp.ne.s32.totalorder %s198, %s200
      %p207 = scmp.eq.s32.totalorder %s31, 3
      %p208 = por %p206, %p207
      %p209 = scmp.ne.s32.totalorder %s200, %s201
      %p210 = scmp.eq.s32.totalorder %s31, 0
      %p211 = por %p209, %p210
      %p212 = scmp.ne.s32.totalorder %s200, %s201
      %p213 = scmp.eq.s32.totalorder %s32, 3
      %p214 = por %p212, %p213
      %p216 = scmp.ne.s32.totalorder %s201, %s215
      %p217 = scmp.eq.s32.totalorder %s32, 0
      %p218 = por %p216, %p217
      %s220 = sadd.s32 %s219, 1
      %p223 = scmp.eq.s32.totalorder %s26, 3
      %p224 = scmp.ne.s32.totalorder %s219, %s221
      %p225 = scmp.eq.s32.totalorder %s26, 0
      %p226 = por %p224, %p225
      %p227 = scmp.ne.s32.totalorder %s219, %s221
      %p228 = scmp.eq.s32.totalorder %s31, 3
      %p229 = por %p227, %p228
      %p230 = scmp.ne.s32.totalorder %s221, %s222
      %p231 = scmp.eq.s32.totalorder %s31, 0
      %p232 = por %p230, %p231
      %p233 = scmp.ne.s32.totalorder %s221, %s222
      %p234 = scmp.eq.s32.totalorder %s32, 3
      %p235 = por %p233, %p234
      %p237 = scmp.ne.s32.totalorder %s222, %s236
      %p238 = scmp.eq.s32.totalorder %s32, 0
      %p239 = por %p237, %p238
      %s241 = sadd.s32 %s240, 1
      %p244 = scmp.eq.s32.totalorder %s26, 3
      %p245 = scmp.ne.s32.totalorder %s240, %s242
      %p246 = scmp.eq.s32.totalorder %s26, 0
      %p247 = por %p245, %p246
      %p248 = scmp.ne.s32.totalorder %s240, %s242
      %p249 = scmp.eq.s32.totalorder %s31, 3
      %p250 = por %p248, %p249
      %p251 = scmp.ne.s32.totalorder %s242, %s243
      %p252 = scmp.eq.s32.totalorder %s31, 0
      %p253 = por %p251, %p252
      %p254 = scmp.ne.s32.totalorder %s242, %s243
      %p255 = scmp.eq.s32.totalorder %s32, 3
      %p256 = por %p254, %p255
      %p258 = scmp.ne.s32.totalorder %s243, %s257
      %p259 = scmp.eq.s32.totalorder %s32, 0
      %p260 = por %p258, %p259
      %s262 = sadd.s32 %s261, 1
      %p265 = scmp.eq.s32.totalorder %s26, 3
      %p266 = scmp.ne.s32.totalorder %s261, %s263
      %p267 = scmp.eq.s32.totalorder %s26, 0
      %p268 = por %p266, %p267
      %p269 = scmp.ne.s32.totalorder %s261, %s263
      %p270 = scmp.eq.s32.totalorder %s31, 3
      %p271 = por %p269, %p270
      %p272 = scmp.ne.s32.totalorder %s263, %s264
      %p273 = scmp.eq.s32.totalorder %s31, 0
      %p274 = por %p272, %p273
      %p275 = scmp.ne.s32.totalorder %s263, %s264
      %p276 = scmp.eq.s32.totalorder %s32, 3
      %p277 = por %p275, %p276
      %p279 = scmp.ne.s32.totalorder %s264, %s278
      %p280 = scmp.eq.s32.totalorder %s32, 0
      %p281 = por %p279, %p280
      %s283 = sadd.s32 %s282, 1
      %p286 = scmp.eq.s32.totalorder %s26, 3
      %p287 = scmp.ne.s32.totalorder %s282, %s284
      %p288 = scmp.eq.s32.totalorder %s26, 0
      %p289 = por %p287, %p288
      %p290 = scmp.ne.s32.totalorder %s282, %s284
      %p291 = scmp.eq.s32.totalorder %s31, 3
      %p292 = por %p290, %p291
      %p293 = scmp.ne.s32.totalorder %s284, %s285
      %p294 = scmp.eq.s32.totalorder %s31, 0
      %p295 = por %p293, %p294
      %p296 = scmp.ne.s32.totalorder %s284, %s285
      %p297 = scmp.eq.s32.totalorder %s32, 3
      %p298 = por %p296, %p297
      %p300 = scmp.ne.s32.totalorder %s285, %s299
      %p301 = scmp.eq.s32.totalorder %s32, 0
      %p302 = por %p300, %p301
      %s304 = sadd.s32 %s303, 1
      %p307 = scmp.eq.s32.totalorder %s26, 3
      %p308 = scmp.ne.s32.totalorder %s303, %s305
      %p309 = scmp.eq.s32.totalorder %s26, 0
      %p310 = por %p308, %p309
      %p311 = scmp.ne.s32.totalorder %s303, %s305
      %p312 = scmp.eq.s32.totalorder %s31, 3
      %p313 = por %p311, %p312
      %p314 = scmp.ne.s32.totalorder %s305, %s306
      %p315 = scmp.eq.s32.totalorder %s31, 0
      %p316 = por %p314, %p315
      %p317 = scmp.ne.s32.totalorder %s305, %s306
      %p318 = scmp.eq.s32.totalorder %s32, 3
      %p319 = por %p317, %p318
      %p321 = scmp.ne.s32.totalorder %s306, %s320
      %p322 = scmp.eq.s32.totalorder %s32, 0
      %p323 = por %p321, %p322
      %s325 = sadd.s32 %s324, 1
      %p328 = scmp.eq.s32.totalorder %s26, 3
      %p329 = scmp.ne.s32.totalorder %s324, %s326
      %p330 = scmp.eq.s32.totalorder %s26, 0
      %p331 = por %p329, %p330
      %p332 = scmp.ne.s32.totalorder %s324, %s326
      %p333 = scmp.eq.s32.totalorder %s31, 3
      %p334 = por %p332, %p333
      %p335 = scmp.ne.s32.totalorder %s326, %s327
      %p336 = scmp.eq.s32.totalorder %s31, 0
      %p337 = por %p335, %p336
      %p338 = scmp.ne.s32.totalorder %s326, %s327
      %p339 = scmp.eq.s32.totalorder %s32, 3
      %p340 = por %p338, %p339
      %p342 = scmp.ne.s32.totalorder %s327, %s341
      %p343 = scmp.eq.s32.totalorder %s32, 0
      %p344 = por %p342, %p343
      %s346 = sadd.s32 %s345, 1
      %p349 = scmp.eq.s32.totalorder %s26, 3
      %p350 = scmp.ne.s32.totalorder %s345, %s347
      %p351 = scmp.eq.s32.totalorder %s26, 0
      %p352 = por %p350, %p351
      %p353 = scmp.ne.s32.totalorder %s345, %s347
      %p354 = scmp.eq.s32.totalorder %s31, 3
      %p355 = por %p353, %p354
      %p356 = scmp.ne.s32.totalorder %s347, %s348
      %p357 = scmp.eq.s32.totalorder %s31, 0
      %p358 = por %p356, %p357
      %p359 = scmp.ne.s32.totalorder %s347, %s348
      %p360 = scmp.eq.s32.totalorder %s32, 3
      %p361 = por %p359, %p360
      %p363 = scmp.ne.s32.totalorder %s348, %s362
      %p364 = scmp.eq.s32.totalorder %s32, 0
      %p365 = por %p363, %p364
      %s366 = ssub.s32 %s33, %s45
      %s367 = ssub.s32 %s34, %s41
      %s368 = sor.u32 %s366, %s367
      %p369 = scmp.eq.s32.totalorder %s368, 0
      %s371 = sadd.s32 %s370, 1
      %s372 = scalar_select %p369, %s370, %s371
      %p375 = pneg %p369
      %p376 = scmp.eq.s32.totalorder %s26, 3
      %p377 = por %p375, %p376
      %p378 = scmp.ne.s32.totalorder %s370, %s373
      %p379 = scmp.eq.s32.totalorder %s26, 0
      %p380 = por %p378, %p379
      %p381 = scmp.ne.s32.totalorder %s370, %s373
      %p382 = scmp.eq.s32.totalorder %s31, 3
      %p383 = por %p381, %p382
      %p384 = scmp.ne.s32.totalorder %s373, %s374
      %p385 = scmp.eq.s32.totalorder %s31, 0
      %p386 = por %p384, %p385
      %p387 = scmp.ne.s32.totalorder %s373, %s374
      %p388 = scmp.eq.s32.totalorder %s32, 3
      %p389 = por %p387, %p388
      %p391 = scmp.ne.s32.totalorder %s374, %s390
      %p392 = scmp.eq.s32.totalorder %s32, 0
      %p393 = por %p391, %p392
      %p394 = scmp.le.s32.totalorder 1, %s26
      %p395 = scmp.lt.s32.totalorder %s26, 5
      %p396 = pnand %p394, %p395
      %p397 = pneg %p396
      // Predicated region
      $region9: #{tpu_custom_call.1} parent=5 // pred_check
        _
      $region10: #{tpu_custom_call.1} parent=5 // pred_check_branch
        %399 = sbr.rel (%p396) target = $region12
      $region11: #{tpu_custom_call.1} parent=5 // pred_region
        %s400 = ssub.s32 %s26, 1
        // Predicated region
        $region13: #{tpu_custom_call.1} parent=11 // pred_check
          %p401 = pneg %p64
        $region14: #{tpu_custom_call.1} parent=11 // pred_check_branch
          %403 = sbr.rel (%p401) target = $region16
        $region15: #{tpu_custom_call.1} parent=11 // pred_region
          %p404 = scmp.lt.s32.totalorder %s35, 1
          %s405 = scalar_select %p404, %s35, 1
          %s406 = smul.addr %s405, 2
          %s407 = smul.addr %s406, 8
          %s408 = scalar_lea.vmem %s0, %s407
        $region16: #{tpu_custom_call.1} parent=11 // pred_fallthru
          _
        // Predicated region
        $region17: #{tpu_custom_call.1} parent=11 // pred_check
          %p409 = pneg %p85
        $region18: #{tpu_custom_call.1} parent=11 // pred_check_branch
          %411 = sbr.rel (%p409) target = $region20
        $region19: #{tpu_custom_call.1} parent=11 // pred_region
          _
        $region20: #{tpu_custom_call.1} parent=11 // pred_fallthru
          _
        // Predicated region
        $region21: #{tpu_custom_call.1} parent=11 // pred_check
          %p412 = pneg %p106
        $region22: #{tpu_custom_call.1} parent=11 // pred_check_branch
          %414 = sbr.rel (%p412) target = $region24
        $region23: #{tpu_custom_call.1} parent=11 // pred_region
          _
        $region24: #{tpu_custom_call.1} parent=11 // pred_fallthru
          _
        // Predicated region
        $region25: #{tpu_custom_call.1} parent=11 // pred_check
          %p415 = pneg %p127
        $region26: #{tpu_custom_call.1} parent=11 // pred_check_branch
          %417 = sbr.rel (%p415) target = $region28
        $region27: #{tpu_custom_call.1} parent=11 // pred_region
          _
        $region28: #{tpu_custom_call.1} parent=11 // pred_fallthru
          _
        // Predicated region
        $region29: #{tpu_custom_call.1} parent=11 // pred_check
          %p418 = pneg %p148
        $region30: #{tpu_custom_call.1} parent=11 // pred_check_branch
          %420 = sbr.rel (%p418) target = $region32
        $region31: #{tpu_custom_call.1} parent=11 // pred_region
          _
        $region32: #{tpu_custom_call.1} parent=11 // pred_fallthru
          _
        // Predicated region
        $region33: #{tpu_custom_call.1} parent=11 // pred_check
          %p421 = pneg %p169
        $region34: #{tpu_custom_call.1} parent=11 // pred_check_branch
          %423 = sbr.rel (%p421) target = $region36
        $region35: #{tpu_custom_call.1} parent=11 // pred_region
          %s425 = ssub.s32 512, 512
          %426 = vsyncadd [#allocation6], %s425
          %s427 = sshll.u32 [#allocation5], 4
          %s428 = int_to_ptr.vmem [resolvable:$true] %s427
          %433 = dma.hbm_to_vmem [thread:$0]  %s5, 512, %s428, [#allocation6], 128, 128, 8
        $region36: #{tpu_custom_call.1} parent=11 // pred_fallthru
          _
        // Predicated region
        $region37: #{tpu_custom_call.1} parent=11 // pred_check
          %p434 = pneg %p190
        $region38: #{tpu_custom_call.1} parent=11 // pred_check_branch
          %436 = sbr.rel (%p434) target = $region40
        $region39: #{tpu_custom_call.1} parent=11 // pred_region
          _
        $region40: #{tpu_custom_call.1} parent=11 // pred_fallthru
          _
        // Predicated region
        $region41: #{tpu_custom_call.1} parent=11 // pred_check
          %p437 = pneg %p211
        $region42: #{tpu_custom_call.1} parent=11 // pred_check_branch
          %439 = sbr.rel (%p437) target = $region44
        $region43: #{tpu_custom_call.1} parent=11 // pred_region
          _
        $region44: #{tpu_custom_call.1} parent=11 // pred_fallthru
          _
        // Predicated region
        $region45: #{tpu_custom_call.1} parent=11 // pred_check
          %p440 = pneg %p232
        $region46: #{tpu_custom_call.1} parent=11 // pred_check_branch
          %442 = sbr.rel (%p440) target = $region48
        $region47: #{tpu_custom_call.1} parent=11 // pred_region
          _
        $region48: #{tpu_custom_call.1} parent=11 // pred_fallthru
          _
        // Predicated region
        $region49: #{tpu_custom_call.1} parent=11 // pred_check
          %p443 = pneg %p253
        $region50: #{tpu_custom_call.1} parent=11 // pred_check_branch
          %445 = sbr.rel (%p443) target = $region52
        $region51: #{tpu_custom_call.1} parent=11 // pred_region
          %s447 = ssub.s32 512, 512
          %448 = vsyncadd [#allocation9], %s447
          %s449 = sshll.u32 [#allocation8], 4
          %s450 = int_to_ptr.vmem [resolvable:$true] %s449
          %455 = dma.hbm_to_vmem [thread:$0]  %s9, 512, %s450, [#allocation9], 128, 128, 8
        $region52: #{tpu_custom_call.1} parent=11 // pred_fallthru
          _
        // Predicated region
        $region53: #{tpu_custom_call.1} parent=11 // pred_check
          %p456 = pneg %p274
        $region54: #{tpu_custom_call.1} parent=11 // pred_check_branch
          %458 = sbr.rel (%p456) target = $region56
        $region55: #{tpu_custom_call.1} parent=11 // pred_region
          _
        $region56: #{tpu_custom_call.1} parent=11 // pred_fallthru
          _
        // Predicated region
        $region57: #{tpu_custom_call.1} parent=11 // pred_check
          %p459 = pneg %p295
        $region58: #{tpu_custom_call.1} parent=11 // pred_check_branch
          %461 = sbr.rel (%p459) target = $region60
        $region59: #{tpu_custom_call.1} parent=11 // pred_region
          _
        $region60: #{tpu_custom_call.1} parent=11 // pred_fallthru
          _
        // Predicated region
        $region61: #{tpu_custom_call.1} parent=11 // pred_check
          %p462 = pneg %p316
        $region62: #{tpu_custom_call.1} parent=11 // pred_check_branch
          %464 = sbr.rel (%p462) target = $region64
        $region63: #{tpu_custom_call.1} parent=11 // pred_region
          _
        $region64: #{tpu_custom_call.1} parent=11 // pred_fallthru
          _
        // Predicated region
        $region65: #{tpu_custom_call.1} parent=11 // pred_check
          %p465 = pneg %p337
        $region66: #{tpu_custom_call.1} parent=11 // pred_check_branch
          %467 = sbr.rel (%p465) target = $region68
        $region67: #{tpu_custom_call.1} parent=11 // pred_region
          _
        $region68: #{tpu_custom_call.1} parent=11 // pred_fallthru
          _
        // Predicated region
        $region69: #{tpu_custom_call.1} parent=11 // pred_check
          %p468 = pneg %p358
        $region70: #{tpu_custom_call.1} parent=11 // pred_check_branch
          %470 = sbr.rel (%p468) target = $region72
        $region71: #{tpu_custom_call.1} parent=11 // pred_region
          _
        $region72: #{tpu_custom_call.1} parent=11 // pred_fallthru
          _
      $region12: #{tpu_custom_call.1} parent=5 // pred_fallthru
        _
      %p471 = scmp.lt.s32.totalorder %s26, 4
      // Predicated region
      $region73: #{tpu_custom_call.1} parent=5 // pred_check
        %p472 = pneg %p471
      $region74: #{tpu_custom_call.1} parent=5 // pred_check_branch
        %474 = sbr.rel (%p472) target = $region76
      $region75: #{tpu_custom_call.1} parent=5 // pred_region
        _
      $region76: #{tpu_custom_call.1} parent=5 // pred_fallthru
        _
      %p475 = scmp.le.s32.totalorder 1, %s26
      %p476 = scmp.lt.s32.totalorder %s26, 5
      %p477 = pnand %p475, %p476
      %p478 = pneg %p477
      // Predicated region
      $region77: #{tpu_custom_call.1} parent=5 // pred_check
        _
      $region78: #{tpu_custom_call.1} parent=5 // pred_check_branch
        %480 = sbr.rel (%p477) target = $region80
      $region79: #{tpu_custom_call.1} parent=5 // pred_region
        %s481 = ssub.s32 %s26, 1
        // Predicated region
        $region81: #{tpu_custom_call.1} parent=79 // pred_check
          %p482 = pneg %p169
        $region82: #{tpu_custom_call.1} parent=79 // pred_check_branch
          %484 = sbr.rel (%p482) target = $region84
        $region83: #{tpu_custom_call.1} parent=79 // pred_region
          %485 = dma.done [#allocation6], 512
        $region84: #{tpu_custom_call.1} parent=79 // pred_fallthru
          _
        // Predicated region
        $region85: #{tpu_custom_call.1} parent=79 // pred_check
          %p486 = pneg %p253
        $region86: #{tpu_custom_call.1} parent=79 // pred_check_branch
          %488 = sbr.rel (%p486) target = $region88
        $region87: #{tpu_custom_call.1} parent=79 // pred_region
          %489 = dma.done [#allocation9], 512
        $region88: #{tpu_custom_call.1} parent=79 // pred_fallthru
          _
        %p490 = scmp.lt.s32.totalorder %s35, 1
        %s491 = scalar_select %p490, %s35, 1
        %s492 = smul.addr %s491, 2
        %s493 = smul.addr %s492, 8
        %s494 = scalar_lea.vmem %s0, %s493
        %p495 = pneg %p64
        %p496 = pneg %p61
        %p497 = pneg %p85
        %p498 = pneg %p82
        %p499 = pneg %p106
        %p500 = pneg %p103
        %p501 = pneg %p127
        %p502 = pneg %p124
        %p503 = pneg %p148
        %p504 = pneg %p145
        %p505 = pneg %p169
        %p506 = pneg %p166
        %p507 = pneg %p190
        %p508 = pneg %p187
        %p509 = pneg %p211
        %p510 = pneg %p208
        %p511 = pneg %p232
        %p512 = pneg %p229
        %p513 = pneg %p253
        %p514 = pneg %p250
        %p515 = pneg %p274
        %p516 = pneg %p271
        %p517 = pneg %p295
        %p518 = pneg %p292
        %p519 = pneg %p316
        %p520 = pneg %p313
        %p521 = pneg %p337
        %p522 = pneg %p334
        %p523 = pneg %p358
        %p524 = pneg %p355
        %p525 = pneg %p386
        %p526 = pneg %p383
        %s527 = sand.u32 %s373, 1
        %s528 = scalar_lea.sflag [#allocation7], %s527
        %s529 = sand.u32 %s373, 1
        %s530 = smul.addr %s529, 8
        %s531 = scalar_lea.vmem [#allocation10], %s530
        %p532 = scmp.lt.s32.totalorder %s35, 1
        %s533 = scalar_select %p532, %s35, 1
        %s534 = smul.addr %s533, 2
        %s535 = smul.addr %s534, 8
        %s536 = scalar_lea.vmem %s0, %s535
        %p537 = scmp.eq.s32.totalorder %s36, 0
        // Predicated region
        $region89: #{tpu_custom_call.1} parent=79 // pred_check
          %p538 = pneg %p537
        $region90: #{tpu_custom_call.1} parent=79 // pred_check_branch
          %540 = sbr.rel (%p538) target = $region92
        $region91: #{tpu_custom_call.1} parent=79 // pred_region
          loop: start=0, step=1, limit=2
          $region93: #{tpu_custom_call.1} parent=91 // loop_pre_header
            _
          $region94: #{tpu_custom_call.1} parent=91 // loop_header
            %s542 = sphi 0, %s546
            %p543 = scmp.ge.s32.totalorder %s542, 2
          $region95: #{tpu_custom_call.1} parent=91 // loop_header_branch
            %545 = sbr.rel (%p543) target = $region99
          $region96: #{tpu_custom_call.1} parent=91 // loop_body
            %s547 = smul.u32 %s542, 8
            %s548 = scalar_lea.vmem %s536, %s547
            %v549 = vld [vmem:[%s548] sm:$0xff]
            %v550 = vld [vmem:[%s7] sm:$0x1]
            %v551 = vld [vmem:[%s8] sm:$0x1]
            %vm552 = vcmask 261120
            %v553 = vsel %vm552, %v549, 0.0
            %554 = vadd.xlane.f32.xlu0 %v553
            %v555 = vpop.xlane.xlu0 %554
            %v556 = vrcp.pop 32.0
            %v557 = vmul.f32 %v555, %v556
            %v558 = vsub.f32 %v549, %v557
            %v559 = vmul.f32 %v558, %v558
            %v560 = vsel %vm552, %v559, 0.0
            %561 = vadd.xlane.f32.xlu0 %v560
            %v562 = vpop.xlane.xlu0 %561
            %v563 = vmul.f32 %v562, %v556
            %v564 = vadd.f32 %v563, 1e-06
            %v565 = vrsqrt.pop %v564
            %v566 = vmul.f32 %v564, %v565
            %vm567 = vcmp.eq.f32.partialorder %v564, inf
            %v568 = vsel %vm567, %v564, %v566
            %vm569 = vcmp.eq.f32.partialorder %v564, 0.0
            %v570 = vand.u32 %v564, 2147483648
            %v571 = vsel %vm569, %v570, %v568
            %v572 = vrcp.pop %v571
            %v573 = vmul.f32 %v558, %v572
            %v575 = vlaneseq
            %v576 = vshrl.u32 %v575, 7
            %v577 = vsub.s32 0, %v576
            %v578 = vrot.slane %v550, %v577
            %v580 = vmul.f32 %v573, %v578
            %v582 = vlaneseq
            %v583 = vshrl.u32 %v582, 7
            %v584 = vsub.s32 0, %v583
            %v585 = vrot.slane %v551, %v584
            %v587 = vadd.f32 %v580, %v585
            %v588 = vld [vmem:[%s3] sm:$0xff]
            %v589 = vld [vmem:[%s3 + $0x8] sm:$0xff]
            %v590 = vld [vmem:[%s3 + $0x10] sm:$0xff]
            %v591 = vld [vmem:[%s3 + $0x18] sm:$0xff]
            %v592 = vld [vmem:[%s4] sm:$0x1]
            %v594 = vlaneseq
            %v595 = vshrl.u32 %v594, 7
            %v596 = vsub.s32 0, %v595
            %v597 = vrot.slane %v592, %v596
            %v600 = vsel %vm552, %v587, 0
            %602 = vmatprep.subr.mxu0 0.0
            %603 = vmatpush1.msra.mxu0 %v588
            %604 = vmatprep.subr.mxu0 0.0
            %605 = vmatpush1.msra.mxu0 %v589
            %606 = vmatprep.subr.mxu0 0.0
            %607 = vmatpush1.msra.mxu0 %v590
            %608 = vmatprep.subr.mxu0 0.0
            %609 = vmatpush1.msra.mxu0 %v591
            %610 = vmatprep.subr.mxu0 0.0
            %611 = vmatpush1.msra.mxu0 0.0
            %612 = vmatprep.subr.mxu0 0.0
            %613 = vmatpush1.msra.mxu0 0.0
            %614 = vmatprep.subr.mxu0 0.0
            %615 = vmatpush1.msra.mxu0 0.0
            %616 = vmatprep.subr.mxu0 0.0
            %617 = vmatpush1.msra.mxu0 0.0
            %618 = vmatprep.subr.mxu0 0.0
            %619 = vmatpush1.msra.mxu0 0.0
            %620 = vmatprep.subr.mxu0 0.0
            %621 = vmatpush1.msra.mxu0 0.0
            %622 = vmatprep.subr.mxu0 0.0
            %623 = vmatpush1.msra.mxu0 0.0
            %624 = vmatprep.subr.mxu0 0.0
            %625 = vmatpush1.msra.mxu0 0.0
            %626 = vmatprep.subr.mxu0 0.0
            %627 = vmatpush1.msra.mxu0 0.0
            %628 = vmatprep.subr.mxu0 0.0
            %629 = vmatpush1.msra.mxu0 0.0
            %630 = vmatprep.subr.mxu0 0.0
            %631 = vmatpush1.msra.mxu0 0.0
            %632 = vmatprep.subr.mxu0 0.0
            %633 = vmatpush1.msra.mxu0 0.0
            %634 = vmatprep.subr.mxu0 0.0
            %635 = vmatpush1.msra.mxu0 0.0
            %636 = vmatprep.subr.mxu0 0.0
            %637 = vmatpush1.msra.mxu0 0.0
            %638 = vmatprep.subr.mxu0 0.0
            %639 = vmatpush1.msra.mxu0 0.0
            %640 = vmatprep.subr.mxu0 0.0
            %641 = vmatpush1.msra.mxu0 0.0
            %642 = vmatprep.subr.mxu0 0.0
            %643 = vmatpush1.msra.mxu0 0.0
            %644 = vmatprep.subr.mxu0 0.0
            %645 = vmatpush1.msra.mxu0 0.0
            %646 = vmatprep.subr.mxu0 0.0
            %647 = vmatpush1.msra.mxu0 0.0
            %648 = vmatprep.subr.mxu0 0.0
            %649 = vmatpush1.msra.mxu0 0.0
            %650 = vmatprep.subr.mxu0 0.0
            %651 = vmatpush1.msra.mxu0 0.0
            %652 = vmatprep.subr.mxu0 0.0
            %653 = vmatpush1.msra.mxu0 0.0
            %654 = vmatprep.subr.mxu0 0.0
            %655 = vmatpush1.msra.mxu0 0.0
            %656 = vmatprep.subr.mxu0 0.0
            %657 = vmatpush1.msra.mxu0 0.0
            %658 = vmatprep.subr.mxu0 0.0
            %659 = vmatpush1.msra.mxu0 0.0
            %660 = vmatprep.subr.mxu0 0.0
            %661 = vmatpush1.msra.mxu0 0.0
            %662 = vmatprep.subr.mxu0 0.0
            %663 = vmatpush1.msra.mxu0 0.0
            %664 = vmatprep.subr.mxu0 0.0
            %665 = vmatpush1.msra.mxu0 0.0
            %666 = vmatprep.mubr.f32.mxu0 0.0
            %667 = vmatmul.mubr.f32.gmra.mrb[0].mxu0 %v600
            %v668 = vpop.f32.mrb[0].mxu0
            %v669 = vadd.f32 %v597, %v668
            %v670 = vpop.f32.mrb[0].mxu0
            %671 = vdwg.mxu0
            %s672 = scalar_lea.vmem [#allocation2], %s547
            %673 = vst.msk [vmem:[%s672] sm:$0xff] %vm552, %v669
            %675 = vrot.lane.b32.xlu0 %v669, 96
            %v676 = vpop.permute.xlu0 %675
            %s678 = scalar_lea.vmem [#allocation3], %s547
            %679 = vst.msk [vmem:[%s678] sm:$0xff] %vm552, %v676
          $region97: #{tpu_custom_call.1} parent=91 // loop_footer
            %s546 = sadd.s32 1, %s542
          $region98: #{tpu_custom_call.1} parent=91 // loop_footer_branch
            %541 = sbr.rel target = $region94
          $region99: #{tpu_custom_call.1} parent=91 // loop_exit
            _
        $region92: #{tpu_custom_call.1} parent=79 // pred_fallthru
          _
        %s680 = smul.u32 %s36, 8
        %s681 = scalar_lea.vmem %s536, %s680
        %v682 = vld [vmem:[%s681] sm:$0xff]
        %v683 = vld [vmem:[%s7] sm:$0x1]
        %v684 = vld [vmem:[%s8] sm:$0x1]
        %vm685 = vcmask 261120
        %v686 = vsel %vm685, %v682, 0.0
        %687 = vadd.xlane.f32.xlu0 %v686
        %v688 = vpop.xlane.xlu0 %687
        %v689 = vrcp.pop 32.0
        %v690 = vmul.f32 %v688, %v689
        %v691 = vsub.f32 %v682, %v690
        %v692 = vmul.f32 %v691, %v691
        %v693 = vsel %vm685, %v692, 0.0
        %694 = vadd.xlane.f32.xlu0 %v693
        %v695 = vpop.xlane.xlu0 %694
        %v696 = vmul.f32 %v695, %v689
        %v697 = vadd.f32 %v696, 1e-06
        %v698 = vrsqrt.pop %v697
        %v699 = vmul.f32 %v697, %v698
        %vm700 = vcmp.eq.f32.partialorder %v697, inf
        %v701 = vsel %vm700, %v697, %v699
        %vm702 = vcmp.eq.f32.partialorder %v697, 0.0
        %v703 = vand.u32 %v697, 2147483648
        %v704 = vsel %vm702, %v703, %v701
        %v705 = vrcp.pop %v704
        %v706 = vmul.f32 %v691, %v705
        %v708 = vlaneseq
        %v709 = vshrl.u32 %v708, 7
        %v710 = vsub.s32 0, %v709
        %v711 = vrot.slane %v683, %v710
        %v713 = vmul.f32 %v706, %v711
        %v715 = vlaneseq
        %v716 = vshrl.u32 %v715, 7
        %v717 = vsub.s32 0, %v716
        %v718 = vrot.slane %v684, %v717
        %v720 = vadd.f32 %v713, %v718
        %v721 = vld [vmem:[%s1] sm:$0xff]
        %v722 = vld [vmem:[%s1 + $0x8] sm:$0xff]
        %v723 = vld [vmem:[%s1 + $0x10] sm:$0xff]
        %v724 = vld [vmem:[%s1 + $0x18] sm:$0xff]
        %v725 = vld [vmem:[%s2] sm:$0x1]
        %v727 = vlaneseq
        %v728 = vshrl.u32 %v727, 7
        %v729 = vsub.s32 0, %v728
        %v730 = vrot.slane %v725, %v729
        %v733 = vsel %vm685, %v720, 0
        %735 = vmatprep.subr.mxu0 0.0
        %736 = vmatpush1.msra.mxu0 %v721
        %737 = vmatprep.subr.mxu0 0.0
        %738 = vmatpush1.msra.mxu0 %v722
        %739 = vmatprep.subr.mxu0 0.0
        %740 = vmatpush1.msra.mxu0 %v723
        %741 = vmatprep.subr.mxu0 0.0
        %742 = vmatpush1.msra.mxu0 %v724
        %743 = vmatprep.subr.mxu0 0.0
        %744 = vmatpush1.msra.mxu0 0.0
        %745 = vmatprep.subr.mxu0 0.0
        %746 = vmatpush1.msra.mxu0 0.0
        %747 = vmatprep.subr.mxu0 0.0
        %748 = vmatpush1.msra.mxu0 0.0
        %749 = vmatprep.subr.mxu0 0.0
        %750 = vmatpush1.msra.mxu0 0.0
        %751 = vmatprep.subr.mxu0 0.0
        %752 = vmatpush1.msra.mxu0 0.0
        %753 = vmatprep.subr.mxu0 0.0
        %754 = vmatpush1.msra.mxu0 0.0
        %755 = vmatprep.subr.mxu0 0.0
        %756 = vmatpush1.msra.mxu0 0.0
        %757 = vmatprep.subr.mxu0 0.0
        %758 = vmatpush1.msra.mxu0 0.0
        %759 = vmatprep.subr.mxu0 0.0
        %760 = vmatpush1.msra.mxu0 0.0
        %761 = vmatprep.subr.mxu0 0.0
        %762 = vmatpush1.msra.mxu0 0.0
        %763 = vmatprep.subr.mxu0 0.0
        %764 = vmatpush1.msra.mxu0 0.0
        %765 = vmatprep.subr.mxu0 0.0
        %766 = vmatpush1.msra.mxu0 0.0
        %767 = vmatprep.subr.mxu0 0.0
        %768 = vmatpush1.msra.mxu0 0.0
        %769 = vmatprep.subr.mxu0 0.0
        %770 = vmatpush1.msra.mxu0 0.0
        %771 = vmatprep.subr.mxu0 0.0
        %772 = vmatpush1.msra.mxu0 0.0
        %773 = vmatprep.subr.mxu0 0.0
        %774 = vmatpush1.msra.mxu0 0.0
        %775 = vmatprep.subr.mxu0 0.0
        %776 = vmatpush1.msra.mxu0 0.0
        %777 = vmatprep.subr.mxu0 0.0
        %778 = vmatpush1.msra.mxu0 0.0
        %779 = vmatprep.subr.mxu0 0.0
        %780 = vmatpush1.msra.mxu0 0.0
        %781 = vmatprep.subr.mxu0 0.0
        %782 = vmatpush1.msra.mxu0 0.0
        %783 = vmatprep.subr.mxu0 0.0
        %784 = vmatpush1.msra.mxu0 0.0
        %785 = vmatprep.subr.mxu0 0.0
        %786 = vmatpush1.msra.mxu0 0.0
        %787 = vmatprep.subr.mxu0 0.0
        %788 = vmatpush1.msra.mxu0 0.0
        %789 = vmatprep.subr.mxu0 0.0
        %790 = vmatpush1.msra.mxu0 0.0
        %791 = vmatprep.subr.mxu0 0.0
        %792 = vmatpush1.msra.mxu0 0.0
        %793 = vmatprep.subr.mxu0 0.0
        %794 = vmatpush1.msra.mxu0 0.0
        %795 = vmatprep.subr.mxu0 0.0
        %796 = vmatpush1.msra.mxu0 0.0
        %797 = vmatprep.subr.mxu0 0.0
        %798 = vmatpush1.msra.mxu0 0.0
        %799 = vmatprep.mubr.f32.mxu0 0.0
        %800 = vmatmul.mubr.f32.gmra.mrb[0].mxu0 %v733
        %v801 = vpop.f32.mrb[0].mxu0
        %v802 = vadd.f32 %v730, %v801
        %v803 = vpop.f32.mrb[0].mxu0
        %804 = vdwg.mxu0
        %v805 = vld [vmem:[#allocation2] sm:$0xff]
        %v806 = vld [vmem:[#allocation2 + $0x8] sm:$0xff]
        %v807 = vld [vmem:[#allocation3] sm:$0xff]
        %v808 = vld [vmem:[#allocation3 + $0x8] sm:$0xff]
        %vm809 = vcmask 64512
        %v811 = vsel %vm809, %v802, 0
        %v814 = vsel %vm809, %v805, 0
        %v817 = vsel %vm809, %v806, 0
        %819 = vmatprep.subr.mxu0 0.0
        %820 = vmatpush1.xpose.msra.mxu0 %v814
        %821 = vmatprep.subr.mxu0 0.0
        %822 = vmatpush1.xpose.msra.mxu0 %v817
        %823 = vmatprep.subr.mxu0 0.0
        %824 = vmatpush1.xpose.msra.mxu0 0.0
        %825 = vmatprep.subr.mxu0 0.0
        %826 = vmatpush1.xpose.msra.mxu0 0.0
        %827 = vmatprep.subr.mxu0 0.0
        %828 = vmatpush1.xpose.msra.mxu0 0.0
        %829 = vmatprep.subr.mxu0 0.0
        %830 = vmatpush1.xpose.msra.mxu0 0.0
        %831 = vmatprep.subr.mxu0 0.0
        %832 = vmatpush1.xpose.msra.mxu0 0.0
        %833 = vmatprep.subr.mxu0 0.0
        %834 = vmatpush1.xpose.msra.mxu0 0.0
        %835 = vmatprep.subr.mxu0 0.0
        %836 = vmatpush1.xpose.msra.mxu0 0.0
        %837 = vmatprep.subr.mxu0 0.0
        %838 = vmatpush1.xpose.msra.mxu0 0.0
        %839 = vmatprep.subr.mxu0 0.0
        %840 = vmatpush1.xpose.msra.mxu0 0.0
        %841 = vmatprep.subr.mxu0 0.0
        %842 = vmatpush1.xpose.msra.mxu0 0.0
        %843 = vmatprep.subr.mxu0 0.0
        %844 = vmatpush1.xpose.msra.mxu0 0.0
        %845 = vmatprep.subr.mxu0 0.0
        %846 = vmatpush1.xpose.msra.mxu0 0.0
        %847 = vmatprep.subr.mxu0 0.0
        %848 = vmatpush1.xpose.msra.mxu0 0.0
        %849 = vmatprep.subr.mxu0 0.0
        %850 = vmatpush1.xpose.msra.mxu0 0.0
        %851 = vmatprep.subr.mxu0 0.0
        %852 = vmatpush1.xpose.msra.mxu0 0.0
        %853 = vmatprep.subr.mxu0 0.0
        %854 = vmatpush1.xpose.msra.mxu0 0.0
        %855 = vmatprep.subr.mxu0 0.0
        %856 = vmatpush1.xpose.msra.mxu0 0.0
        %857 = vmatprep.subr.mxu0 0.0
        %858 = vmatpush1.xpose.msra.mxu0 0.0
        %859 = vmatprep.subr.mxu0 0.0
        %860 = vmatpush1.xpose.msra.mxu0 0.0
        %861 = vmatprep.subr.mxu0 0.0
        %862 = vmatpush1.xpose.msra.mxu0 0.0
        %863 = vmatprep.subr.mxu0 0.0
        %864 = vmatpush1.xpose.msra.mxu0 0.0
        %865 = vmatprep.subr.mxu0 0.0
        %866 = vmatpush1.xpose.msra.mxu0 0.0
        %867 = vmatprep.subr.mxu0 0.0
        %868 = vmatpush1.xpose.msra.mxu0 0.0
        %869 = vmatprep.subr.mxu0 0.0
        %870 = vmatpush1.xpose.msra.mxu0 0.0
        %871 = vmatprep.subr.mxu0 0.0
        %872 = vmatpush1.xpose.msra.mxu0 0.0
        %873 = vmatprep.subr.mxu0 0.0
        %874 = vmatpush1.xpose.msra.mxu0 0.0
        %875 = vmatprep.subr.mxu0 0.0
        %876 = vmatpush1.xpose.msra.mxu0 0.0
        %877 = vmatprep.subr.mxu0 0.0
        %878 = vmatpush1.xpose.msra.mxu0 0.0
        %879 = vmatprep.subr.mxu0 0.0
        %880 = vmatpush1.xpose.msra.mxu0 0.0
        %881 = vmatprep.subr.mxu0 0.0
        %882 = vmatpush1.xpose.msra.mxu0 0.0
        %883 = vmatprep.mubr.f32.mxu0 0.0
        %884 = vmatmul.mubr.f32.gmra.mrb[0].mxu0 %v811
        %v885 = vpop.f32.mrb[0].mxu0
        %v886 = vadd.f32 0.0, %v885
        %v887 = vpop.f32.mrb[0].mxu0
        %888 = vdwg.mxu0
        %v889 = vmul.f32 %v886, 0.35355338
        %vm890 = vcmask 130048
        %v891 = vsel %vm890, %v889, -inf
        %892 = vmax.xlane.f32.xlu0 %v891
        %v893 = vpop.xlane.xlu0 %892
        %v894 = vsub.f32 %v889, %v893
        %v895 = vmul.f32 %v894, 1.442695
        %v896 = vpow.pop %v895
        %v897 = vsel %vm890, %v896, 0.0
        %898 = vadd.xlane.f32.xlu0 %v897
        %v899 = vpop.xlane.xlu0 %898
        %v901 = vsel %vm890, %v896, 0
        %903 = vmatprep.subr.mxu0 0.0
        %904 = vmatpush1.msra.mxu0 %v807
        %905 = vmatprep.subr.mxu0 0.0
        %906 = vmatpush1.msra.mxu0 %v808
        %907 = vmatprep.subr.mxu0 0.0
        %908 = vmatpush1.msra.mxu0 0.0
        %909 = vmatprep.subr.mxu0 0.0
        %910 = vmatpush1.msra.mxu0 0.0
        %911 = vmatprep.subr.mxu0 0.0
        %912 = vmatpush1.msra.mxu0 0.0
        %913 = vmatprep.subr.mxu0 0.0
        %914 = vmatpush1.msra.mxu0 0.0
        %915 = vmatprep.subr.mxu0 0.0
        %916 = vmatpush1.msra.mxu0 0.0
        %917 = vmatprep.subr.mxu0 0.0
        %918 = vmatpush1.msra.mxu0 0.0
        %919 = vmatprep.subr.mxu0 0.0
        %920 = vmatpush1.msra.mxu0 0.0
        %921 = vmatprep.subr.mxu0 0.0
        %922 = vmatpush1.msra.mxu0 0.0
        %923 = vmatprep.subr.mxu0 0.0
        %924 = vmatpush1.msra.mxu0 0.0
        %925 = vmatprep.subr.mxu0 0.0
        %926 = vmatpush1.msra.mxu0 0.0
        %927 = vmatprep.subr.mxu0 0.0
        %928 = vmatpush1.msra.mxu0 0.0
        %929 = vmatprep.subr.mxu0 0.0
        %930 = vmatpush1.msra.mxu0 0.0
        %931 = vmatprep.subr.mxu0 0.0
        %932 = vmatpush1.msra.mxu0 0.0
        %933 = vmatprep.subr.mxu0 0.0
        %934 = vmatpush1.msra.mxu0 0.0
        %935 = vmatprep.subr.mxu0 0.0
        %936 = vmatpush1.msra.mxu0 0.0
        %937 = vmatprep.subr.mxu0 0.0
        %938 = vmatpush1.msra.mxu0 0.0
        %939 = vmatprep.subr.mxu0 0.0
        %940 = vmatpush1.msra.mxu0 0.0
        %941 = vmatprep.subr.mxu0 0.0
        %942 = vmatpush1.msra.mxu0 0.0
        %943 = vmatprep.subr.mxu0 0.0
        %944 = vmatpush1.msra.mxu0 0.0
        %945 = vmatprep.subr.mxu0 0.0
        %946 = vmatpush1.msra.mxu0 0.0
        %947 = vmatprep.subr.mxu0 0.0
        %948 = vmatpush1.msra.mxu0 0.0
        %949 = vmatprep.subr.mxu0 0.0
        %950 = vmatpush1.msra.mxu0 0.0
        %951 = vmatprep.subr.mxu0 0.0
        %952 = vmatpush1.msra.mxu0 0.0
        %953 = vmatprep.subr.mxu0 0.0
        %954 = vmatpush1.msra.mxu0 0.0
        %955 = vmatprep.subr.mxu0 0.0
        %956 = vmatpush1.msra.mxu0 0.0
        %957 = vmatprep.subr.mxu0 0.0
        %958 = vmatpush1.msra.mxu0 0.0
        %959 = vmatprep.subr.mxu0 0.0
        %960 = vmatpush1.msra.mxu0 0.0
        %961 = vmatprep.subr.mxu0 0.0
        %962 = vmatpush1.msra.mxu0 0.0
        %963 = vmatprep.subr.mxu0 0.0
        %964 = vmatpush1.msra.mxu0 0.0
        %965 = vmatprep.subr.mxu0 0.0
        %966 = vmatpush1.msra.mxu0 0.0
        %967 = vmatprep.mubr.f32.mxu0 0.0
        %968 = vmatmul.mubr.f32.gmra.mrb[0].mxu0 %v901
        %v969 = vpop.f32.mrb[0].mxu0
        %v970 = vadd.f32 0.0, %v969
        %v971 = vpop.f32.mrb[0].mxu0
        %972 = vdwg.mxu0
        %v973 = vrcp.pop %v899
        %v974 = vmul.f32 %v970, %v973
        %975 = vst.msk [vmem:[#allocation4] sm:$0xff] %vm809, %v974
        %v976 = vld [vmem:[#allocation2] sm:$0xff]
        %v977 = vld [vmem:[#allocation2 + $0x8] sm:$0xff]
        %v978 = vld [vmem:[#allocation3] sm:$0xff]
        %v979 = vld [vmem:[#allocation3 + $0x8] sm:$0xff]
        %980 = vrot.lane.b32.xlu0 %v802, 120
        %v981 = vpop.permute.xlu0 %980
        %984 = vrot.lane.b32.xlu0 %v976, 120
        %v985 = vpop.permute.xlu0 %984
        %986 = vrot.lane.b32.xlu0 %v977, 120
        %v987 = vpop.permute.xlu0 %986
        %v988 = vsel %vm809, %v981, 0
        %v990 = vsel %vm809, %v985, 0
        %v992 = vsel %vm809, %v987, 0
        %994 = vmatprep.subr.mxu0 0.0
        %995 = vmatpush1.xpose.msra.mxu0 %v990
        %996 = vmatprep.subr.mxu0 0.0
        %997 = vmatpush1.xpose.msra.mxu0 %v992
        %998 = vmatprep.subr.mxu0 0.0
        %999 = vmatpush1.xpose.msra.mxu0 0.0
        %1000 = vmatprep.subr.mxu0 0.0
        %1001 = vmatpush1.xpose.msra.mxu0 0.0
        %1002 = vmatprep.subr.mxu0 0.0
        %1003 = vmatpush1.xpose.msra.mxu0 0.0
        %1004 = vmatprep.subr.mxu0 0.0
        %1005 = vmatpush1.xpose.msra.mxu0 0.0
        %1006 = vmatprep.subr.mxu0 0.0
        %1007 = vmatpush1.xpose.msra.mxu0 0.0
        %1008 = vmatprep.subr.mxu0 0.0
        %1009 = vmatpush1.xpose.msra.mxu0 0.0
        %1010 = vmatprep.subr.mxu0 0.0
        %1011 = vmatpush1.xpose.msra.mxu0 0.0
        %1012 = vmatprep.subr.mxu0 0.0
        %1013 = vmatpush1.xpose.msra.mxu0 0.0
        %1014 = vmatprep.subr.mxu0 0.0
        %1015 = vmatpush1.xpose.msra.mxu0 0.0
        %1016 = vmatprep.subr.mxu0 0.0
        %1017 = vmatpush1.xpose.msra.mxu0 0.0
        %1018 = vmatprep.subr.mxu0 0.0
        %1019 = vmatpush1.xpose.msra.mxu0 0.0
        %1020 = vmatprep.subr.mxu0 0.0
        %1021 = vmatpush1.xpose.msra.mxu0 0.0
        %1022 = vmatprep.subr.mxu0 0.0
        %1023 = vmatpush1.xpose.msra.mxu0 0.0
        %1024 = vmatprep.subr.mxu0 0.0
        %1025 = vmatpush1.xpose.msra.mxu0 0.0
        %1026 = vmatprep.subr.mxu0 0.0
        %1027 = vmatpush1.xpose.msra.mxu0 0.0
        %1028 = vmatprep.subr.mxu0 0.0
        %1029 = vmatpush1.xpose.msra.mxu0 0.0
        %1030 = vmatprep.subr.mxu0 0.0
        %1031 = vmatpush1.xpose.msra.mxu0 0.0
        %1032 = vmatprep.subr.mxu0 0.0
        %1033 = vmatpush1.xpose.msra.mxu0 0.0
        %1034 = vmatprep.subr.mxu0 0.0
        %1035 = vmatpush1.xpose.msra.mxu0 0.0
        %1036 = vmatprep.subr.mxu0 0.0
        %1037 = vmatpush1.xpose.msra.mxu0 0.0
        %1038 = vmatprep.subr.mxu0 0.0
        %1039 = vmatpush1.xpose.msra.mxu0 0.0
        %1040 = vmatprep.subr.mxu0 0.0
        %1041 = vmatpush1.xpose.msra.mxu0 0.0
        %1042 = vmatprep.subr.mxu0 0.0
        %1043 = vmatpush1.xpose.msra.mxu0 0.0
        %1044 = vmatprep.subr.mxu0 0.0
        %1045 = vmatpush1.xpose.msra.mxu0 0.0
        %1046 = vmatprep.subr.mxu0 0.0
        %1047 = vmatpush1.xpose.msra.mxu0 0.0
        %1048 = vmatprep.subr.mxu0 0.0
        %1049 = vmatpush1.xpose.msra.mxu0 0.0
        %1050 = vmatprep.subr.mxu0 0.0
        %1051 = vmatpush1.xpose.msra.mxu0 0.0
        %1052 = vmatprep.subr.mxu0 0.0
        %1053 = vmatpush1.xpose.msra.mxu0 0.0
        %1054 = vmatprep.subr.mxu0 0.0
        %1055 = vmatpush1.xpose.msra.mxu0 0.0
        %1056 = vmatprep.subr.mxu0 0.0
        %1057 = vmatpush1.xpose.msra.mxu0 0.0
        %1058 = vmatprep.mubr.f32.mxu0 0.0
        %1059 = vmatmul.mubr.f32.gmra.mrb[0].mxu0 %v988
        %v1060 = vpop.f32.mrb[0].mxu0
        %v1061 = vadd.f32 0.0, %v1060
        %v1062 = vpop.f32.mrb[0].mxu0
        %1063 = vdwg.mxu0
        %v1064 = vmul.f32 %v1061, 0.35355338
        %v1065 = vsel %vm890, %v1064, -inf
        %1066 = vmax.xlane.f32.xlu0 %v1065
        %v1067 = vpop.xlane.xlu0 %1066
        %v1068 = vsub.f32 %v1064, %v1067
        %v1069 = vmul.f32 %v1068, 1.442695
        %v1070 = vpow.pop %v1069
        %v1071 = vsel %vm890, %v1070, 0.0
        %1072 = vadd.xlane.f32.xlu0 %v1071
        %v1073 = vpop.xlane.xlu0 %1072
        %1076 = vrot.lane.b32.xlu0 %v978, 120
        %v1077 = vpop.permute.xlu0 %1076
        %1078 = vrot.lane.b32.xlu0 %v979, 120
        %v1079 = vpop.permute.xlu0 %1078
        %v1083 = vsel %vm890, %v1070, 0
        %1085 = vmatprep.subr.mxu0 0.0
        %1086 = vmatpush1.msra.mxu0 %v1077
        %1087 = vmatprep.subr.mxu0 0.0
        %1088 = vmatpush1.msra.mxu0 %v1079
        %1089 = vmatprep.subr.mxu0 0.0
        %1090 = vmatpush1.msra.mxu0 0.0
        %1091 = vmatprep.subr.mxu0 0.0
        %1092 = vmatpush1.msra.mxu0 0.0
        %1093 = vmatprep.subr.mxu0 0.0
        %1094 = vmatpush1.msra.mxu0 0.0
        %1095 = vmatprep.subr.mxu0 0.0
        %1096 = vmatpush1.msra.mxu0 0.0
        %1097 = vmatprep.subr.mxu0 0.0
        %1098 = vmatpush1.msra.mxu0 0.0
        %1099 = vmatprep.subr.mxu0 0.0
        %1100 = vmatpush1.msra.mxu0 0.0
        %1101 = vmatprep.subr.mxu0 0.0
        %1102 = vmatpush1.msra.mxu0 0.0
        %1103 = vmatprep.subr.mxu0 0.0
        %1104 = vmatpush1.msra.mxu0 0.0
        %1105 = vmatprep.subr.mxu0 0.0
        %1106 = vmatpush1.msra.mxu0 0.0
        %1107 = vmatprep.subr.mxu0 0.0
        %1108 = vmatpush1.msra.mxu0 0.0
        %1109 = vmatprep.subr.mxu0 0.0
        %1110 = vmatpush1.msra.mxu0 0.0
        %1111 = vmatprep.subr.mxu0 0.0
        %1112 = vmatpush1.msra.mxu0 0.0
        %1113 = vmatprep.subr.mxu0 0.0
        %1114 = vmatpush1.msra.mxu0 0.0
        %1115 = vmatprep.subr.mxu0 0.0
        %1116 = vmatpush1.msra.mxu0 0.0
        %1117 = vmatprep.subr.mxu0 0.0
        %1118 = vmatpush1.msra.mxu0 0.0
        %1119 = vmatprep.subr.mxu0 0.0
        %1120 = vmatpush1.msra.mxu0 0.0
        %1121 = vmatprep.subr.mxu0 0.0
        %1122 = vmatpush1.msra.mxu0 0.0
        %1123 = vmatprep.subr.mxu0 0.0
        %1124 = vmatpush1.msra.mxu0 0.0
        %1125 = vmatprep.subr.mxu0 0.0
        %1126 = vmatpush1.msra.mxu0 0.0
        %1127 = vmatprep.subr.mxu0 0.0
        %1128 = vmatpush1.msra.mxu0 0.0
        %1129 = vmatprep.subr.mxu0 0.0
        %1130 = vmatpush1.msra.mxu0 0.0
        %1131 = vmatprep.subr.mxu0 0.0
        %1132 = vmatpush1.msra.mxu0 0.0
        %1133 = vmatprep.subr.mxu0 0.0
        %1134 = vmatpush1.msra.mxu0 0.0
        %1135 = vmatprep.subr.mxu0 0.0
        %1136 = vmatpush1.msra.mxu0 0.0
        %1137 = vmatprep.subr.mxu0 0.0
        %1138 = vmatpush1.msra.mxu0 0.0
        %1139 = vmatprep.subr.mxu0 0.0
        %1140 = vmatpush1.msra.mxu0 0.0
        %1141 = vmatprep.subr.mxu0 0.0
        %1142 = vmatpush1.msra.mxu0 0.0
        %1143 = vmatprep.subr.mxu0 0.0
        %1144 = vmatpush1.msra.mxu0 0.0
        %1145 = vmatprep.subr.mxu0 0.0
        %1146 = vmatpush1.msra.mxu0 0.0
        %1147 = vmatprep.subr.mxu0 0.0
        %1148 = vmatpush1.msra.mxu0 0.0
        %1149 = vmatprep.mubr.f32.mxu0 0.0
        %1150 = vmatmul.mubr.f32.gmra.mrb[0].mxu0 %v1083
        %v1151 = vpop.f32.mrb[0].mxu0
        %v1152 = vadd.f32 0.0, %v1151
        %v1153 = vpop.f32.mrb[0].mxu0
        %1154 = vdwg.mxu0
        %v1155 = vrcp.pop %v1073
        %v1156 = vmul.f32 %v1152, %v1155
        %1158 = vrot.lane.b32.xlu0 %v1156, 8
        %v1159 = vpop.permute.xlu0 %1158
        %vm1161 = vcmask 130112
        %1162 = vst.msk [vmem:[#allocation4] sm:$0xff] %vm1161, %v1159
        %v1163 = vld [vmem:[#allocation2] sm:$0xff]
        %v1164 = vld [vmem:[#allocation2 + $0x8] sm:$0xff]
        %v1165 = vld [vmem:[#allocation3] sm:$0xff]
        %v1166 = vld [vmem:[#allocation3 + $0x8] sm:$0xff]
        %1167 = vrot.lane.b32.xlu0 %v802, 112
        %v1168 = vpop.permute.xlu0 %1167
        %1171 = vrot.lane.b32.xlu0 %v1163, 112
        %v1172 = vpop.permute.xlu0 %1171
        %1173 = vrot.lane.b32.xlu0 %v1164, 112
        %v1174 = vpop.permute.xlu0 %1173
        %v1175 = vsel %vm809, %v1168, 0
        %v1177 = vsel %vm809, %v1172, 0
        %v1179 = vsel %vm809, %v1174, 0
        %1181 = vmatprep.subr.mxu0 0.0
        %1182 = vmatpush1.xpose.msra.mxu0 %v1177
        %1183 = vmatprep.subr.mxu0 0.0
        %1184 = vmatpush1.xpose.msra.mxu0 %v1179
        %1185 = vmatprep.subr.mxu0 0.0
        %1186 = vmatpush1.xpose.msra.mxu0 0.0
        %1187 = vmatprep.subr.mxu0 0.0
        %1188 = vmatpush1.xpose.msra.mxu0 0.0
        %1189 = vmatprep.subr.mxu0 0.0
        %1190 = vmatpush1.xpose.msra.mxu0 0.0
        %1191 = vmatprep.subr.mxu0 0.0
        %1192 = vmatpush1.xpose.msra.mxu0 0.0
        %1193 = vmatprep.subr.mxu0 0.0
        %1194 = vmatpush1.xpose.msra.mxu0 0.0
        %1195 = vmatprep.subr.mxu0 0.0
        %1196 = vmatpush1.xpose.msra.mxu0 0.0
        %1197 = vmatprep.subr.mxu0 0.0
        %1198 = vmatpush1.xpose.msra.mxu0 0.0
        %1199 = vmatprep.subr.mxu0 0.0
        %1200 = vmatpush1.xpose.msra.mxu0 0.0
        %1201 = vmatprep.subr.mxu0 0.0
        %1202 = vmatpush1.xpose.msra.mxu0 0.0
        %1203 = vmatprep.subr.mxu0 0.0
        %1204 = vmatpush1.xpose.msra.mxu0 0.0
        %1205 = vmatprep.subr.mxu0 0.0
        %1206 = vmatpush1.xpose.msra.mxu0 0.0
        %1207 = vmatprep.subr.mxu0 0.0
        %1208 = vmatpush1.xpose.msra.mxu0 0.0
        %1209 = vmatprep.subr.mxu0 0.0
        %1210 = vmatpush1.xpose.msra.mxu0 0.0
        %1211 = vmatprep.subr.mxu0 0.0
        %1212 = vmatpush1.xpose.msra.mxu0 0.0
        %1213 = vmatprep.subr.mxu0 0.0
        %1214 = vmatpush1.xpose.msra.mxu0 0.0
        %1215 = vmatprep.subr.mxu0 0.0
        %1216 = vmatpush1.xpose.msra.mxu0 0.0
        %1217 = vmatprep.subr.mxu0 0.0
        %1218 = vmatpush1.xpose.msra.mxu0 0.0
        %1219 = vmatprep.subr.mxu0 0.0
        %1220 = vmatpush1.xpose.msra.mxu0 0.0
        %1221 = vmatprep.subr.mxu0 0.0
        %1222 = vmatpush1.xpose.msra.mxu0 0.0
        %1223 = vmatprep.subr.mxu0 0.0
        %1224 = vmatpush1.xpose.msra.mxu0 0.0
        %1225 = vmatprep.subr.mxu0 0.0
        %1226 = vmatpush1.xpose.msra.mxu0 0.0
        %1227 = vmatprep.subr.mxu0 0.0
        %1228 = vmatpush1.xpose.msra.mxu0 0.0
        %1229 = vmatprep.subr.mxu0 0.0
        %1230 = vmatpush1.xpose.msra.mxu0 0.0
        %1231 = vmatprep.subr.mxu0 0.0
        %1232 = vmatpush1.xpose.msra.mxu0 0.0
        %1233 = vmatprep.subr.mxu0 0.0
        %1234 = vmatpush1.xpose.msra.mxu0 0.0
        %1235 = vmatprep.subr.mxu0 0.0
        %1236 = vmatpush1.xpose.msra.mxu0 0.0
        %1237 = vmatprep.subr.mxu0 0.0
        %1238 = vmatpush1.xpose.msra.mxu0 0.0
        %1239 = vmatprep.subr.mxu0 0.0
        %1240 = vmatpush1.xpose.msra.mxu0 0.0
        %1241 = vmatprep.subr.mxu0 0.0
        %1242 = vmatpush1.xpose.msra.mxu0 0.0
        %1243 = vmatprep.subr.mxu0 0.0
        %1244 = vmatpush1.xpose.msra.mxu0 0.0
        %1245 = vmatprep.mubr.f32.mxu0 0.0
        %1246 = vmatmul.mubr.f32.gmra.mrb[0].mxu0 %v1175
        %v1247 = vpop.f32.mrb[0].mxu0
        %v1248 = vadd.f32 0.0, %v1247
        %v1249 = vpop.f32.mrb[0].mxu0
        %1250 = vdwg.mxu0
        %v1251 = vmul.f32 %v1248, 0.35355338
        %v1252 = vsel %vm890, %v1251, -inf
        %1253 = vmax.xlane.f32.xlu0 %v1252
        %v1254 = vpop.xlane.xlu0 %1253
        %v1255 = vsub.f32 %v1251, %v1254
        %v1256 = vmul.f32 %v1255, 1.442695
        %v1257 = vpow.pop %v1256
        %v1258 = vsel %vm890, %v1257, 0.0
        %1259 = vadd.xlane.f32.xlu0 %v1258
        %v1260 = vpop.xlane.xlu0 %1259
        %1263 = vrot.lane.b32.xlu0 %v1165, 112
        %v1264 = vpop.permute.xlu0 %1263
        %1265 = vrot.lane.b32.xlu0 %v1166, 112
        %v1266 = vpop.permute.xlu0 %1265
        %v1270 = vsel %vm890, %v1257, 0
        %1272 = vmatprep.subr.mxu0 0.0
        %1273 = vmatpush1.msra.mxu0 %v1264
        %1274 = vmatprep.subr.mxu0 0.0
        %1275 = vmatpush1.msra.mxu0 %v1266
        %1276 = vmatprep.subr.mxu0 0.0
        %1277 = vmatpush1.msra.mxu0 0.0
        %1278 = vmatprep.subr.mxu0 0.0
        %1279 = vmatpush1.msra.mxu0 0.0
        %1280 = vmatprep.subr.mxu0 0.0
        %1281 = vmatpush1.msra.mxu0 0.0
        %1282 = vmatprep.subr.mxu0 0.0
        %1283 = vmatpush1.msra.mxu0 0.0
        %1284 = vmatprep.subr.mxu0 0.0
        %1285 = vmatpush1.msra.mxu0 0.0
        %1286 = vmatprep.subr.mxu0 0.0
        %1287 = vmatpush1.msra.mxu0 0.0
        %1288 = vmatprep.subr.mxu0 0.0
        %1289 = vmatpush1.msra.mxu0 0.0
        %1290 = vmatprep.subr.mxu0 0.0
        %1291 = vmatpush1.msra.mxu0 0.0
        %1292 = vmatprep.subr.mxu0 0.0
        %1293 = vmatpush1.msra.mxu0 0.0
        %1294 = vmatprep.subr.mxu0 0.0
        %1295 = vmatpush1.msra.mxu0 0.0
        %1296 = vmatprep.subr.mxu0 0.0
        %1297 = vmatpush1.msra.mxu0 0.0
        %1298 = vmatprep.subr.mxu0 0.0
        %1299 = vmatpush1.msra.mxu0 0.0
        %1300 = vmatprep.subr.mxu0 0.0
        %1301 = vmatpush1.msra.mxu0 0.0
        %1302 = vmatprep.subr.mxu0 0.0
        %1303 = vmatpush1.msra.mxu0 0.0
        %1304 = vmatprep.subr.mxu0 0.0
        %1305 = vmatpush1.msra.mxu0 0.0
        %1306 = vmatprep.subr.mxu0 0.0
        %1307 = vmatpush1.msra.mxu0 0.0
        %1308 = vmatprep.subr.mxu0 0.0
        %1309 = vmatpush1.msra.mxu0 0.0
        %1310 = vmatprep.subr.mxu0 0.0
        %1311 = vmatpush1.msra.mxu0 0.0
        %1312 = vmatprep.subr.mxu0 0.0
        %1313 = vmatpush1.msra.mxu0 0.0
        %1314 = vmatprep.subr.mxu0 0.0
        %1315 = vmatpush1.msra.mxu0 0.0
        %1316 = vmatprep.subr.mxu0 0.0
        %1317 = vmatpush1.msra.mxu0 0.0
        %1318 = vmatprep.subr.mxu0 0.0
        %1319 = vmatpush1.msra.mxu0 0.0
        %1320 = vmatprep.subr.mxu0 0.0
        %1321 = vmatpush1.msra.mxu0 0.0
        %1322 = vmatprep.subr.mxu0 0.0
        %1323 = vmatpush1.msra.mxu0 0.0
        %1324 = vmatprep.subr.mxu0 0.0
        %1325 = vmatpush1.msra.mxu0 0.0
        %1326 = vmatprep.subr.mxu0 0.0
        %1327 = vmatpush1.msra.mxu0 0.0
        %1328 = vmatprep.subr.mxu0 0.0
        %1329 = vmatpush1.msra.mxu0 0.0
        %1330 = vmatprep.subr.mxu0 0.0
        %1331 = vmatpush1.msra.mxu0 0.0
        %1332 = vmatprep.subr.mxu0 0.0
        %1333 = vmatpush1.msra.mxu0 0.0
        %1334 = vmatprep.subr.mxu0 0.0
        %1335 = vmatpush1.msra.mxu0 0.0
        %1336 = vmatprep.mubr.f32.mxu0 0.0
        %1337 = vmatmul.mubr.f32.gmra.mrb[0].mxu0 %v1270
        %v1338 = vpop.f32.mrb[0].mxu0
        %v1339 = vadd.f32 0.0, %v1338
        %v1340 = vpop.f32.mrb[0].mxu0
        %1341 = vdwg.mxu0
        %v1342 = vrcp.pop %v1260
        %v1343 = vmul.f32 %v1339, %v1342
        %1345 = vrot.lane.b32.xlu0 %v1343, 16
        %v1346 = vpop.permute.xlu0 %1345
        %vm1348 = vcmask 195712
        %1349 = vst.msk [vmem:[#allocation4] sm:$0xff] %vm1348, %v1346
        %v1350 = vld [vmem:[#allocation2] sm:$0xff]
        %v1351 = vld [vmem:[#allocation2 + $0x8] sm:$0xff]
        %v1352 = vld [vmem:[#allocation3] sm:$0xff]
        %v1353 = vld [vmem:[#allocation3 + $0x8] sm:$0xff]
        %1354 = vrot.lane.b32.xlu0 %v802, 104
        %v1355 = vpop.permute.xlu0 %1354
        %1358 = vrot.lane.b32.xlu0 %v1350, 104
        %v1359 = vpop.permute.xlu0 %1358
        %1360 = vrot.lane.b32.xlu0 %v1351, 104
        %v1361 = vpop.permute.xlu0 %1360
        %v1362 = vsel %vm809, %v1355, 0
        %v1364 = vsel %vm809, %v1359, 0
        %v1366 = vsel %vm809, %v1361, 0
        %1368 = vmatprep.subr.mxu0 0.0
        %1369 = vmatpush1.xpose.msra.mxu0 %v1364
        %1370 = vmatprep.subr.mxu0 0.0
        %1371 = vmatpush1.xpose.msra.mxu0 %v1366
        %1372 = vmatprep.subr.mxu0 0.0
        %1373 = vmatpush1.xpose.msra.mxu0 0.0
        %1374 = vmatprep.subr.mxu0 0.0
        %1375 = vmatpush1.xpose.msra.mxu0 0.0
        %1376 = vmatprep.subr.mxu0 0.0
        %1377 = vmatpush1.xpose.msra.mxu0 0.0
        %1378 = vmatprep.subr.mxu0 0.0
        %1379 = vmatpush1.xpose.msra.mxu0 0.0
        %1380 = vmatprep.subr.mxu0 0.0
        %1381 = vmatpush1.xpose.msra.mxu0 0.0
        %1382 = vmatprep.subr.mxu0 0.0
        %1383 = vmatpush1.xpose.msra.mxu0 0.0
        %1384 = vmatprep.subr.mxu0 0.0
        %1385 = vmatpush1.xpose.msra.mxu0 0.0
        %1386 = vmatprep.subr.mxu0 0.0
        %1387 = vmatpush1.xpose.msra.mxu0 0.0
        %1388 = vmatprep.subr.mxu0 0.0
        %1389 = vmatpush1.xpose.msra.mxu0 0.0
        %1390 = vmatprep.subr.mxu0 0.0
        %1391 = vmatpush1.xpose.msra.mxu0 0.0
        %1392 = vmatprep.subr.mxu0 0.0
        %1393 = vmatpush1.xpose.msra.mxu0 0.0
        %1394 = vmatprep.subr.mxu0 0.0
        %1395 = vmatpush1.xpose.msra.mxu0 0.0
        %1396 = vmatprep.subr.mxu0 0.0
        %1397 = vmatpush1.xpose.msra.mxu0 0.0
        %1398 = vmatprep.subr.mxu0 0.0
        %1399 = vmatpush1.xpose.msra.mxu0 0.0
        %1400 = vmatprep.subr.mxu0 0.0
        %1401 = vmatpush1.xpose.msra.mxu0 0.0
        %1402 = vmatprep.subr.mxu0 0.0
        %1403 = vmatpush1.xpose.msra.mxu0 0.0
        %1404 = vmatprep.subr.mxu0 0.0
        %1405 = vmatpush1.xpose.msra.mxu0 0.0
        %1406 = vmatprep.subr.mxu0 0.0
        %1407 = vmatpush1.xpose.msra.mxu0 0.0
        %1408 = vmatprep.subr.mxu0 0.0
        %1409 = vmatpush1.xpose.msra.mxu0 0.0
        %1410 = vmatprep.subr.mxu0 0.0
        %1411 = vmatpush1.xpose.msra.mxu0 0.0
        %1412 = vmatprep.subr.mxu0 0.0
        %1413 = vmatpush1.xpose.msra.mxu0 0.0
        %1414 = vmatprep.subr.mxu0 0.0
        %1415 = vmatpush1.xpose.msra.mxu0 0.0
        %1416 = vmatprep.subr.mxu0 0.0
        %1417 = vmatpush1.xpose.msra.mxu0 0.0
        %1418 = vmatprep.subr.mxu0 0.0
        %1419 = vmatpush1.xpose.msra.mxu0 0.0
        %1420 = vmatprep.subr.mxu0 0.0
        %1421 = vmatpush1.xpose.msra.mxu0 0.0
        %1422 = vmatprep.subr.mxu0 0.0
        %1423 = vmatpush1.xpose.msra.mxu0 0.0
        %1424 = vmatprep.subr.mxu0 0.0
        %1425 = vmatpush1.xpose.msra.mxu0 0.0
        %1426 = vmatprep.subr.mxu0 0.0
        %1427 = vmatpush1.xpose.msra.mxu0 0.0
        %1428 = vmatprep.subr.mxu0 0.0
        %1429 = vmatpush1.xpose.msra.mxu0 0.0
        %1430 = vmatprep.subr.mxu0 0.0
        %1431 = vmatpush1.xpose.msra.mxu0 0.0
        %1432 = vmatprep.mubr.f32.mxu0 0.0
        %1433 = vmatmul.mubr.f32.gmra.mrb[0].mxu0 %v1362
        %v1434 = vpop.f32.mrb[0].mxu0
        %v1435 = vadd.f32 0.0, %v1434
        %v1436 = vpop.f32.mrb[0].mxu0
        %1437 = vdwg.mxu0
        %v1438 = vmul.f32 %v1435, 0.35355338
        %v1439 = vsel %vm890, %v1438, -inf
        %1440 = vmax.xlane.f32.xlu0 %v1439
        %v1441 = vpop.xlane.xlu0 %1440
        %v1442 = vsub.f32 %v1438, %v1441
        %v1443 = vmul.f32 %v1442, 1.442695
        %v1444 = vpow.pop %v1443
        %v1445 = vsel %vm890, %v1444, 0.0
        %1446 = vadd.xlane.f32.xlu0 %v1445
        %v1447 = vpop.xlane.xlu0 %1446
        %1450 = vrot.lane.b32.xlu0 %v1352, 104
        %v1451 = vpop.permute.xlu0 %1450
        %1452 = vrot.lane.b32.xlu0 %v1353, 104
        %v1453 = vpop.permute.xlu0 %1452
        %v1457 = vsel %vm890, %v1444, 0
        %1459 = vmatprep.subr.mxu0 0.0
        %1460 = vmatpush1.msra.mxu0 %v1451
        %1461 = vmatprep.subr.mxu0 0.0
        %1462 = vmatpush1.msra.mxu0 %v1453
        %1463 = vmatprep.subr.mxu0 0.0
        %1464 = vmatpush1.msra.mxu0 0.0
        %1465 = vmatprep.subr.mxu0 0.0
        %1466 = vmatpush1.msra.mxu0 0.0
        %1467 = vmatprep.subr.mxu0 0.0
        %1468 = vmatpush1.msra.mxu0 0.0
        %1469 = vmatprep.subr.mxu0 0.0
        %1470 = vmatpush1.msra.mxu0 0.0
        %1471 = vmatprep.subr.mxu0 0.0
        %1472 = vmatpush1.msra.mxu0 0.0
        %1473 = vmatprep.subr.mxu0 0.0
        %1474 = vmatpush1.msra.mxu0 0.0
        %1475 = vmatprep.subr.mxu0 0.0
        %1476 = vmatpush1.msra.mxu0 0.0
        %1477 = vmatprep.subr.mxu0 0.0
        %1478 = vmatpush1.msra.mxu0 0.0
        %1479 = vmatprep.subr.mxu0 0.0
        %1480 = vmatpush1.msra.mxu0 0.0
        %1481 = vmatprep.subr.mxu0 0.0
        %1482 = vmatpush1.msra.mxu0 0.0
        %1483 = vmatprep.subr.mxu0 0.0
        %1484 = vmatpush1.msra.mxu0 0.0
        %1485 = vmatprep.subr.mxu0 0.0
        %1486 = vmatpush1.msra.mxu0 0.0
        %1487 = vmatprep.subr.mxu0 0.0
        %1488 = vmatpush1.msra.mxu0 0.0
        %1489 = vmatprep.subr.mxu0 0.0
        %1490 = vmatpush1.msra.mxu0 0.0
        %1491 = vmatprep.subr.mxu0 0.0
        %1492 = vmatpush1.msra.mxu0 0.0
        %1493 = vmatprep.subr.mxu0 0.0
        %1494 = vmatpush1.msra.mxu0 0.0
        %1495 = vmatprep.subr.mxu0 0.0
        %1496 = vmatpush1.msra.mxu0 0.0
        %1497 = vmatprep.subr.mxu0 0.0
        %1498 = vmatpush1.msra.mxu0 0.0
        %1499 = vmatprep.subr.mxu0 0.0
        %1500 = vmatpush1.msra.mxu0 0.0
        %1501 = vmatprep.subr.mxu0 0.0
        %1502 = vmatpush1.msra.mxu0 0.0
        %1503 = vmatprep.subr.mxu0 0.0
        %1504 = vmatpush1.msra.mxu0 0.0
        %1505 = vmatprep.subr.mxu0 0.0
        %1506 = vmatpush1.msra.mxu0 0.0
        %1507 = vmatprep.subr.mxu0 0.0
        %1508 = vmatpush1.msra.mxu0 0.0
        %1509 = vmatprep.subr.mxu0 0.0
        %1510 = vmatpush1.msra.mxu0 0.0
        %1511 = vmatprep.subr.mxu0 0.0
        %1512 = vmatpush1.msra.mxu0 0.0
        %1513 = vmatprep.subr.mxu0 0.0
        %1514 = vmatpush1.msra.mxu0 0.0
        %1515 = vmatprep.subr.mxu0 0.0
        %1516 = vmatpush1.msra.mxu0 0.0
        %1517 = vmatprep.subr.mxu0 0.0
        %1518 = vmatpush1.msra.mxu0 0.0
        %1519 = vmatprep.subr.mxu0 0.0
        %1520 = vmatpush1.msra.mxu0 0.0
        %1521 = vmatprep.subr.mxu0 0.0
        %1522 = vmatpush1.msra.mxu0 0.0
        %1523 = vmatprep.mubr.f32.mxu0 0.0
        %1524 = vmatmul.mubr.f32.gmra.mrb[0].mxu0 %v1457
        %v1525 = vpop.f32.mrb[0].mxu0
        %v1526 = vadd.f32 0.0, %v1525
        %v1527 = vpop.f32.mrb[0].mxu0
        %1528 = vdwg.mxu0
        %v1529 = vrcp.pop %v1447
        %v1530 = vmul.f32 %v1526, %v1529
        %1532 = vrot.lane.b32.xlu0 %v1530, 24
        %v1533 = vpop.permute.xlu0 %1532
        %vm1535 = vcmask 261312
        %1536 = vst.msk [vmem:[#allocation4] sm:$0xff] %vm1535, %v1533
        %v1537 = vld [vmem:[#allocation4] sm:$0xff]
        %v1538 = vld [vmem:[#allocation5] sm:$0xff]
        %v1539 = vld [vmem:[#allocation5 + $0x8] sm:$0xff]
        %v1540 = vld [vmem:[#allocation5 + $0x10] sm:$0xff]
        %v1541 = vld [vmem:[#allocation5 + $0x18] sm:$0xff]
        %v1542 = vld [vmem:[%s6] sm:$0x1]
        %v1544 = vlaneseq
        %v1545 = vshrl.u32 %v1544, 7
        %v1546 = vsub.s32 0, %v1545
        %v1547 = vrot.slane %v1542, %v1546
        %v1550 = vsel %vm685, %v1537, 0
        %1552 = vmatprep.subr.mxu0 0.0
        %1553 = vmatpush1.msra.mxu0 %v1538
        %1554 = vmatprep.subr.mxu0 0.0
        %1555 = vmatpush1.msra.mxu0 %v1539
        %1556 = vmatprep.subr.mxu0 0.0
        %1557 = vmatpush1.msra.mxu0 %v1540
        %1558 = vmatprep.subr.mxu0 0.0
        %1559 = vmatpush1.msra.mxu0 %v1541
        %1560 = vmatprep.subr.mxu0 0.0
        %1561 = vmatpush1.msra.mxu0 0.0
        %1562 = vmatprep.subr.mxu0 0.0
        %1563 = vmatpush1.msra.mxu0 0.0
        %1564 = vmatprep.subr.mxu0 0.0
        %1565 = vmatpush1.msra.mxu0 0.0
        %1566 = vmatprep.subr.mxu0 0.0
        %1567 = vmatpush1.msra.mxu0 0.0
        %1568 = vmatprep.subr.mxu0 0.0
        %1569 = vmatpush1.msra.mxu0 0.0
        %1570 = vmatprep.subr.mxu0 0.0
        %1571 = vmatpush1.msra.mxu0 0.0
        %1572 = vmatprep.subr.mxu0 0.0
        %1573 = vmatpush1.msra.mxu0 0.0
        %1574 = vmatprep.subr.mxu0 0.0
        %1575 = vmatpush1.msra.mxu0 0.0
        %1576 = vmatprep.subr.mxu0 0.0
        %1577 = vmatpush1.msra.mxu0 0.0
        %1578 = vmatprep.subr.mxu0 0.0
        %1579 = vmatpush1.msra.mxu0 0.0
        %1580 = vmatprep.subr.mxu0 0.0
        %1581 = vmatpush1.msra.mxu0 0.0
        %1582 = vmatprep.subr.mxu0 0.0
        %1583 = vmatpush1.msra.mxu0 0.0
        %1584 = vmatprep.subr.mxu0 0.0
        %1585 = vmatpush1.msra.mxu0 0.0
        %1586 = vmatprep.subr.mxu0 0.0
        %1587 = vmatpush1.msra.mxu0 0.0
        %1588 = vmatprep.subr.mxu0 0.0
        %1589 = vmatpush1.msra.mxu0 0.0
        %1590 = vmatprep.subr.mxu0 0.0
        %1591 = vmatpush1.msra.mxu0 0.0
        %1592 = vmatprep.subr.mxu0 0.0
        %1593 = vmatpush1.msra.mxu0 0.0
        %1594 = vmatprep.subr.mxu0 0.0
        %1595 = vmatpush1.msra.mxu0 0.0
        %1596 = vmatprep.subr.mxu0 0.0
        %1597 = vmatpush1.msra.mxu0 0.0
        %1598 = vmatprep.subr.mxu0 0.0
        %1599 = vmatpush1.msra.mxu0 0.0
        %1600 = vmatprep.subr.mxu0 0.0
        %1601 = vmatpush1.msra.mxu0 0.0
        %1602 = vmatprep.subr.mxu0 0.0
        %1603 = vmatpush1.msra.mxu0 0.0
        %1604 = vmatprep.subr.mxu0 0.0
        %1605 = vmatpush1.msra.mxu0 0.0
        %1606 = vmatprep.subr.mxu0 0.0
        %1607 = vmatpush1.msra.mxu0 0.0
        %1608 = vmatprep.subr.mxu0 0.0
        %1609 = vmatpush1.msra.mxu0 0.0
        %1610 = vmatprep.subr.mxu0 0.0
        %1611 = vmatpush1.msra.mxu0 0.0
        %1612 = vmatprep.subr.mxu0 0.0
        %1613 = vmatpush1.msra.mxu0 0.0
        %1614 = vmatprep.subr.mxu0 0.0
        %1615 = vmatpush1.msra.mxu0 0.0
        %1616 = vmatprep.mubr.f32.mxu0 0.0
        %1617 = vmatmul.mubr.f32.gmra.mrb[0].mxu0 %v1550
        %v1618 = vpop.f32.mrb[0].mxu0
        %v1619 = vadd.f32 %v1547, %v1618
        %v1620 = vpop.f32.mrb[0].mxu0
        %1621 = vdwg.mxu0
        %v1622 = vadd.f32 %v682, %v1619
        %v1623 = vld [vmem:[%s13] sm:$0x1]
        %v1624 = vld [vmem:[%s14] sm:$0x1]
        %v1625 = vsel %vm685, %v1622, 0.0
        %1626 = vadd.xlane.f32.xlu0 %v1625
        %v1627 = vpop.xlane.xlu0 %1626
        %v1628 = vmul.f32 %v1627, %v689
        %v1629 = vsub.f32 %v1622, %v1628
        %v1630 = vmul.f32 %v1629, %v1629
        %v1631 = vsel %vm685, %v1630, 0.0
        %1632 = vadd.xlane.f32.xlu0 %v1631
        %v1633 = vpop.xlane.xlu0 %1632
        %v1634 = vmul.f32 %v1633, %v689
        %v1635 = vadd.f32 %v1634, 1e-06
        %v1636 = vrsqrt.pop %v1635
        %v1637 = vmul.f32 %v1635, %v1636
        %vm1638 = vcmp.eq.f32.partialorder %v1635, inf
        %v1639 = vsel %vm1638, %v1635, %v1637
        %vm1640 = vcmp.eq.f32.partialorder %v1635, 0.0
        %v1641 = vand.u32 %v1635, 2147483648
        %v1642 = vsel %vm1640, %v1641, %v1639
        %v1643 = vrcp.pop %v1642
        %v1644 = vmul.f32 %v1629, %v1643
        %v1646 = vlaneseq
        %v1647 = vshrl.u32 %v1646, 7
        %v1648 = vsub.s32 0, %v1647
        %v1649 = vrot.slane %v1623, %v1648
        %v1651 = vmul.f32 %v1644, %v1649
        %v1653 = vlaneseq
        %v1654 = vshrl.u32 %v1653, 7
        %v1655 = vsub.s32 0, %v1654
        %v1656 = vrot.slane %v1624, %v1655
        %v1658 = vadd.f32 %v1651, %v1656
        %v1659 = vld [vmem:[#allocation8] sm:$0xff]
        %v1660 = vld [vmem:[#allocation8 + $0x8] sm:$0xff]
        %v1661 = vld [vmem:[#allocation8 + $0x10] sm:$0xff]
        %v1662 = vld [vmem:[#allocation8 + $0x18] sm:$0xff]
        %v1663 = vld [vmem:[%s10] sm:$0x1]
        %v1665 = vlaneseq
        %v1666 = vshrl.u32 %v1665, 7
        %v1667 = vsub.s32 0, %v1666
        %v1668 = vrot.slane %v1663, %v1667
        %v1671 = vsel %vm685, %v1658, 0
        %1673 = vmatprep.subr.mxu0 0.0
        %1674 = vmatpush1.msra.mxu0 %v1659
        %1675 = vmatprep.subr.mxu0 0.0
        %1676 = vmatpush1.msra.mxu0 %v1660
        %1677 = vmatprep.subr.mxu0 0.0
        %1678 = vmatpush1.msra.mxu0 %v1661
        %1679 = vmatprep.subr.mxu0 0.0
        %1680 = vmatpush1.msra.mxu0 %v1662
        %1681 = vmatprep.subr.mxu0 0.0
        %1682 = vmatpush1.msra.mxu0 0.0
        %1683 = vmatprep.subr.mxu0 0.0
        %1684 = vmatpush1.msra.mxu0 0.0
        %1685 = vmatprep.subr.mxu0 0.0
        %1686 = vmatpush1.msra.mxu0 0.0
        %1687 = vmatprep.subr.mxu0 0.0
        %1688 = vmatpush1.msra.mxu0 0.0
        %1689 = vmatprep.subr.mxu0 0.0
        %1690 = vmatpush1.msra.mxu0 0.0
        %1691 = vmatprep.subr.mxu0 0.0
        %1692 = vmatpush1.msra.mxu0 0.0
        %1693 = vmatprep.subr.mxu0 0.0
        %1694 = vmatpush1.msra.mxu0 0.0
        %1695 = vmatprep.subr.mxu0 0.0
        %1696 = vmatpush1.msra.mxu0 0.0
        %1697 = vmatprep.subr.mxu0 0.0
        %1698 = vmatpush1.msra.mxu0 0.0
        %1699 = vmatprep.subr.mxu0 0.0
        %1700 = vmatpush1.msra.mxu0 0.0
        %1701 = vmatprep.subr.mxu0 0.0
        %1702 = vmatpush1.msra.mxu0 0.0
        %1703 = vmatprep.subr.mxu0 0.0
        %1704 = vmatpush1.msra.mxu0 0.0
        %1705 = vmatprep.subr.mxu0 0.0
        %1706 = vmatpush1.msra.mxu0 0.0
        %1707 = vmatprep.subr.mxu0 0.0
        %1708 = vmatpush1.msra.mxu0 0.0
        %1709 = vmatprep.subr.mxu0 0.0
        %1710 = vmatpush1.msra.mxu0 0.0
        %1711 = vmatprep.subr.mxu0 0.0
        %1712 = vmatpush1.msra.mxu0 0.0
        %1713 = vmatprep.subr.mxu0 0.0
        %1714 = vmatpush1.msra.mxu0 0.0
        %1715 = vmatprep.subr.mxu0 0.0
        %1716 = vmatpush1.msra.mxu0 0.0
        %1717 = vmatprep.subr.mxu0 0.0
        %1718 = vmatpush1.msra.mxu0 0.0
        %1719 = vmatprep.subr.mxu0 0.0
        %1720 = vmatpush1.msra.mxu0 0.0
        %1721 = vmatprep.subr.mxu0 0.0
        %1722 = vmatpush1.msra.mxu0 0.0
        %1723 = vmatprep.subr.mxu0 0.0
        %1724 = vmatpush1.msra.mxu0 0.0
        %1725 = vmatprep.subr.mxu0 0.0
        %1726 = vmatpush1.msra.mxu0 0.0
        %1727 = vmatprep.subr.mxu0 0.0
        %1728 = vmatpush1.msra.mxu0 0.0
        %1729 = vmatprep.subr.mxu0 0.0
        %1730 = vmatpush1.msra.mxu0 0.0
        %1731 = vmatprep.subr.mxu0 0.0
        %1732 = vmatpush1.msra.mxu0 0.0
        %1733 = vmatprep.subr.mxu0 0.0
        %1734 = vmatpush1.msra.mxu0 0.0
        %1735 = vmatprep.subr.mxu0 0.0
        %1736 = vmatpush1.msra.mxu0 0.0
        %1737 = vmatprep.mubr.f32.mxu0 0.0
        %1738 = vmatmul.mubr.f32.gmra.mrb[0].mxu0 %v1671
        %v1739 = vpop.f32.mrb[0].mxu0
        %v1740 = vadd.f32 %v1668, %v1739
        %v1741 = vpop.f32.mrb[0].mxu0
        %1742 = vdwg.mxu0
        %v1743 = vmax.f32 %v1740, 0.0
        %v1744 = vld [vmem:[%s11] sm:$0xff]
        %v1745 = vld [vmem:[%s11 + $0x8] sm:$0xff]
        %v1746 = vld [vmem:[%s11 + $0x10] sm:$0xff]
        %v1747 = vld [vmem:[%s11 + $0x18] sm:$0xff]
        %v1748 = vld [vmem:[%s11 + $0x20] sm:$0xff]
        %v1749 = vld [vmem:[%s11 + $0x28] sm:$0xff]
        %v1750 = vld [vmem:[%s11 + $0x30] sm:$0xff]
        %v1751 = vld [vmem:[%s11 + $0x38] sm:$0xff]
        %v1752 = vld [vmem:[%s12] sm:$0x1]
        %v1754 = vlaneseq
        %v1755 = vshrl.u32 %v1754, 7
        %v1756 = vsub.s32 0, %v1755
        %v1757 = vrot.slane %v1752, %v1756
        %vm1759 = vcmask 523264
        %v1761 = vsel %vm1759, %v1743, 0
        %1763 = vmatprep.subr.mxu0 0.0
        %1764 = vmatpush1.msra.mxu0 %v1744
        %1765 = vmatprep.subr.mxu0 0.0
        %1766 = vmatpush1.msra.mxu0 %v1745
        %1767 = vmatprep.subr.mxu0 0.0
        %1768 = vmatpush1.msra.mxu0 %v1746
        %1769 = vmatprep.subr.mxu0 0.0
        %1770 = vmatpush1.msra.mxu0 %v1747
        %1771 = vmatprep.subr.mxu0 0.0
        %1772 = vmatpush1.msra.mxu0 %v1748
        %1773 = vmatprep.subr.mxu0 0.0
        %1774 = vmatpush1.msra.mxu0 %v1749
        %1775 = vmatprep.subr.mxu0 0.0
        %1776 = vmatpush1.msra.mxu0 %v1750
        %1777 = vmatprep.subr.mxu0 0.0
        %1778 = vmatpush1.msra.mxu0 %v1751
        %1779 = vmatprep.subr.mxu0 0.0
        %1780 = vmatpush1.msra.mxu0 0.0
        %1781 = vmatprep.subr.mxu0 0.0
        %1782 = vmatpush1.msra.mxu0 0.0
        %1783 = vmatprep.subr.mxu0 0.0
        %1784 = vmatpush1.msra.mxu0 0.0
        %1785 = vmatprep.subr.mxu0 0.0
        %1786 = vmatpush1.msra.mxu0 0.0
        %1787 = vmatprep.subr.mxu0 0.0
        %1788 = vmatpush1.msra.mxu0 0.0
        %1789 = vmatprep.subr.mxu0 0.0
        %1790 = vmatpush1.msra.mxu0 0.0
        %1791 = vmatprep.subr.mxu0 0.0
        %1792 = vmatpush1.msra.mxu0 0.0
        %1793 = vmatprep.subr.mxu0 0.0
        %1794 = vmatpush1.msra.mxu0 0.0
        %1795 = vmatprep.subr.mxu0 0.0
        %1796 = vmatpush1.msra.mxu0 0.0
        %1797 = vmatprep.subr.mxu0 0.0
        %1798 = vmatpush1.msra.mxu0 0.0
        %1799 = vmatprep.subr.mxu0 0.0
        %1800 = vmatpush1.msra.mxu0 0.0
        %1801 = vmatprep.subr.mxu0 0.0
        %1802 = vmatpush1.msra.mxu0 0.0
        %1803 = vmatprep.subr.mxu0 0.0
        %1804 = vmatpush1.msra.mxu0 0.0
        %1805 = vmatprep.subr.mxu0 0.0
        %1806 = vmatpush1.msra.mxu0 0.0
        %1807 = vmatprep.subr.mxu0 0.0
        %1808 = vmatpush1.msra.mxu0 0.0
        %1809 = vmatprep.subr.mxu0 0.0
        %1810 = vmatpush1.msra.mxu0 0.0
        %1811 = vmatprep.subr.mxu0 0.0
        %1812 = vmatpush1.msra.mxu0 0.0
        %1813 = vmatprep.subr.mxu0 0.0
        %1814 = vmatpush1.msra.mxu0 0.0
        %1815 = vmatprep.subr.mxu0 0.0
        %1816 = vmatpush1.msra.mxu0 0.0
        %1817 = vmatprep.subr.mxu0 0.0
        %1818 = vmatpush1.msra.mxu0 0.0
        %1819 = vmatprep.subr.mxu0 0.0
        %1820 = vmatpush1.msra.mxu0 0.0
        %1821 = vmatprep.subr.mxu0 0.0
        %1822 = vmatpush1.msra.mxu0 0.0
        %1823 = vmatprep.subr.mxu0 0.0
        %1824 = vmatpush1.msra.mxu0 0.0
        %1825 = vmatprep.subr.mxu0 0.0
        %1826 = vmatpush1.msra.mxu0 0.0
        %1827 = vmatprep.mubr.f32.mxu0 0.0
        %1828 = vmatmul.mubr.f32.gmra.mrb[0].mxu0 %v1761
        %v1829 = vpop.f32.mrb[0].mxu0
        %v1830 = vadd.f32 %v1757, %v1829
        %v1831 = vpop.f32.mrb[0].mxu0
        %1832 = vdwg.mxu0
        %v1833 = vadd.f32 %v1622, %v1830
        %1834 = vst.msk [vmem:[%s531] sm:$0xff] %vm685, %v1833
        %s1835 = sand.u32 %s373, 1
        %s1836 = scalar_lea.sflag [#allocation7], %s1835
        %s1837 = sand.u32 %s373, 1
        %s1838 = smul.addr %s1837, 8
        %s1839 = scalar_lea.vmem [#allocation10], %s1838
        // Predicated region
        $region100: #{tpu_custom_call.1} parent=79 // pred_check
          %p1840 = pneg %p383
        $region101: #{tpu_custom_call.1} parent=79 // pred_check_branch
          %1842 = sbr.rel (%p1840) target = $region103
        $region102: #{tpu_custom_call.1} parent=79 // pred_region
          %s1844 = ssub.s32 128, 128
          %1845 = vsyncadd %s1836, %s1844
          %s1846 = smul.addr %s35, 2
          %s1847 = sadd.s32 %s36, %s1846
          %s1848 = smul.addr %s1847, 128
          %s1849 = scalar_lea.hbm %s15, %s1848
          %s1851 = sshll.u32 %s1839, 4
          %s1852 = int_to_ptr.vmem [resolvable:$true] %s1851
          %1854 = dma.vmem_to_hbm [thread:$0]  %s1852, 128, %s1849, %s1836
        $region103: #{tpu_custom_call.1} parent=79 // pred_fallthru
          _
      $region80: #{tpu_custom_call.1} parent=5 // pred_fallthru
        _
      %p1855 = scmp.le.s32.totalorder 2, %s26
      // Predicated region
      $region104: #{tpu_custom_call.1} parent=5 // pred_check
        %p1856 = pneg %p1855
      $region105: #{tpu_custom_call.1} parent=5 // pred_check_branch
        %1858 = sbr.rel (%p1856) target = $region107
      $region106: #{tpu_custom_call.1} parent=5 // pred_region
        %s1859 = ssub.s32 %s26, 2
        // Predicated region
        $region108: #{tpu_custom_call.1} parent=106 // pred_check
          %p1860 = pneg %p389
        $region109: #{tpu_custom_call.1} parent=106 // pred_check_branch
          %1862 = sbr.rel (%p1860) target = $region111
        $region110: #{tpu_custom_call.1} parent=106 // pred_region
          %s1863 = sand.u32 %s374, 1
          %s1864 = scalar_lea.sflag [#allocation7], %s1863
          %s1865 = sand.u32 %s374, 1
          %s1866 = smul.addr %s1865, 8
          %s1867 = scalar_lea.vmem [#allocation10], %s1866
          %1868 = dma.done %s1864, 128
        $region111: #{tpu_custom_call.1} parent=106 // pred_fallthru
          _
      $region107: #{tpu_custom_call.1} parent=5 // pred_fallthru
        _
    $region6: #{tpu_custom_call.1} parent=1 // loop_footer
      %s30 = sadd.s32 1, %s26
    $region7: #{tpu_custom_call.1} parent=1 // loop_footer_branch
      %25 = sbr.rel target = $region3
    $region8: #{tpu_custom_call.1} parent=1 // loop_exit
      _
    %1869 = vsyncpa [#allocation6], 1
    %s1870 = scalar_lea.sflag [#allocation6], 1
    %1871 = vsyncpa %s1870, 1
    %1872 = vsyncpa [#allocation9], 1
    %1873 = vsyncpa [#allocation7], 1
    %s1874 = scalar_lea.sflag [#allocation7], 1
    %1875 = vsyncpa %s1874, 1

// kernel: tpu_custom_call.1
$region0: #{tpu_custom_call.1}
  #allocation0 [shape = 'u32[]', space=smem, size = 0x4, offset = 0x4, fixed_abs, tag = 'smem constant byte address 0x4 - core index']
  #allocation1 [shape = 'u32[144,128]{1,0:T(1,128)}', space=vmem, size = 0x12000, scoped, tag = 'internal scratch']
  #allocation2 [shape = 'f32[16,32]{1,0:T(8,128)}', space=vmem, size = 0x2000, scoped, tag = 'scratch operand']
  #allocation3 [shape = 'f32[16,32]{1,0:T(8,128)}', space=vmem, size = 0x2000, scoped, tag = 'scratch operand']
  #allocation4 [shape = 'f32[8,32]{1,0:T(8,128)}', space=vmem, size = 0x1000, scoped, tag = 'scratch operand']
  %s0 = inlined_call_operand.vmem [shape: f32[2,16,32], index: 0, kind: input, shape index: {}]
  %s1 = inlined_call_operand.vmem [shape: f32[32,32], index: 1, kind: input, shape index: {}]
  %s2 = inlined_call_operand.vmem [shape: f32[1,32], index: 2, kind: input, shape index: {}]
  %s3 = inlined_call_operand.vmem [shape: f32[32,64], index: 3, kind: input, shape index: {}]
  %s4 = inlined_call_operand.vmem [shape: f32[1,64], index: 4, kind: input, shape index: {}]
  %s5 = inlined_call_operand.hbm [shape: f32[32,32], index: 5, kind: input, shape index: {}]
  %s6 = inlined_call_operand.vmem [shape: f32[1,32], index: 6, kind: input, shape index: {}]
  %s7 = inlined_call_operand.vmem [shape: f32[1,32], index: 7, kind: input, shape index: {}]
  %s8 = inlined_call_operand.vmem [shape: f32[1,32], index: 8, kind: input, shape index: {}]
  %s9 = inlined_call_operand.hbm [shape: f32[32,64], index: 9, kind: input, shape index: {}]
  %s10 = inlined_call_operand.vmem [shape: f32[1,64], index: 10, kind: input, shape index: {}]
  %s11 = inlined_call_operand.vmem [shape: f32[64,32], index: 11, kind: input, shape index: {}]
  %s12 = inlined_call_operand.vmem [shape: f32[1,32], index: 12, kind: input, shape index: {}]
  %s13 = inlined_call_operand.vmem [shape: f32[1,32], index: 13, kind: input, shape index: {}]
  %s14 = inlined_call_operand.vmem [shape: f32[1,32], index: 14, kind: input, shape index: {}]
  %s15 = inlined_call_operand.hbm [shape: f32[2,16,32], index: 15, kind: output, shape index: {}]
  %s16 = sld [smem:[#allocation0]]
  $region112: #{tpu_custom_call.1} parent=0
    _
  %s18 = ssub.s32 1, %s16
  %s19 = scalar_select 0, %s18, %s16
  $region1: #{tpu_custom_call.1} parent=0
    #allocation5 [shape = 'u8[16384]{0}', space=vmem, size = 0x4000, scoped, tag = 'input window, operand 5, single buffered']
    #allocation6 [shape = 's32[2]{0}', space=sflag, size = 0x8, scoped, tag = 'scoped memory for tpu_custom_call.1']
    #allocation7 [shape = 's32[2]{0}', space=sflag, size = 0x8, scoped, tag = 'scoped memory for tpu_custom_call.1']
    #allocation8 [shape = 'u8[16384]{0}', space=vmem, size = 0x4000, scoped, tag = 'input window, operand 9, single buffered']
    #allocation9 [shape = 's32[1]{0}', space=sflag, size = 0x4, scoped, tag = 'scoped memory for tpu_custom_call.1']
    #allocation10 [shape = 'u8[8192]{0}', space=vmem, size = 0x2000, scoped, tag = 'output window, operand 0']
    %20 = vsyncpa [#allocation6], 0
    %21 = vsyncpa [#allocation9], 0
    %22 = vsyncpa [#allocation7], 0
    %s23 = scalar_lea.sflag [#allocation7], 1
    %24 = vsyncpa %s23, 0
    loop: start=0, step=1, limit=6
    $region2: #{tpu_custom_call.1} parent=1 // loop_pre_header
      _
    $region3: #{tpu_custom_call.1} parent=1 // loop_header
      %s26 = sphi 0, %s30
      %p27 = scmp.ge.s32.totalorder %s26, 6
      %s33 = sphi 0, %s45
      %s34 = sphi 0, %s41
      %s35 = sphi 0, %s33
      %s36 = sphi 0, %s34
      %s37 = sphi 0, %s35
      %s38 = sphi 0, %s36
      %s48 = sphi 0, %s50
      %s51 = sphi 0, %s48
      %s52 = sphi 0, %s51
      %s68 = sphi 0, %s52
      %s72 = sphi 0, %s72
      %s74 = sphi 0, %s72
      %s75 = sphi 0, %s74
      %s89 = sphi 0, %s75
      %s93 = sphi 0, %s93
      %s95 = sphi 0, %s93
      %s96 = sphi 0, %s95
      %s110 = sphi 0, %s96
      %s114 = sphi 0, %s114
      %s116 = sphi 0, %s114
      %s117 = sphi 0, %s116
      %s131 = sphi 0, %s117
      %s135 = sphi 0, %s135
      %s137 = sphi 0, %s135
      %s138 = sphi 0, %s137
      %s152 = sphi 0, %s138
      %s156 = sphi 0, %s156
      %s158 = sphi 0, %s156
      %s159 = sphi 0, %s158
      %s173 = sphi 0, %s159
      %s177 = sphi 0, %s177
      %s179 = sphi 0, %s177
      %s180 = sphi 0, %s179
      %s194 = sphi 0, %s180
      %s198 = sphi 0, %s198
      %s200 = sphi 0, %s198
      %s201 = sphi 0, %s200
      %s215 = sphi 0, %s201
      %s219 = sphi 0, %s219
      %s221 = sphi 0, %s219
      %s222 = sphi 0, %s221
      %s236 = sphi 0, %s222
      %s240 = sphi 0, %s240
      %s242 = sphi 0, %s240
      %s243 = sphi 0, %s242
      %s257 = sphi 0, %s243
      %s261 = sphi 0, %s261
      %s263 = sphi 0, %s261
      %s264 = sphi 0, %s263
      %s278 = sphi 0, %s264
      %s282 = sphi 0, %s282
      %s284 = sphi 0, %s282
      %s285 = sphi 0, %s284
      %s299 = sphi 0, %s285
      %s303 = sphi 0, %s303
      %s305 = sphi 0, %s303
      %s306 = sphi 0, %s305
      %s320 = sphi 0, %s306
      %s324 = sphi 0, %s324
      %s326 = sphi 0, %s324
      %s327 = sphi 0, %s326
      %s341 = sphi 0, %s327
      %s345 = sphi 0, %s345
      %s347 = sphi 0, %s345
      %s348 = sphi 0, %s347
      %s362 = sphi 0, %s348
      %s370 = sphi 0, %s372
      %s373 = sphi 0, %s370
      %s374 = sphi 0, %s373
      %s390 = sphi 0, %s374
    $region4: #{tpu_custom_call.1} parent=1 // loop_header_branch
      %29 = sbr.rel (%p27) target = $region8
    $region5: #{tpu_custom_call.1} parent=1 // loop_body
      %s31 = ssub.s32 %s26, 1
      %s32 = ssub.s32 %s26, 2
      %s39 = sadd.s32 1, %s34
      %p40 = scmp.ge.s32.totalorder %s39, 2
      %s41 = scalar_select %p40, 0, %s39
      %s42 = sadd.s32 1, %s33
      %s43 = scalar_select %p40, %s42, %s33
      %p44 = scmp.ge.s32.totalorder %s43, 2
      %s45 = scalar_select %p44, 0, %s43
      %s46 = ssub.s32 %s33, %s45
      %p47 = scmp.eq.s32.totalorder %s46, 0
      %s49 = sadd.s32 %s48, 1
      %s50 = scalar_select %p47, %s48, %s49
      %p53 = pneg %p47
      %p54 = scmp.eq.s32.totalorder %s26, 3
      %p55 = por %p53, %p54
      %p56 = scmp.ne.s32.totalorder %s48, %s51
      %p57 = scmp.eq.s32.totalorder %s26, 0
      %p58 = por %p56, %p57
      %p59 = scmp.ne.s32.totalorder %s48, %s51
      %p60 = scmp.eq.s32.totalorder %s31, 3
      %p61 = por %p59, %p60
      %p62 = scmp.ne.s32.totalorder %s51, %s52
      %p63 = scmp.eq.s32.totalorder %s31, 0
      %p64 = por %p62, %p63
      %p65 = scmp.ne.s32.totalorder %s51, %s52
      %p66 = scmp.eq.s32.totalorder %s32, 3
      %p67 = por %p65, %p66
      %p69 = scmp.ne.s32.totalorder %s52, %s68
      %p70 = scmp.eq.s32.totalorder %s32, 0
      %p71 = por %p69, %p70
      %s73 = sadd.s32 %s72, 1
      %p76 = scmp.eq.s32.totalorder %s26, 3
      %p77 = scmp.ne.s32.totalorder %s72, %s74
      %p78 = scmp.eq.s32.totalorder %s26, 0
      %p79 = por %p77, %p78
      %p80 = scmp.ne.s32.totalorder %s72, %s74
      %p81 = scmp.eq.s32.totalorder %s31, 3
      %p82 = por %p80, %p81
      %p83 = scmp.ne.s32.totalorder %s74, %s75
      %p84 = scmp.eq.s32.totalorder %s31, 0
      %p85 = por %p83, %p84
      %p86 = scmp.ne.s32.totalorder %s74, %s75
      %p87 = scmp.eq.s32.totalorder %s32, 3
      %p88 = por %p86, %p87
      %p90 = scmp.ne.s32.totalorder %s75, %s89
      %p91 = scmp.eq.s32.totalorder %s32, 0
      %p92 = por %p90, %p91
      %s94 = sadd.s32 %s93, 1
      %p97 = scmp.eq.s32.totalorder %s26, 3
      %p98 = scmp.ne.s32.totalorder %s93, %s95
      %p99 = scmp.eq.s32.totalorder %s26, 0
      %p100 = por %p98, %p99
      %p101 = scmp.ne.s32.totalorder %s93, %s95
      %p102 = scmp.eq.s32.totalorder %s31, 3
      %p103 = por %p101, %p102
      %p104 = scmp.ne.s32.totalorder %s95, %s96
      %p105 = scmp.eq.s32.totalorder %s31, 0
      %p106 = por %p104, %p105
      %p107 = scmp.ne.s32.totalorder %s95, %s96
      %p108 = scmp.eq.s32.totalorder %s32, 3
      %p109 = por %p107, %p108
      %p111 = scmp.ne.s32.totalorder %s96, %s110
      %p112 = scmp.eq.s32.totalorder %s32, 0
      %p113 = por %p111, %p112
      %s115 = sadd.s32 %s114, 1
      %p118 = scmp.eq.s32.totalorder %s26, 3
      %p119 = scmp.ne.s32.totalorder %s114, %s116
      %p120 = scmp.eq.s32.totalorder %s26, 0
      %p121 = por %p119, %p120
      %p122 = scmp.ne.s32.totalorder %s114, %s116
      %p123 = scmp.eq.s32.totalorder %s31, 3
      %p124 = por %p122, %p123
      %p125 = scmp.ne.s32.totalorder %s116, %s117
      %p126 = scmp.eq.s32.totalorder %s31, 0
      %p127 = por %p125, %p126
      %p128 = scmp.ne.s32.totalorder %s116, %s117
      %p129 = scmp.eq.s32.totalorder %s32, 3
      %p130 = por %p128, %p129
      %p132 = scmp.ne.s32.totalorder %s117, %s131
      %p133 = scmp.eq.s32.totalorder %s32, 0
      %p134 = por %p132, %p133
      %s136 = sadd.s32 %s135, 1
      %p139 = scmp.eq.s32.totalorder %s26, 3
      %p140 = scmp.ne.s32.totalorder %s135, %s137
      %p141 = scmp.eq.s32.totalorder %s26, 0
      %p142 = por %p140, %p141
      %p143 = scmp.ne.s32.totalorder %s135, %s137
      %p144 = scmp.eq.s32.totalorder %s31, 3
      %p145 = por %p143, %p144
      %p146 = scmp.ne.s32.totalorder %s137, %s138
      %p147 = scmp.eq.s32.totalorder %s31, 0
      %p148 = por %p146, %p147
      %p149 = scmp.ne.s32.totalorder %s137, %s138
      %p150 = scmp.eq.s32.totalorder %s32, 3
      %p151 = por %p149, %p150
      %p153 = scmp.ne.s32.totalorder %s138, %s152
      %p154 = scmp.eq.s32.totalorder %s32, 0
      %p155 = por %p153, %p154
      %s157 = sadd.s32 %s156, 1
      %p160 = scmp.eq.s32.totalorder %s26, 3
      %p161 = scmp.ne.s32.totalorder %s156, %s158
      %p162 = scmp.eq.s32.totalorder %s26, 0
      %p163 = por %p161, %p162
      %p164 = scmp.ne.s32.totalorder %s156, %s158
      %p165 = scmp.eq.s32.totalorder %s31, 3
      %p166 = por %p164, %p165
      %p167 = scmp.ne.s32.totalorder %s158, %s159
      %p168 = scmp.eq.s32.totalorder %s31, 0
      %p169 = por %p167, %p168
      %p170 = scmp.ne.s32.totalorder %s158, %s159
      %p171 = scmp.eq.s32.totalorder %s32, 3
      %p172 = por %p170, %p171
      %p174 = scmp.ne.s32.totalorder %s159, %s173
      %p175 = scmp.eq.s32.totalorder %s32, 0
      %p176 = por %p174, %p175
      %s178 = sadd.s32 %s177, 1
      %p181 = scmp.eq.s32.totalorder %s26, 3
      %p182 = scmp.ne.s32.totalorder %s177, %s179
      %p183 = scmp.eq.s32.totalorder %s26, 0
      %p184 = por %p182, %p183
      %p185 = scmp.ne.s32.totalorder %s177, %s179
      %p186 = scmp.eq.s32.totalorder %s31, 3
      %p187 = por %p185, %p186
      %p188 = scmp.ne.s32.totalorder %s179, %s180
      %p189 = scmp.eq.s32.totalorder %s31, 0
      %p190 = por %p188, %p189
      %p191 = scmp.ne.s32.totalorder %s179, %s180
      %p192 = scmp.eq.s32.totalorder %s32, 3
      %p193 = por %p191, %p192
      %p195 = scmp.ne.s32.totalorder %s180, %s194
      %p196 = scmp.eq.s32.totalorder %s32, 0
      %p197 = por %p195, %p196
      %s199 = sadd.s32 %s198, 1
      %p202 = scmp.eq.s32.totalorder %s26, 3
      %p203 = scmp.ne.s32.totalorder %s198, %s200
      %p204 = scmp.eq.s32.totalorder %s26, 0
      %p205 = por %p203, %p204
      %p206 = scmp.ne.s32.totalorder %s198, %s200
      %p207 = scmp.eq.s32.totalorder %s31, 3
      %p208 = por %p206, %p207
      %p209 = scmp.ne.s32.totalorder %s200, %s201
      %p210 = scmp.eq.s32.totalorder %s31, 0
      %p211 = por %p209, %p210
      %p212 = scmp.ne.s32.totalorder %s200, %s201
      %p213 = scmp.eq.s32.totalorder %s32, 3
      %p214 = por %p212, %p213
      %p216 = scmp.ne.s32.totalorder %s201, %s215
      %p217 = scmp.eq.s32.totalorder %s32, 0
      %p218 = por %p216, %p217
      %s220 = sadd.s32 %s219, 1
      %p223 = scmp.eq.s32.totalorder %s26, 3
      %p224 = scmp.ne.s32.totalorder %s219, %s221
      %p225 = scmp.eq.s32.totalorder %s26, 0
      %p226 = por %p224, %p225
      %p227 = scmp.ne.s32.totalorder %s219, %s221
      %p228 = scmp.eq.s32.totalorder %s31, 3
      %p229 = por %p227, %p228
      %p230 = scmp.ne.s32.totalorder %s221, %s222
      %p231 = scmp.eq.s32.totalorder %s31, 0
      %p232 = por %p230, %p231
      %p233 = scmp.ne.s32.totalorder %s221, %s222
      %p234 = scmp.eq.s32.totalorder %s32, 3
      %p235 = por %p233, %p234
      %p237 = scmp.ne.s32.totalorder %s222, %s236
      %p238 = scmp.eq.s32.totalorder %s32, 0
      %p239 = por %p237, %p238
      %s241 = sadd.s32 %s240, 1
      %p244 = scmp.eq.s32.totalorder %s26, 3
      %p245 = scmp.ne.s32.totalorder %s240, %s242
      %p246 = scmp.eq.s32.totalorder %s26, 0
      %p247 = por %p245, %p246
      %p248 = scmp.ne.s32.totalorder %s240, %s242
      %p249 = scmp.eq.s32.totalorder %s31, 3
      %p250 = por %p248, %p249
      %p251 = scmp.ne.s32.totalorder %s242, %s243
      %p252 = scmp.eq.s32.totalorder %s31, 0
      %p253 = por %p251, %p252
      %p254 = scmp.ne.s32.totalorder %s242, %s243
      %p255 = scmp.eq.s32.totalorder %s32, 3
      %p256 = por %p254, %p255
      %p258 = scmp.ne.s32.totalorder %s243, %s257
      %p259 = scmp.eq.s32.totalorder %s32, 0
      %p260 = por %p258, %p259
      %s262 = sadd.s32 %s261, 1
      %p265 = scmp.eq.s32.totalorder %s26, 3
      %p266 = scmp.ne.s32.totalorder %s261, %s263
      %p267 = scmp.eq.s32.totalorder %s26, 0
      %p268 = por %p266, %p267
      %p269 = scmp.ne.s32.totalorder %s261, %s263
      %p270 = scmp.eq.s32.totalorder %s31, 3
      %p271 = por %p269, %p270
      %p272 = scmp.ne.s32.totalorder %s263, %s264
      %p273 = scmp.eq.s32.totalorder %s31, 0
      %p274 = por %p272, %p273
      %p275 = scmp.ne.s32.totalorder %s263, %s264
      %p276 = scmp.eq.s32.totalorder %s32, 3
      %p277 = por %p275, %p276
      %p279 = scmp.ne.s32.totalorder %s264, %s278
      %p280 = scmp.eq.s32.totalorder %s32, 0
      %p281 = por %p279, %p280
      %s283 = sadd.s32 %s282, 1
      %p286 = scmp.eq.s32.totalorder %s26, 3
      %p287 = scmp.ne.s32.totalorder %s282, %s284
      %p288 = scmp.eq.s32.totalorder %s26, 0
      %p289 = por %p287, %p288
      %p290 = scmp.ne.s32.totalorder %s282, %s284
      %p291 = scmp.eq.s32.totalorder %s31, 3
      %p292 = por %p290, %p291
      %p293 = scmp.ne.s32.totalorder %s284, %s285
      %p294 = scmp.eq.s32.totalorder %s31, 0
      %p295 = por %p293, %p294
      %p296 = scmp.ne.s32.totalorder %s284, %s285
      %p297 = scmp.eq.s32.totalorder %s32, 3
      %p298 = por %p296, %p297
      %p300 = scmp.ne.s32.totalorder %s285, %s299
      %p301 = scmp.eq.s32.totalorder %s32, 0
      %p302 = por %p300, %p301
      %s304 = sadd.s32 %s303, 1
      %p307 = scmp.eq.s32.totalorder %s26, 3
      %p308 = scmp.ne.s32.totalorder %s303, %s305
      %p309 = scmp.eq.s32.totalorder %s26, 0
      %p310 = por %p308, %p309
      %p311 = scmp.ne.s32.totalorder %s303, %s305
      %p312 = scmp.eq.s32.totalorder %s31, 3
      %p313 = por %p311, %p312
      %p314 = scmp.ne.s32.totalorder %s305, %s306
      %p315 = scmp.eq.s32.totalorder %s31, 0
      %p316 = por %p314, %p315
      %p317 = scmp.ne.s32.totalorder %s305, %s306
      %p318 = scmp.eq.s32.totalorder %s32, 3
      %p319 = por %p317, %p318
      %p321 = scmp.ne.s32.totalorder %s306, %s320
      %p322 = scmp.eq.s32.totalorder %s32, 0
      %p323 = por %p321, %p322
      %s325 = sadd.s32 %s324, 1
      %p328 = scmp.eq.s32.totalorder %s26, 3
      %p329 = scmp.ne.s32.totalorder %s324, %s326
      %p330 = scmp.eq.s32.totalorder %s26, 0
      %p331 = por %p329, %p330
      %p332 = scmp.ne.s32.totalorder %s324, %s326
      %p333 = scmp.eq.s32.totalorder %s31, 3
      %p334 = por %p332, %p333
      %p335 = scmp.ne.s32.totalorder %s326, %s327
      %p336 = scmp.eq.s32.totalorder %s31, 0
      %p337 = por %p335, %p336
      %p338 = scmp.ne.s32.totalorder %s326, %s327
      %p339 = scmp.eq.s32.totalorder %s32, 3
      %p340 = por %p338, %p339
      %p342 = scmp.ne.s32.totalorder %s327, %s341
      %p343 = scmp.eq.s32.totalorder %s32, 0
      %p344 = por %p342, %p343
      %s346 = sadd.s32 %s345, 1
      %p349 = scmp.eq.s32.totalorder %s26, 3
      %p350 = scmp.ne.s32.totalorder %s345, %s347
      %p351 = scmp.eq.s32.totalorder %s26, 0
      %p352 = por %p350, %p351
      %p353 = scmp.ne.s32.totalorder %s345, %s347
      %p354 = scmp.eq.s32.totalorder %s31, 3
      %p355 = por %p353, %p354
      %p356 = scmp.ne.s32.totalorder %s347, %s348
      %p357 = scmp.eq.s32.totalorder %s31, 0
      %p358 = por %p356, %p357
      %p359 = scmp.ne.s32.totalorder %s347, %s348
      %p360 = scmp.eq.s32.totalorder %s32, 3
      %p361 = por %p359, %p360
      %p363 = scmp.ne.s32.totalorder %s348, %s362
      %p364 = scmp.eq.s32.totalorder %s32, 0
      %p365 = por %p363, %p364
      %s366 = ssub.s32 %s33, %s45
      %s367 = ssub.s32 %s34, %s41
      %s368 = sor.u32 %s366, %s367
      %p369 = scmp.eq.s32.totalorder %s368, 0
      %s371 = sadd.s32 %s370, 1
      %s372 = scalar_select %p369, %s370, %s371
      %p375 = pneg %p369
      %p376 = scmp.eq.s32.totalorder %s26, 3
      %p377 = por %p375, %p376
      %p378 = scmp.ne.s32.totalorder %s370, %s373
      %p379 = scmp.eq.s32.totalorder %s26, 0
      %p380 = por %p378, %p379
      %p381 = scmp.ne.s32.totalorder %s370, %s373
      %p382 = scmp.eq.s32.totalorder %s31, 3
      %p383 = por %p381, %p382
      %p384 = scmp.ne.s32.totalorder %s373, %s374
      %p385 = scmp.eq.s32.totalorder %s31, 0
      %p386 = por %p384, %p385
      %p387 = scmp.ne.s32.totalorder %s373, %s374
      %p388 = scmp.eq.s32.totalorder %s32, 3
      %p389 = por %p387, %p388
      %p391 = scmp.ne.s32.totalorder %s374, %s390
      %p392 = scmp.eq.s32.totalorder %s32, 0
      %p393 = por %p391, %p392
      %p394 = scmp.le.s32.totalorder 1, %s26
      %p395 = scmp.lt.s32.totalorder %s26, 5
      %p396 = pnand %p394, %p395
      %p397 = pneg %p396
      // Predicated region
      $region9: #{tpu_custom_call.1} parent=5 // pred_check
        _
      $region10: #{tpu_custom_call.1} parent=5 // pred_check_branch
        %399 = sbr.rel (%p396) target = $region12
      $region11: #{tpu_custom_call.1} parent=5 // pred_region
        %s400 = ssub.s32 %s26, 1
        // Predicated region
        $region13: #{tpu_custom_call.1} parent=11 // pred_check
          %p401 = pneg %p85
        $region14: #{tpu_custom_call.1} parent=11 // pred_check_branch
          %403 = sbr.rel (%p401) target = $region16
        $region15: #{tpu_custom_call.1} parent=11 // pred_region
          _
        $region16: #{tpu_custom_call.1} parent=11 // pred_fallthru
          _
        // Predicated region
        $region17: #{tpu_custom_call.1} parent=11 // pred_check
          %p404 = pneg %p106
        $region18: #{tpu_custom_call.1} parent=11 // pred_check_branch
          %406 = sbr.rel (%p404) target = $region20
        $region19: #{tpu_custom_call.1} parent=11 // pred_region
          _
        $region20: #{tpu_custom_call.1} parent=11 // pred_fallthru
          _
        // Predicated region
        $region21: #{tpu_custom_call.1} parent=11 // pred_check
          %p407 = pneg %p127
        $region22: #{tpu_custom_call.1} parent=11 // pred_check_branch
          %409 = sbr.rel (%p407) target = $region24
        $region23: #{tpu_custom_call.1} parent=11 // pred_region
          _
        $region24: #{tpu_custom_call.1} parent=11 // pred_fallthru
          _
        // Predicated region
        $region25: #{tpu_custom_call.1} parent=11 // pred_check
          %p410 = pneg %p148
        $region26: #{tpu_custom_call.1} parent=11 // pred_check_branch
          %412 = sbr.rel (%p410) target = $region28
        $region27: #{tpu_custom_call.1} parent=11 // pred_region
          _
        $region28: #{tpu_custom_call.1} parent=11 // pred_fallthru
          _
        // Predicated region
        $region29: #{tpu_custom_call.1} parent=11 // pred_check
          %p413 = pneg %p169
        $region30: #{tpu_custom_call.1} parent=11 // pred_check_branch
          %415 = sbr.rel (%p413) target = $region32
        $region31: #{tpu_custom_call.1} parent=11 // pred_region
          %s417 = ssub.s32 512, 512
          %418 = vsyncadd [#allocation6], %s417
          %s419 = sshll.u32 [#allocation5], 4
          %s420 = int_to_ptr.vmem [resolvable:$true] %s419
          %425 = dma.hbm_to_vmem [thread:$0]  %s5, 512, %s420, [#allocation6], 128, 128, 8
        $region32: #{tpu_custom_call.1} parent=11 // pred_fallthru
          _
        // Predicated region
        $region33: #{tpu_custom_call.1} parent=11 // pred_check
          %p426 = pneg %p190
        $region34: #{tpu_custom_call.1} parent=11 // pred_check_branch
          %428 = sbr.rel (%p426) target = $region36
        $region35: #{tpu_custom_call.1} parent=11 // pred_region
          _
        $region36: #{tpu_custom_call.1} parent=11 // pred_fallthru
          _
        // Predicated region
        $region37: #{tpu_custom_call.1} parent=11 // pred_check
          %p429 = pneg %p211
        $region38: #{tpu_custom_call.1} parent=11 // pred_check_branch
          %431 = sbr.rel (%p429) target = $region40
        $region39: #{tpu_custom_call.1} parent=11 // pred_region
          _
        $region40: #{tpu_custom_call.1} parent=11 // pred_fallthru
          _
        // Predicated region
        $region41: #{tpu_custom_call.1} parent=11 // pred_check
          %p432 = pneg %p232
        $region42: #{tpu_custom_call.1} parent=11 // pred_check_branch
          %434 = sbr.rel (%p432) target = $region44
        $region43: #{tpu_custom_call.1} parent=11 // pred_region
          _
        $region44: #{tpu_custom_call.1} parent=11 // pred_fallthru
          _
        // Predicated region
        $region45: #{tpu_custom_call.1} parent=11 // pred_check
          %p435 = pneg %p253
        $region46: #{tpu_custom_call.1} parent=11 // pred_check_branch
          %437 = sbr.rel (%p435) target = $region48
        $region47: #{tpu_custom_call.1} parent=11 // pred_region
          %s439 = ssub.s32 512, 512
          %440 = vsyncadd [#allocation9], %s439
          %s441 = sshll.u32 [#allocation8], 4
          %s442 = int_to_ptr.vmem [resolvable:$true] %s441
          %447 = dma.hbm_to_vmem [thread:$0]  %s9, 512, %s442, [#allocation9], 128, 128, 8
        $region48: #{tpu_custom_call.1} parent=11 // pred_fallthru
          _
        // Predicated region
        $region49: #{tpu_custom_call.1} parent=11 // pred_check
          %p448 = pneg %p274
        $region50: #{tpu_custom_call.1} parent=11 // pred_check_branch
          %450 = sbr.rel (%p448) target = $region52
        $region51: #{tpu_custom_call.1} parent=11 // pred_region
          _
        $region52: #{tpu_custom_call.1} parent=11 // pred_fallthru
          _
        // Predicated region
        $region53: #{tpu_custom_call.1} parent=11 // pred_check
          %p451 = pneg %p295
        $region54: #{tpu_custom_call.1} parent=11 // pred_check_branch
          %453 = sbr.rel (%p451) target = $region56
        $region55: #{tpu_custom_call.1} parent=11 // pred_region
          _
        $region56: #{tpu_custom_call.1} parent=11 // pred_fallthru
          _
        // Predicated region
        $region57: #{tpu_custom_call.1} parent=11 // pred_check
          %p454 = pneg %p316
        $region58: #{tpu_custom_call.1} parent=11 // pred_check_branch
          %456 = sbr.rel (%p454) target = $region60
        $region59: #{tpu_custom_call.1} parent=11 // pred_region
          _
        $region60: #{tpu_custom_call.1} parent=11 // pred_fallthru
          _
        // Predicated region
        $region61: #{tpu_custom_call.1} parent=11 // pred_check
          %p457 = pneg %p337
        $region62: #{tpu_custom_call.1} parent=11 // pred_check_branch
          %459 = sbr.rel (%p457) target = $region64
        $region63: #{tpu_custom_call.1} parent=11 // pred_region
          _
        $region64: #{tpu_custom_call.1} parent=11 // pred_fallthru
          _
        // Predicated region
        $region65: #{tpu_custom_call.1} parent=11 // pred_check
          %p460 = pneg %p358
        $region66: #{tpu_custom_call.1} parent=11 // pred_check_branch
          %462 = sbr.rel (%p460) target = $region68
        $region67: #{tpu_custom_call.1} parent=11 // pred_region
          _
        $region68: #{tpu_custom_call.1} parent=11 // pred_fallthru
          _
      $region12: #{tpu_custom_call.1} parent=5 // pred_fallthru
        _
      %p463 = scmp.lt.s32.totalorder %s26, 4
      // Predicated region
      $region69: #{tpu_custom_call.1} parent=5 // pred_check
        %p464 = pneg %p463
      $region70: #{tpu_custom_call.1} parent=5 // pred_check_branch
        %466 = sbr.rel (%p464) target = $region72
      $region71: #{tpu_custom_call.1} parent=5 // pred_region
        // Predicated region
        $region73: #{tpu_custom_call.1} parent=71 // pred_check
          %p467 = pneg %p58
        $region74: #{tpu_custom_call.1} parent=71 // pred_check_branch
          %469 = sbr.rel (%p467) target = $region76
        $region75: #{tpu_custom_call.1} parent=71 // pred_region
          %p470 = scmp.lt.s32.totalorder %s33, 1
          %s471 = scalar_select %p470, %s33, 1
          %s472 = smul.addr %s471, 2
          %s473 = smul.addr %s472, 8
          %s474 = scalar_lea.vmem %s0, %s473
        $region76: #{tpu_custom_call.1} parent=71 // pred_fallthru
          _
      $region72: #{tpu_custom_call.1} parent=5 // pred_fallthru
        _
      %p475 = scmp.le.s32.totalorder 1, %s26
      %p476 = scmp.lt.s32.totalorder %s26, 5
      %p477 = pnand %p475, %p476
      %p478 = pneg %p477
      // Predicated region
      $region77: #{tpu_custom_call.1} parent=5 // pred_check
        _
      $region78: #{tpu_custom_call.1} parent=5 // pred_check_branch
        %480 = sbr.rel (%p477) target = $region80
      $region79: #{tpu_custom_call.1} parent=5 // pred_region
        %s481 = ssub.s32 %s26, 1
        // Predicated region
        $region81: #{tpu_custom_call.1} parent=79 // pred_check
          %p482 = pneg %p169
        $region82: #{tpu_custom_call.1} parent=79 // pred_check_branch
          %484 = sbr.rel (%p482) target = $region84
        $region83: #{tpu_custom_call.1} parent=79 // pred_region
          %485 = dma.done [#allocation6], 512
        $region84: #{tpu_custom_call.1} parent=79 // pred_fallthru
          _
        // Predicated region
        $region85: #{tpu_custom_call.1} parent=79 // pred_check
          %p486 = pneg %p253
        $region86: #{tpu_custom_call.1} parent=79 // pred_check_branch
          %488 = sbr.rel (%p486) target = $region88
        $region87: #{tpu_custom_call.1} parent=79 // pred_region
          %489 = dma.done [#allocation9], 512
        $region88: #{tpu_custom_call.1} parent=79 // pred_fallthru
          _
        %p490 = scmp.lt.s32.totalorder %s35, 1
        %s491 = scalar_select %p490, %s35, 1
        %s492 = smul.addr %s491, 2
        %s493 = smul.addr %s492, 8
        %s494 = scalar_lea.vmem %s0, %s493
        %p495 = pneg %p64
        %p496 = pneg %p61
        %p497 = pneg %p85
        %p498 = pneg %p82
        %p499 = pneg %p106
        %p500 = pneg %p103
        %p501 = pneg %p127
        %p502 = pneg %p124
        %p503 = pneg %p148
        %p504 = pneg %p145
        %p505 = pneg %p169
        %p506 = pneg %p166
        %p507 = pneg %p190
        %p508 = pneg %p187
        %p509 = pneg %p211
        %p510 = pneg %p208
        %p511 = pneg %p232
        %p512 = pneg %p229
        %p513 = pneg %p253
        %p514 = pneg %p250
        %p515 = pneg %p274
        %p516 = pneg %p271
        %p517 = pneg %p295
        %p518 = pneg %p292
        %p519 = pneg %p316
        %p520 = pneg %p313
        %p521 = pneg %p337
        %p522 = pneg %p334
        %p523 = pneg %p358
        %p524 = pneg %p355
        %p525 = pneg %p386
        %p526 = pneg %p383
        %s527 = sand.u32 %s373, 1
        %s528 = scalar_lea.sflag [#allocation7], %s527
        %s529 = sand.u32 %s373, 1
        %s530 = smul.addr %s529, 8
        %s531 = scalar_lea.vmem [#allocation10], %s530
        %p532 = scmp.lt.s32.totalorder %s35, 1
        %s533 = scalar_select %p532, %s35, 1
        %s534 = smul.addr %s533, 2
        %s535 = smul.addr %s534, 8
        %s536 = scalar_lea.vmem %s0, %s535
        %p537 = scmp.eq.s32.totalorder %s36, 0
        // Predicated region
        $region89: #{tpu_custom_call.1} parent=79 // pred_check
          %p538 = pneg %p537
        $region90: #{tpu_custom_call.1} parent=79 // pred_check_branch
          %540 = sbr.rel (%p538) target = $region92
        $region91: #{tpu_custom_call.1} parent=79 // pred_region
          loop: start=0, step=1, limit=2
          $region93: #{tpu_custom_call.1} parent=91 // loop_pre_header
            _
          $region94: #{tpu_custom_call.1} parent=91 // loop_header
            %s542 = sphi 0, %s546
            %p543 = scmp.ge.s32.totalorder %s542, 2
          $region95: #{tpu_custom_call.1} parent=91 // loop_header_branch
            %545 = sbr.rel (%p543) target = $region99
          $region96: #{tpu_custom_call.1} parent=91 // loop_body
            %s547 = smul.u32 %s542, 8
            %s548 = scalar_lea.vmem %s536, %s547
            %v549 = vld [vmem:[%s548] sm:$0xff]
            %v550 = vld [vmem:[%s7] sm:$0x1]
            %v551 = vld [vmem:[%s8] sm:$0x1]
            %vm552 = vcmask 261120
            %v553 = vsel %vm552, %v549, 0.0
            %554 = vadd.xlane.f32.xlu0 %v553
            %v555 = vpop.xlane.xlu0 %554
            %v556 = vrcp.pop 32.0
            %v557 = vmul.f32 %v555, %v556
            %v558 = vsub.f32 %v549, %v557
            %v559 = vmul.f32 %v558, %v558
            %v560 = vsel %vm552, %v559, 0.0
            %561 = vadd.xlane.f32.xlu0 %v560
            %v562 = vpop.xlane.xlu0 %561
            %v563 = vmul.f32 %v562, %v556
            %v564 = vadd.f32 %v563, 1e-06
            %v565 = vrsqrt.pop %v564
            %v566 = vmul.f32 %v564, %v565
            %vm567 = vcmp.eq.f32.partialorder %v564, inf
            %v568 = vsel %vm567, %v564, %v566
            %vm569 = vcmp.eq.f32.partialorder %v564, 0.0
            %v570 = vand.u32 %v564, 2147483648
            %v571 = vsel %vm569, %v570, %v568
            %v572 = vrcp.pop %v571
            %v573 = vmul.f32 %v558, %v572
            %v575 = vlaneseq
            %v576 = vshrl.u32 %v575, 7
            %v577 = vsub.s32 0, %v576
            %v578 = vrot.slane %v550, %v577
            %v580 = vmul.f32 %v573, %v578
            %v582 = vlaneseq
            %v583 = vshrl.u32 %v582, 7
            %v584 = vsub.s32 0, %v583
            %v585 = vrot.slane %v551, %v584
            %v587 = vadd.f32 %v580, %v585
            %v588 = vld [vmem:[%s3] sm:$0xff]
            %v589 = vld [vmem:[%s3 + $0x8] sm:$0xff]
            %v590 = vld [vmem:[%s3 + $0x10] sm:$0xff]
            %v591 = vld [vmem:[%s3 + $0x18] sm:$0xff]
            %v592 = vld [vmem:[%s4] sm:$0x1]
            %v594 = vlaneseq
            %v595 = vshrl.u32 %v594, 7
            %v596 = vsub.s32 0, %v595
            %v597 = vrot.slane %v592, %v596
            %v600 = vsel %vm552, %v587, 0
            %602 = vmatprep.subr.mxu0 0.0
            %603 = vmatpush1.msra.mxu0 %v588
            %604 = vmatprep.subr.mxu0 0.0
            %605 = vmatpush1.msra.mxu0 %v589
            %606 = vmatprep.subr.mxu0 0.0
            %607 = vmatpush1.msra.mxu0 %v590
            %608 = vmatprep.subr.mxu0 0.0
            %609 = vmatpush1.msra.mxu0 %v591
            %610 = vmatprep.subr.mxu0 0.0
            %611 = vmatpush1.msra.mxu0 0.0
            %612 = vmatprep.subr.mxu0 0.0
            %613 = vmatpush1.msra.mxu0 0.0
            %614 = vmatprep.subr.mxu0 0.0
            %615 = vmatpush1.msra.mxu0 0.0
            %616 = vmatprep.subr.mxu0 0.0
            %617 = vmatpush1.msra.mxu0 0.0
            %618 = vmatprep.subr.mxu0 0.0
            %619 = vmatpush1.msra.mxu0 0.0
            %620 = vmatprep.subr.mxu0 0.0
            %621 = vmatpush1.msra.mxu0 0.0
            %622 = vmatprep.subr.mxu0 0.0
            %623 = vmatpush1.msra.mxu0 0.0
            %624 = vmatprep.subr.mxu0 0.0
            %625 = vmatpush1.msra.mxu0 0.0
            %626 = vmatprep.subr.mxu0 0.0
            %627 = vmatpush1.msra.mxu0 0.0
            %628 = vmatprep.subr.mxu0 0.0
            %629 = vmatpush1.msra.mxu0 0.0
            %630 = vmatprep.subr.mxu0 0.0
            %631 = vmatpush1.msra.mxu0 0.0
            %632 = vmatprep.subr.mxu0 0.0
            %633 = vmatpush1.msra.mxu0 0.0
            %634 = vmatprep.subr.mxu0 0.0
            %635 = vmatpush1.msra.mxu0 0.0
            %636 = vmatprep.subr.mxu0 0.0
            %637 = vmatpush1.msra.mxu0 0.0
            %638 = vmatprep.subr.mxu0 0.0
            %639 = vmatpush1.msra.mxu0 0.0
            %640 = vmatprep.subr.mxu0 0.0
            %641 = vmatpush1.msra.mxu0 0.0
            %642 = vmatprep.subr.mxu0 0.0
            %643 = vmatpush1.msra.mxu0 0.0
            %644 = vmatprep.subr.mxu0 0.0
            %645 = vmatpush1.msra.mxu0 0.0
            %646 = vmatprep.subr.mxu0 0.0
            %647 = vmatpush1.msra.mxu0 0.0
            %648 = vmatprep.subr.mxu0 0.0
            %649 = vmatpush1.msra.mxu0 0.0
            %650 = vmatprep.subr.mxu0 0.0
            %651 = vmatpush1.msra.mxu0 0.0
            %652 = vmatprep.subr.mxu0 0.0
            %653 = vmatpush1.msra.mxu0 0.0
            %654 = vmatprep.subr.mxu0 0.0
            %655 = vmatpush1.msra.mxu0 0.0
            %656 = vmatprep.subr.mxu0 0.0
            %657 = vmatpush1.msra.mxu0 0.0
            %658 = vmatprep.subr.mxu0 0.0
            %659 = vmatpush1.msra.mxu0 0.0
            %660 = vmatprep.subr.mxu0 0.0
            %661 = vmatpush1.msra.mxu0 0.0
            %662 = vmatprep.subr.mxu0 0.0
            %663 = vmatpush1.msra.mxu0 0.0
            %664 = vmatprep.subr.mxu0 0.0
            %665 = vmatpush1.msra.mxu0 0.0
            %666 = vmatprep.mubr.f32.mxu0 0.0
            %667 = vmatmul.mubr.f32.gmra.mrb[0].mxu0 %v600
            %v668 = vpop.f32.mrb[0].mxu0
            %v669 = vadd.f32 %v597, %v668
            %v670 = vpop.f32.mrb[0].mxu0
            %671 = vdwg.mxu0
            %s672 = scalar_lea.vmem [#allocation2], %s547
            %673 = vst.msk [vmem:[%s672] sm:$0xff] %vm552, %v669
            %675 = vrot.lane.b32.xlu0 %v669, 96
            %v676 = vpop.permute.xlu0 %675
            %s678 = scalar_lea.vmem [#allocation3], %s547
            %679 = vst.msk [vmem:[%s678] sm:$0xff] %vm552, %v676
          $region97: #{tpu_custom_call.1} parent=91 // loop_footer
            %s546 = sadd.s32 1, %s542
          $region98: #{tpu_custom_call.1} parent=91 // loop_footer_branch
            %541 = sbr.rel target = $region94
          $region99: #{tpu_custom_call.1} parent=91 // loop_exit
            _
        $region92: #{tpu_custom_call.1} parent=79 // pred_fallthru
          _
        %s680 = smul.u32 %s36, 8
        %s681 = scalar_lea.vmem %s536, %s680
        %v682 = vld [vmem:[%s681] sm:$0xff]
        %v683 = vld [vmem:[%s7] sm:$0x1]
        %v684 = vld [vmem:[%s8] sm:$0x1]
        %vm685 = vcmask 261120
        %v686 = vsel %vm685, %v682, 0.0
        %687 = vadd.xlane.f32.xlu0 %v686
        %v688 = vpop.xlane.xlu0 %687
        %v689 = vrcp.pop 32.0
        %v690 = vmul.f32 %v688, %v689
        %v691 = vsub.f32 %v682, %v690
        %v692 = vmul.f32 %v691, %v691
        %v693 = vsel %vm685, %v692, 0.0
        %694 = vadd.xlane.f32.xlu0 %v693
        %v695 = vpop.xlane.xlu0 %694
        %v696 = vmul.f32 %v695, %v689
        %v697 = vadd.f32 %v696, 1e-06
        %v698 = vrsqrt.pop %v697
        %v699 = vmul.f32 %v697, %v698
        %vm700 = vcmp.eq.f32.partialorder %v697, inf
        %v701 = vsel %vm700, %v697, %v699
        %vm702 = vcmp.eq.f32.partialorder %v697, 0.0
        %v703 = vand.u32 %v697, 2147483648
        %v704 = vsel %vm702, %v703, %v701
        %v705 = vrcp.pop %v704
        %v706 = vmul.f32 %v691, %v705
        %v708 = vlaneseq
        %v709 = vshrl.u32 %v708, 7
        %v710 = vsub.s32 0, %v709
        %v711 = vrot.slane %v683, %v710
        %v713 = vmul.f32 %v706, %v711
        %v715 = vlaneseq
        %v716 = vshrl.u32 %v715, 7
        %v717 = vsub.s32 0, %v716
        %v718 = vrot.slane %v684, %v717
        %v720 = vadd.f32 %v713, %v718
        %v721 = vld [vmem:[%s1] sm:$0xff]
        %v722 = vld [vmem:[%s1 + $0x8] sm:$0xff]
        %v723 = vld [vmem:[%s1 + $0x10] sm:$0xff]
        %v724 = vld [vmem:[%s1 + $0x18] sm:$0xff]
        %v725 = vld [vmem:[%s2] sm:$0x1]
        %v727 = vlaneseq
        %v728 = vshrl.u32 %v727, 7
        %v729 = vsub.s32 0, %v728
        %v730 = vrot.slane %v725, %v729
        %v733 = vsel %vm685, %v720, 0
        %735 = vmatprep.subr.mxu0 0.0
        %736 = vmatpush1.msra.mxu0 %v721
        %737 = vmatprep.subr.mxu0 0.0
        %738 = vmatpush1.msra.mxu0 %v722
        %739 = vmatprep.subr.mxu0 0.0
        %740 = vmatpush1.msra.mxu0 %v723
        %741 = vmatprep.subr.mxu0 0.0
        %742 = vmatpush1.msra.mxu0 %v724
        %743 = vmatprep.subr.mxu0 0.0
        %744 = vmatpush1.msra.mxu0 0.0
        %745 = vmatprep.subr.mxu0 0.0
        %746 = vmatpush1.msra.mxu0 0.0
        %747 = vmatprep.subr.mxu0 0.0
        %748 = vmatpush1.msra.mxu0 0.0
        %749 = vmatprep.subr.mxu0 0.0
        %750 = vmatpush1.msra.mxu0 0.0
        %751 = vmatprep.subr.mxu0 0.0
        %752 = vmatpush1.msra.mxu0 0.0
        %753 = vmatprep.subr.mxu0 0.0
        %754 = vmatpush1.msra.mxu0 0.0
        %755 = vmatprep.subr.mxu0 0.0
        %756 = vmatpush1.msra.mxu0 0.0
        %757 = vmatprep.subr.mxu0 0.0
        %758 = vmatpush1.msra.mxu0 0.0
        %759 = vmatprep.subr.mxu0 0.0
        %760 = vmatpush1.msra.mxu0 0.0
        %761 = vmatprep.subr.mxu0 0.0
        %762 = vmatpush1.msra.mxu0 0.0
        %763 = vmatprep.subr.mxu0 0.0
        %764 = vmatpush1.msra.mxu0 0.0
        %765 = vmatprep.subr.mxu0 0.0
        %766 = vmatpush1.msra.mxu0 0.0
        %767 = vmatprep.subr.mxu0 0.0
        %768 = vmatpush1.msra.mxu0 0.0
        %769 = vmatprep.subr.mxu0 0.0
        %770 = vmatpush1.msra.mxu0 0.0
        %771 = vmatprep.subr.mxu0 0.0
        %772 = vmatpush1.msra.mxu0 0.0
        %773 = vmatprep.subr.mxu0 0.0
        %774 = vmatpush1.msra.mxu0 0.0
        %775 = vmatprep.subr.mxu0 0.0
        %776 = vmatpush1.msra.mxu0 0.0
        %777 = vmatprep.subr.mxu0 0.0
        %778 = vmatpush1.msra.mxu0 0.0
        %779 = vmatprep.subr.mxu0 0.0
        %780 = vmatpush1.msra.mxu0 0.0
        %781 = vmatprep.subr.mxu0 0.0
        %782 = vmatpush1.msra.mxu0 0.0
        %783 = vmatprep.subr.mxu0 0.0
        %784 = vmatpush1.msra.mxu0 0.0
        %785 = vmatprep.subr.mxu0 0.0
        %786 = vmatpush1.msra.mxu0 0.0
        %787 = vmatprep.subr.mxu0 0.0
        %788 = vmatpush1.msra.mxu0 0.0
        %789 = vmatprep.subr.mxu0 0.0
        %790 = vmatpush1.msra.mxu0 0.0
        %791 = vmatprep.subr.mxu0 0.0
        %792 = vmatpush1.msra.mxu0 0.0
        %793 = vmatprep.subr.mxu0 0.0
        %794 = vmatpush1.msra.mxu0 0.0
        %795 = vmatprep.subr.mxu0 0.0
        %796 = vmatpush1.msra.mxu0 0.0
        %797 = vmatprep.subr.mxu0 0.0
        %798 = vmatpush1.msra.mxu0 0.0
        %799 = vmatprep.mubr.f32.mxu0 0.0
        %800 = vmatmul.mubr.f32.gmra.mrb[0].mxu0 %v733
        %v801 = vpop.f32.mrb[0].mxu0
        %v802 = vadd.f32 %v730, %v801
        %v803 = vpop.f32.mrb[0].mxu0
        %804 = vdwg.mxu0
        %v805 = vld [vmem:[#allocation2] sm:$0xff]
        %v806 = vld [vmem:[#allocation2 + $0x8] sm:$0xff]
        %v807 = vld [vmem:[#allocation3] sm:$0xff]
        %v808 = vld [vmem:[#allocation3 + $0x8] sm:$0xff]
        %vm809 = vcmask 64512
        %v811 = vsel %vm809, %v802, 0
        %v814 = vsel %vm809, %v805, 0
        %v817 = vsel %vm809, %v806, 0
        %819 = vmatprep.subr.mxu0 0.0
        %820 = vmatpush1.xpose.msra.mxu0 %v814
        %821 = vmatprep.subr.mxu0 0.0
        %822 = vmatpush1.xpose.msra.mxu0 %v817
        %823 = vmatprep.subr.mxu0 0.0
        %824 = vmatpush1.xpose.msra.mxu0 0.0
        %825 = vmatprep.subr.mxu0 0.0
        %826 = vmatpush1.xpose.msra.mxu0 0.0
        %827 = vmatprep.subr.mxu0 0.0
        %828 = vmatpush1.xpose.msra.mxu0 0.0
        %829 = vmatprep.subr.mxu0 0.0
        %830 = vmatpush1.xpose.msra.mxu0 0.0
        %831 = vmatprep.subr.mxu0 0.0
        %832 = vmatpush1.xpose.msra.mxu0 0.0
        %833 = vmatprep.subr.mxu0 0.0
        %834 = vmatpush1.xpose.msra.mxu0 0.0
        %835 = vmatprep.subr.mxu0 0.0
        %836 = vmatpush1.xpose.msra.mxu0 0.0
        %837 = vmatprep.subr.mxu0 0.0
        %838 = vmatpush1.xpose.msra.mxu0 0.0
        %839 = vmatprep.subr.mxu0 0.0
        %840 = vmatpush1.xpose.msra.mxu0 0.0
        %841 = vmatprep.subr.mxu0 0.0
        %842 = vmatpush1.xpose.msra.mxu0 0.0
        %843 = vmatprep.subr.mxu0 0.0
        %844 = vmatpush1.xpose.msra.mxu0 0.0
        %845 = vmatprep.subr.mxu0 0.0
        %846 = vmatpush1.xpose.msra.mxu0 0.0
        %847 = vmatprep.subr.mxu0 0.0
        %848 = vmatpush1.xpose.msra.mxu0 0.0
        %849 = vmatprep.subr.mxu0 0.0
        %850 = vmatpush1.xpose.msra.mxu0 0.0
        %851 = vmatprep.subr.mxu0 0.0
        %852 = vmatpush1.xpose.msra.mxu0 0.0
        %853 = vmatprep.subr.mxu0 0.0
        %854 = vmatpush1.xpose.msra.mxu0 0.0
        %855 = vmatprep.subr.mxu0 0.0
        %856 = vmatpush1.xpose.msra.mxu0 0.0
        %857 = vmatprep.subr.mxu0 0.0
        %858 = vmatpush1.xpose.msra.mxu0 0.0
        %859 = vmatprep.subr.mxu0 0.0
        %860 = vmatpush1.xpose.msra.mxu0 0.0
        %861 = vmatprep.subr.mxu0 0.0
        %862 = vmatpush1.xpose.msra.mxu0 0.0
        %863 = vmatprep.subr.mxu0 0.0
        %864 = vmatpush1.xpose.msra.mxu0 0.0
        %865 = vmatprep.subr.mxu0 0.0
        %866 = vmatpush1.xpose.msra.mxu0 0.0
        %867 = vmatprep.subr.mxu0 0.0
        %868 = vmatpush1.xpose.msra.mxu0 0.0
        %869 = vmatprep.subr.mxu0 0.0
        %870 = vmatpush1.xpose.msra.mxu0 0.0
        %871 = vmatprep.subr.mxu0 0.0
        %872 = vmatpush1.xpose.msra.mxu0 0.0
        %873 = vmatprep.subr.mxu0 0.0
        %874 = vmatpush1.xpose.msra.mxu0 0.0
        %875 = vmatprep.subr.mxu0 0.0
        %876 = vmatpush1.xpose.msra.mxu0 0.0
        %877 = vmatprep.subr.mxu0 0.0
        %878 = vmatpush1.xpose.msra.mxu0 0.0
        %879 = vmatprep.subr.mxu0 0.0
        %880 = vmatpush1.xpose.msra.mxu0 0.0
        %881 = vmatprep.subr.mxu0 0.0
        %882 = vmatpush1.xpose.msra.mxu0 0.0
        %883 = vmatprep.mubr.f32.mxu0 0.0
        %884 = vmatmul.mubr.f32.gmra.mrb[0].mxu0 %v811
        %v885 = vpop.f32.mrb[0].mxu0
        %v886 = vadd.f32 0.0, %v885
        %v887 = vpop.f32.mrb[0].mxu0
        %888 = vdwg.mxu0
        %v889 = vmul.f32 %v886, 0.35355338
        %vm890 = vcmask 130048
        %v891 = vsel %vm890, %v889, -inf
        %892 = vmax.xlane.f32.xlu0 %v891
        %v893 = vpop.xlane.xlu0 %892
        %v894 = vsub.f32 %v889, %v893
        %v895 = vmul.f32 %v894, 1.442695
        %v896 = vpow.pop %v895
        %v897 = vsel %vm890, %v896, 0.0
        %898 = vadd.xlane.f32.xlu0 %v897
        %v899 = vpop.xlane.xlu0 %898
        %v901 = vsel %vm890, %v896, 0
        %903 = vmatprep.subr.mxu0 0.0
        %904 = vmatpush1.msra.mxu0 %v807
        %905 = vmatprep.subr.mxu0 0.0
        %906 = vmatpush1.msra.mxu0 %v808
        %907 = vmatprep.subr.mxu0 0.0
        %908 = vmatpush1.msra.mxu0 0.0
        %909 = vmatprep.subr.mxu0 0.0
        %910 = vmatpush1.msra.mxu0 0.0
        %911 = vmatprep.subr.mxu0 0.0
        %912 = vmatpush1.msra.mxu0 0.0
        %913 = vmatprep.subr.mxu0 0.0
        %914 = vmatpush1.msra.mxu0 0.0
        %915 = vmatprep.subr.mxu0 0.0
        %916 = vmatpush1.msra.mxu0 0.0
        %917 = vmatprep.subr.mxu0 0.0
        %918 = vmatpush1.msra.mxu0 0.0
        %919 = vmatprep.subr.mxu0 0.0
        %920 = vmatpush1.msra.mxu0 0.0
        %921 = vmatprep.subr.mxu0 0.0
        %922 = vmatpush1.msra.mxu0 0.0
        %923 = vmatprep.subr.mxu0 0.0
        %924 = vmatpush1.msra.mxu0 0.0
        %925 = vmatprep.subr.mxu0 0.0
        %926 = vmatpush1.msra.mxu0 0.0
        %927 = vmatprep.subr.mxu0 0.0
        %928 = vmatpush1.msra.mxu0 0.0
        %929 = vmatprep.subr.mxu0 0.0
        %930 = vmatpush1.msra.mxu0 0.0
        %931 = vmatprep.subr.mxu0 0.0
        %932 = vmatpush1.msra.mxu0 0.0
        %933 = vmatprep.subr.mxu0 0.0
        %934 = vmatpush1.msra.mxu0 0.0
        %935 = vmatprep.subr.mxu0 0.0
        %936 = vmatpush1.msra.mxu0 0.0
        %937 = vmatprep.subr.mxu0 0.0
        %938 = vmatpush1.msra.mxu0 0.0
        %939 = vmatprep.subr.mxu0 0.0
        %940 = vmatpush1.msra.mxu0 0.0
        %941 = vmatprep.subr.mxu0 0.0
        %942 = vmatpush1.msra.mxu0 0.0
        %943 = vmatprep.subr.mxu0 0.0
        %944 = vmatpush1.msra.mxu0 0.0
        %945 = vmatprep.subr.mxu0 0.0
        %946 = vmatpush1.msra.mxu0 0.0
        %947 = vmatprep.subr.mxu0 0.0
        %948 = vmatpush1.msra.mxu0 0.0
        %949 = vmatprep.subr.mxu0 0.0
        %950 = vmatpush1.msra.mxu0 0.0
        %951 = vmatprep.subr.mxu0 0.0
        %952 = vmatpush1.msra.mxu0 0.0
        %953 = vmatprep.subr.mxu0 0.0
        %954 = vmatpush1.msra.mxu0 0.0
        %955 = vmatprep.subr.mxu0 0.0
        %956 = vmatpush1.msra.mxu0 0.0
        %957 = vmatprep.subr.mxu0 0.0
        %958 = vmatpush1.msra.mxu0 0.0
        %959 = vmatprep.subr.mxu0 0.0
        %960 = vmatpush1.msra.mxu0 0.0
        %961 = vmatprep.subr.mxu0 0.0
        %962 = vmatpush1.msra.mxu0 0.0
        %963 = vmatprep.subr.mxu0 0.0
        %964 = vmatpush1.msra.mxu0 0.0
        %965 = vmatprep.subr.mxu0 0.0
        %966 = vmatpush1.msra.mxu0 0.0
        %967 = vmatprep.mubr.f32.mxu0 0.0
        %968 = vmatmul.mubr.f32.gmra.mrb[0].mxu0 %v901
        %v969 = vpop.f32.mrb[0].mxu0
        %v970 = vadd.f32 0.0, %v969
        %v971 = vpop.f32.mrb[0].mxu0
        %972 = vdwg.mxu0
        %v973 = vrcp.pop %v899
        %v974 = vmul.f32 %v970, %v973
        %975 = vst.msk [vmem:[#allocation4] sm:$0xff] %vm809, %v974
        %v976 = vld [vmem:[#allocation2] sm:$0xff]
        %v977 = vld [vmem:[#allocation2 + $0x8] sm:$0xff]
        %v978 = vld [vmem:[#allocation3] sm:$0xff]
        %v979 = vld [vmem:[#allocation3 + $0x8] sm:$0xff]
        %980 = vrot.lane.b32.xlu0 %v802, 120
        %v981 = vpop.permute.xlu0 %980
        %984 = vrot.lane.b32.xlu0 %v976, 120
        %v985 = vpop.permute.xlu0 %984
        %986 = vrot.lane.b32.xlu0 %v977, 120
        %v987 = vpop.permute.xlu0 %986
        %v988 = vsel %vm809, %v981, 0
        %v990 = vsel %vm809, %v985, 0
        %v992 = vsel %vm809, %v987, 0
        %994 = vmatprep.subr.mxu0 0.0
        %995 = vmatpush1.xpose.msra.mxu0 %v990
        %996 = vmatprep.subr.mxu0 0.0
        %997 = vmatpush1.xpose.msra.mxu0 %v992
        %998 = vmatprep.subr.mxu0 0.0
        %999 = vmatpush1.xpose.msra.mxu0 0.0
        %1000 = vmatprep.subr.mxu0 0.0
        %1001 = vmatpush1.xpose.msra.mxu0 0.0
        %1002 = vmatprep.subr.mxu0 0.0
        %1003 = vmatpush1.xpose.msra.mxu0 0.0
        %1004 = vmatprep.subr.mxu0 0.0
        %1005 = vmatpush1.xpose.msra.mxu0 0.0
        %1006 = vmatprep.subr.mxu0 0.0
        %1007 = vmatpush1.xpose.msra.mxu0 0.0
        %1008 = vmatprep.subr.mxu0 0.0
        %1009 = vmatpush1.xpose.msra.mxu0 0.0
        %1010 = vmatprep.subr.mxu0 0.0
        %1011 = vmatpush1.xpose.msra.mxu0 0.0
        %1012 = vmatprep.subr.mxu0 0.0
        %1013 = vmatpush1.xpose.msra.mxu0 0.0
        %1014 = vmatprep.subr.mxu0 0.0
        %1015 = vmatpush1.xpose.msra.mxu0 0.0
        %1016 = vmatprep.subr.mxu0 0.0
        %1017 = vmatpush1.xpose.msra.mxu0 0.0
        %1018 = vmatprep.subr.mxu0 0.0
        %1019 = vmatpush1.xpose.msra.mxu0 0.0
        %1020 = vmatprep.subr.mxu0 0.0
        %1021 = vmatpush1.xpose.msra.mxu0 0.0
        %1022 = vmatprep.subr.mxu0 0.0
        %1023 = vmatpush1.xpose.msra.mxu0 0.0
        %1024 = vmatprep.subr.mxu0 0.0
        %1025 = vmatpush1.xpose.msra.mxu0 0.0
        %1026 = vmatprep.subr.mxu0 0.0
        %1027 = vmatpush1.xpose.msra.mxu0 0.0
        %1028 = vmatprep.subr.mxu0 0.0
        %1029 = vmatpush1.xpose.msra.mxu0 0.0
        %1030 = vmatprep.subr.mxu0 0.0
        %1031 = vmatpush1.xpose.msra.mxu0 0.0
        %1032 = vmatprep.subr.mxu0 0.0
        %1033 = vmatpush1.xpose.msra.mxu0 0.0
        %1034 = vmatprep.subr.mxu0 0.0
        %1035 = vmatpush1.xpose.msra.mxu0 0.0
        %1036 = vmatprep.subr.mxu0 0.0
        %1037 = vmatpush1.xpose.msra.mxu0 0.0
        %1038 = vmatprep.subr.mxu0 0.0
        %1039 = vmatpush1.xpose.msra.mxu0 0.0
        %1040 = vmatprep.subr.mxu0 0.0
        %1041 = vmatpush1.xpose.msra.mxu0 0.0
        %1042 = vmatprep.subr.mxu0 0.0
        %1043 = vmatpush1.xpose.msra.mxu0 0.0
        %1044 = vmatprep.subr.mxu0 0.0
        %1045 = vmatpush1.xpose.msra.mxu0 0.0
        %1046 = vmatprep.subr.mxu0 0.0
        %1047 = vmatpush1.xpose.msra.mxu0 0.0
        %1048 = vmatprep.subr.mxu0 0.0
        %1049 = vmatpush1.xpose.msra.mxu0 0.0
        %1050 = vmatprep.subr.mxu0 0.0
        %1051 = vmatpush1.xpose.msra.mxu0 0.0
        %1052 = vmatprep.subr.mxu0 0.0
        %1053 = vmatpush1.xpose.msra.mxu0 0.0
        %1054 = vmatprep.subr.mxu0 0.0
        %1055 = vmatpush1.xpose.msra.mxu0 0.0
        %1056 = vmatprep.subr.mxu0 0.0
        %1057 = vmatpush1.xpose.msra.mxu0 0.0
        %1058 = vmatprep.mubr.f32.mxu0 0.0
        %1059 = vmatmul.mubr.f32.gmra.mrb[0].mxu0 %v988
        %v1060 = vpop.f32.mrb[0].mxu0
        %v1061 = vadd.f32 0.0, %v1060
        %v1062 = vpop.f32.mrb[0].mxu0
        %1063 = vdwg.mxu0
        %v1064 = vmul.f32 %v1061, 0.35355338
        %v1065 = vsel %vm890, %v1064, -inf
        %1066 = vmax.xlane.f32.xlu0 %v1065
        %v1067 = vpop.xlane.xlu0 %1066
        %v1068 = vsub.f32 %v1064, %v1067
        %v1069 = vmul.f32 %v1068, 1.442695
        %v1070 = vpow.pop %v1069
        %v1071 = vsel %vm890, %v1070, 0.0
        %1072 = vadd.xlane.f32.xlu0 %v1071
        %v1073 = vpop.xlane.xlu0 %1072
        %1076 = vrot.lane.b32.xlu0 %v978, 120
        %v1077 = vpop.permute.xlu0 %1076
        %1078 = vrot.lane.b32.xlu0 %v979, 120
        %v1079 = vpop.permute.xlu0 %1078
        %v1083 = vsel %vm890, %v1070, 0
        %1085 = vmatprep.subr.mxu0 0.0
        %1086 = vmatpush1.msra.mxu0 %v1077
        %1087 = vmatprep.subr.mxu0 0.0
        %1088 = vmatpush1.msra.mxu0 %v1079
        %1089 = vmatprep.subr.mxu0 0.0
        %1090 = vmatpush1.msra.mxu0 0.0
        %1091 = vmatprep.subr.mxu0 0.0
        %1092 = vmatpush1.msra.mxu0 0.0
        %1093 = vmatprep.subr.mxu0 0.0
        %1094 = vmatpush1.msra.mxu0 0.0
        %1095 = vmatprep.subr.mxu0 0.0
        %1096 = vmatpush1.msra.mxu0 0.0
        %1097 = vmatprep.subr.mxu0 0.0
        %1098 = vmatpush1.msra.mxu0 0.0
        %1099 = vmatprep.subr.mxu0 0.0
        %1100 = vmatpush1.msra.mxu0 0.0
        %1101 = vmatprep.subr.mxu0 0.0
        %1102 = vmatpush1.msra.mxu0 0.0
        %1103 = vmatprep.subr.mxu0 0.0
        %1104 = vmatpush1.msra.mxu0 0.0
        %1105 = vmatprep.subr.mxu0 0.0
        %1106 = vmatpush1.msra.mxu0 0.0
        %1107 = vmatprep.subr.mxu0 0.0
        %1108 = vmatpush1.msra.mxu0 0.0
        %1109 = vmatprep.subr.mxu0 0.0
        %1110 = vmatpush1.msra.mxu0 0.0
        %1111 = vmatprep.subr.mxu0 0.0
        %1112 = vmatpush1.msra.mxu0 0.0
        %1113 = vmatprep.subr.mxu0 0.0
        %1114 = vmatpush1.msra.mxu0 0.0
        %1115 = vmatprep.subr.mxu0 0.0
        %1116 = vmatpush1.msra.mxu0 0.0
        %1117 = vmatprep.subr.mxu0 0.0
        %1118 = vmatpush1.msra.mxu0 0.0
        %1119 = vmatprep.subr.mxu0 0.0
        %1120 = vmatpush1.msra.mxu0 0.0
        %1121 = vmatprep.subr.mxu0 0.0
        %1122 = vmatpush1.msra.mxu0 0.0
        %1123 = vmatprep.subr.mxu0 0.0
        %1124 = vmatpush1.msra.mxu0 0.0
        %1125 = vmatprep.subr.mxu0 0.0
        %1126 = vmatpush1.msra.mxu0 0.0
        %1127 = vmatprep.subr.mxu0 0.0
        %1128 = vmatpush1.msra.mxu0 0.0
        %1129 = vmatprep.subr.mxu0 0.0
        %1130 = vmatpush1.msra.mxu0 0.0
        %1131 = vmatprep.subr.mxu0 0.0
        %1132 = vmatpush1.msra.mxu0 0.0
        %1133 = vmatprep.subr.mxu0 0.0
        %1134 = vmatpush1.msra.mxu0 0.0
        %1135 = vmatprep.subr.mxu0 0.0
        %1136 = vmatpush1.msra.mxu0 0.0
        %1137 = vmatprep.subr.mxu0 0.0
        %1138 = vmatpush1.msra.mxu0 0.0
        %1139 = vmatprep.subr.mxu0 0.0
        %1140 = vmatpush1.msra.mxu0 0.0
        %1141 = vmatprep.subr.mxu0 0.0
        %1142 = vmatpush1.msra.mxu0 0.0
        %1143 = vmatprep.subr.mxu0 0.0
        %1144 = vmatpush1.msra.mxu0 0.0
        %1145 = vmatprep.subr.mxu0 0.0
        %1146 = vmatpush1.msra.mxu0 0.0
        %1147 = vmatprep.subr.mxu0 0.0
        %1148 = vmatpush1.msra.mxu0 0.0
        %1149 = vmatprep.mubr.f32.mxu0 0.0
        %1150 = vmatmul.mubr.f32.gmra.mrb[0].mxu0 %v1083
        %v1151 = vpop.f32.mrb[0].mxu0
        %v1152 = vadd.f32 0.0, %v1151
        %v1153 = vpop.f32.mrb[0].mxu0
        %1154 = vdwg.mxu0
        %v1155 = vrcp.pop %v1073
        %v1156 = vmul.f32 %v1152, %v1155
        %1158 = vrot.lane.b32.xlu0 %v1156, 8
        %v1159 = vpop.permute.xlu0 %1158
        %vm1161 = vcmask 130112
        %1162 = vst.msk [vmem:[#allocation4] sm:$0xff] %vm1161, %v1159
        %v1163 = vld [vmem:[#allocation2] sm:$0xff]
        %v1164 = vld [vmem:[#allocation2 + $0x8] sm:$0xff]
        %v1165 = vld [vmem:[#allocation3] sm:$0xff]
        %v1166 = vld [vmem:[#allocation3 + $0x8] sm:$0xff]
        %1167 = vrot.lane.b32.xlu0 %v802, 112
        %v1168 = vpop.permute.xlu0 %1167
        %1171 = vrot.lane.b32.xlu0 %v1163, 112
        %v1172 = vpop.permute.xlu0 %1171
        %1173 = vrot.lane.b32.xlu0 %v1164, 112
        %v1174 = vpop.permute.xlu0 %1173
        %v1175 = vsel %vm809, %v1168, 0
        %v1177 = vsel %vm809, %v1172, 0
        %v1179 = vsel %vm809, %v1174, 0
        %1181 = vmatprep.subr.mxu0 0.0
        %1182 = vmatpush1.xpose.msra.mxu0 %v1177
        %1183 = vmatprep.subr.mxu0 0.0
        %1184 = vmatpush1.xpose.msra.mxu0 %v1179
        %1185 = vmatprep.subr.mxu0 0.0
        %1186 = vmatpush1.xpose.msra.mxu0 0.0
        %1187 = vmatprep.subr.mxu0 0.0
        %1188 = vmatpush1.xpose.msra.mxu0 0.0
        %1189 = vmatprep.subr.mxu0 0.0
        %1190 = vmatpush1.xpose.msra.mxu0 0.0
        %1191 = vmatprep.subr.mxu0 0.0
        %1192 = vmatpush1.xpose.msra.mxu0 0.0
        %1193 = vmatprep.subr.mxu0 0.0
        %1194 = vmatpush1.xpose.msra.mxu0 0.0
        %1195 = vmatprep.subr.mxu0 0.0
        %1196 = vmatpush1.xpose.msra.mxu0 0.0
        %1197 = vmatprep.subr.mxu0 0.0
        %1198 = vmatpush1.xpose.msra.mxu0 0.0
        %1199 = vmatprep.subr.mxu0 0.0
        %1200 = vmatpush1.xpose.msra.mxu0 0.0
        %1201 = vmatprep.subr.mxu0 0.0
        %1202 = vmatpush1.xpose.msra.mxu0 0.0
        %1203 = vmatprep.subr.mxu0 0.0
        %1204 = vmatpush1.xpose.msra.mxu0 0.0
        %1205 = vmatprep.subr.mxu0 0.0
        %1206 = vmatpush1.xpose.msra.mxu0 0.0
        %1207 = vmatprep.subr.mxu0 0.0
        %1208 = vmatpush1.xpose.msra.mxu0 0.0
        %1209 = vmatprep.subr.mxu0 0.0
        %1210 = vmatpush1.xpose.msra.mxu0 0.0
        %1211 = vmatprep.subr.mxu0 0.0
        %1212 = vmatpush1.xpose.msra.mxu0 0.0
        %1213 = vmatprep.subr.mxu0 0.0
        %1214 = vmatpush1.xpose.msra.mxu0 0.0
        %1215 = vmatprep.subr.mxu0 0.0
        %1216 = vmatpush1.xpose.msra.mxu0 0.0
        %1217 = vmatprep.subr.mxu0 0.0
        %1218 = vmatpush1.xpose.msra.mxu0 0.0
        %1219 = vmatprep.subr.mxu0 0.0
        %1220 = vmatpush1.xpose.msra.mxu0 0.0
        %1221 = vmatprep.subr.mxu0 0.0
        %1222 = vmatpush1.xpose.msra.mxu0 0.0
        %1223 = vmatprep.subr.mxu0 0.0
        %1224 = vmatpush1.xpose.msra.mxu0 0.0
        %1225 = vmatprep.subr.mxu0 0.0
        %1226 = vmatpush1.xpose.msra.mxu0 0.0
        %1227 = vmatprep.subr.mxu0 0.0
        %1228 = vmatpush1.xpose.msra.mxu0 0.0
        %1229 = vmatprep.subr.mxu0 0.0
        %1230 = vmatpush1.xpose.msra.mxu0 0.0
        %1231 = vmatprep.subr.mxu0 0.0
        %1232 = vmatpush1.xpose.msra.mxu0 0.0
        %1233 = vmatprep.subr.mxu0 0.0
        %1234 = vmatpush1.xpose.msra.mxu0 0.0
        %1235 = vmatprep.subr.mxu0 0.0
        %1236 = vmatpush1.xpose.msra.mxu0 0.0
        %1237 = vmatprep.subr.mxu0 0.0
        %1238 = vmatpush1.xpose.msra.mxu0 0.0
        %1239 = vmatprep.subr.mxu0 0.0
        %1240 = vmatpush1.xpose.msra.mxu0 0.0
        %1241 = vmatprep.subr.mxu0 0.0
        %1242 = vmatpush1.xpose.msra.mxu0 0.0
        %1243 = vmatprep.subr.mxu0 0.0
        %1244 = vmatpush1.xpose.msra.mxu0 0.0
        %1245 = vmatprep.mubr.f32.mxu0 0.0
        %1246 = vmatmul.mubr.f32.gmra.mrb[0].mxu0 %v1175
        %v1247 = vpop.f32.mrb[0].mxu0
        %v1248 = vadd.f32 0.0, %v1247
        %v1249 = vpop.f32.mrb[0].mxu0
        %1250 = vdwg.mxu0
        %v1251 = vmul.f32 %v1248, 0.35355338
        %v1252 = vsel %vm890, %v1251, -inf
        %1253 = vmax.xlane.f32.xlu0 %v1252
        %v1254 = vpop.xlane.xlu0 %1253
        %v1255 = vsub.f32 %v1251, %v1254
        %v1256 = vmul.f32 %v1255, 1.442695
        %v1257 = vpow.pop %v1256
        %v1258 = vsel %vm890, %v1257, 0.0
        %1259 = vadd.xlane.f32.xlu0 %v1258
        %v1260 = vpop.xlane.xlu0 %1259
        %1263 = vrot.lane.b32.xlu0 %v1165, 112
        %v1264 = vpop.permute.xlu0 %1263
        %1265 = vrot.lane.b32.xlu0 %v1166, 112
        %v1266 = vpop.permute.xlu0 %1265
        %v1270 = vsel %vm890, %v1257, 0
        %1272 = vmatprep.subr.mxu0 0.0
        %1273 = vmatpush1.msra.mxu0 %v1264
        %1274 = vmatprep.subr.mxu0 0.0
        %1275 = vmatpush1.msra.mxu0 %v1266
        %1276 = vmatprep.subr.mxu0 0.0
        %1277 = vmatpush1.msra.mxu0 0.0
        %1278 = vmatprep.subr.mxu0 0.0
        %1279 = vmatpush1.msra.mxu0 0.0
        %1280 = vmatprep.subr.mxu0 0.0
        %1281 = vmatpush1.msra.mxu0 0.0
        %1282 = vmatprep.subr.mxu0 0.0
        %1283 = vmatpush1.msra.mxu0 0.0
        %1284 = vmatprep.subr.mxu0 0.0
        %1285 = vmatpush1.msra.mxu0 0.0
        %1286 = vmatprep.subr.mxu0 0.0
        %1287 = vmatpush1.msra.mxu0 0.0
        %1288 = vmatprep.subr.mxu0 0.0
        %1289 = vmatpush1.msra.mxu0 0.0
        %1290 = vmatprep.subr.mxu0 0.0
        %1291 = vmatpush1.msra.mxu0 0.0
        %1292 = vmatprep.subr.mxu0 0.0
        %1293 = vmatpush1.msra.mxu0 0.0
        %1294 = vmatprep.subr.mxu0 0.0
        %1295 = vmatpush1.msra.mxu0 0.0
        %1296 = vmatprep.subr.mxu0 0.0
        %1297 = vmatpush1.msra.mxu0 0.0
        %1298 = vmatprep.subr.mxu0 0.0
        %1299 = vmatpush1.msra.mxu0 0.0
        %1300 = vmatprep.subr.mxu0 0.0
        %1301 = vmatpush1.msra.mxu0 0.0
        %1302 = vmatprep.subr.mxu0 0.0
        %1303 = vmatpush1.msra.mxu0 0.0
        %1304 = vmatprep.subr.mxu0 0.0
        %1305 = vmatpush1.msra.mxu0 0.0
        %1306 = vmatprep.subr.mxu0 0.0
        %1307 = vmatpush1.msra.mxu0 0.0
        %1308 = vmatprep.subr.mxu0 0.0
        %1309 = vmatpush1.msra.mxu0 0.0
        %1310 = vmatprep.subr.mxu0 0.0
        %1311 = vmatpush1.msra.mxu0 0.0
        %1312 = vmatprep.subr.mxu0 0.0
        %1313 = vmatpush1.msra.mxu0 0.0
        %1314 = vmatprep.subr.mxu0 0.0
        %1315 = vmatpush1.msra.mxu0 0.0
        %1316 = vmatprep.subr.mxu0 0.0
        %1317 = vmatpush1.msra.mxu0 0.0
        %1318 = vmatprep.subr.mxu0 0.0
        %1319 = vmatpush1.msra.mxu0 0.0
        %1320 = vmatprep.subr.mxu0 0.0
        %1321 = vmatpush1.msra.mxu0 0.0
        %1322 = vmatprep.subr.mxu0 0.0
        %1323 = vmatpush1.msra.mxu0 0.0
        %1324 = vmatprep.subr.mxu0 0.0
        %1325 = vmatpush1.msra.mxu0 0.0
        %1326 = vmatprep.subr.mxu0 0.0
        %1327 = vmatpush1.msra.mxu0 0.0
        %1328 = vmatprep.subr.mxu0 0.0
        %1329 = vmatpush1.msra.mxu0 0.0
        %1330 = vmatprep.subr.mxu0 0.0
        %1331 = vmatpush1.msra.mxu0 0.0
        %1332 = vmatprep.subr.mxu0 0.0
        %1333 = vmatpush1.msra.mxu0 0.0
        %1334 = vmatprep.subr.mxu0 0.0
        %1335 = vmatpush1.msra.mxu0 0.0
        %1336 = vmatprep.mubr.f32.mxu0 0.0
        %1337 = vmatmul.mubr.f32.gmra.mrb[0].mxu0 %v1270
        %v1338 = vpop.f32.mrb[0].mxu0
        %v1339 = vadd.f32 0.0, %v1338
        %v1340 = vpop.f32.mrb[0].mxu0
        %1341 = vdwg.mxu0
        %v1342 = vrcp.pop %v1260
        %v1343 = vmul.f32 %v1339, %v1342
        %1345 = vrot.lane.b32.xlu0 %v1343, 16
        %v1346 = vpop.permute.xlu0 %1345
        %vm1348 = vcmask 195712
        %1349 = vst.msk [vmem:[#allocation4] sm:$0xff] %vm1348, %v1346
        %v1350 = vld [vmem:[#allocation2] sm:$0xff]
        %v1351 = vld [vmem:[#allocation2 + $0x8] sm:$0xff]
        %v1352 = vld [vmem:[#allocation3] sm:$0xff]
        %v1353 = vld [vmem:[#allocation3 + $0x8] sm:$0xff]
        %1354 = vrot.lane.b32.xlu0 %v802, 104
        %v1355 = vpop.permute.xlu0 %1354
        %1358 = vrot.lane.b32.xlu0 %v1350, 104
        %v1359 = vpop.permute.xlu0 %1358
        %1360 = vrot.lane.b32.xlu0 %v1351, 104
        %v1361 = vpop.permute.xlu0 %1360
        %v1362 = vsel %vm809, %v1355, 0
        %v1364 = vsel %vm809, %v1359, 0
        %v1366 = vsel %vm809, %v1361, 0
        %1368 = vmatprep.subr.mxu0 0.0
        %1369 = vmatpush1.xpose.msra.mxu0 %v1364
        %1370 = vmatprep.subr.mxu0 0.0
        %1371 = vmatpush1.xpose.msra.mxu0 %v1366
        %1372 = vmatprep.subr.mxu0 0.0
        %1373 = vmatpush1.xpose.msra.mxu0 0.0
        %1374 = vmatprep.subr.mxu0 0.0
        %1375 = vmatpush1.xpose.msra.mxu0 0.0
        %1376 = vmatprep.subr.mxu0 0.0
        %1377 = vmatpush1.xpose.msra.mxu0 0.0
        %1378 = vmatprep.subr.mxu0 0.0
        %1379 = vmatpush1.xpose.msra.mxu0 0.0
        %1380 = vmatprep.subr.mxu0 0.0
        %1381 = vmatpush1.xpose.msra.mxu0 0.0
        %1382 = vmatprep.subr.mxu0 0.0
        %1383 = vmatpush1.xpose.msra.mxu0 0.0
        %1384 = vmatprep.subr.mxu0 0.0
        %1385 = vmatpush1.xpose.msra.mxu0 0.0
        %1386 = vmatprep.subr.mxu0 0.0
        %1387 = vmatpush1.xpose.msra.mxu0 0.0
        %1388 = vmatprep.subr.mxu0 0.0
        %1389 = vmatpush1.xpose.msra.mxu0 0.0
        %1390 = vmatprep.subr.mxu0 0.0
        %1391 = vmatpush1.xpose.msra.mxu0 0.0
        %1392 = vmatprep.subr.mxu0 0.0
        %1393 = vmatpush1.xpose.msra.mxu0 0.0
        %1394 = vmatprep.subr.mxu0 0.0
        %1395 = vmatpush1.xpose.msra.mxu0 0.0
        %1396 = vmatprep.subr.mxu0 0.0
        %1397 = vmatpush1.xpose.msra.mxu0 0.0
        %1398 = vmatprep.subr.mxu0 0.0
        %1399 = vmatpush1.xpose.msra.mxu0 0.0
        %1400 = vmatprep.subr.mxu0 0.0
        %1401 = vmatpush1.xpose.msra.mxu0 0.0
        %1402 = vmatprep.subr.mxu0 0.0
        %1403 = vmatpush1.xpose.msra.mxu0 0.0
        %1404 = vmatprep.subr.mxu0 0.0
        %1405 = vmatpush1.xpose.msra.mxu0 0.0
        %1406 = vmatprep.subr.mxu0 0.0
        %1407 = vmatpush1.xpose.msra.mxu0 0.0
        %1408 = vmatprep.subr.mxu0 0.0
        %1409 = vmatpush1.xpose.msra.mxu0 0.0
        %1410 = vmatprep.subr.mxu0 0.0
        %1411 = vmatpush1.xpose.msra.mxu0 0.0
        %1412 = vmatprep.subr.mxu0 0.0
        %1413 = vmatpush1.xpose.msra.mxu0 0.0
        %1414 = vmatprep.subr.mxu0 0.0
        %1415 = vmatpush1.xpose.msra.mxu0 0.0
        %1416 = vmatprep.subr.mxu0 0.0
        %1417 = vmatpush1.xpose.msra.mxu0 0.0
        %1418 = vmatprep.subr.mxu0 0.0
        %1419 = vmatpush1.xpose.msra.mxu0 0.0
        %1420 = vmatprep.subr.mxu0 0.0
        %1421 = vmatpush1.xpose.msra.mxu0 0.0
        %1422 = vmatprep.subr.mxu0 0.0
        %1423 = vmatpush1.xpose.msra.mxu0 0.0
        %1424 = vmatprep.subr.mxu0 0.0
        %1425 = vmatpush1.xpose.msra.mxu0 0.0
        %1426 = vmatprep.subr.mxu0 0.0
        %1427 = vmatpush1.xpose.msra.mxu0 0.0
        %1428 = vmatprep.subr.mxu0 0.0
        %1429 = vmatpush1.xpose.msra.mxu0 0.0
        %1430 = vmatprep.subr.mxu0 0.0
        %1431 = vmatpush1.xpose.msra.mxu0 0.0
        %1432 = vmatprep.mubr.f32.mxu0 0.0
        %1433 = vmatmul.mubr.f32.gmra.mrb[0].mxu0 %v1362
        %v1434 = vpop.f32.mrb[0].mxu0
        %v1435 = vadd.f32 0.0, %v1434
        %v1436 = vpop.f32.mrb[0].mxu0
        %1437 = vdwg.mxu0
        %v1438 = vmul.f32 %v1435, 0.35355338
        %v1439 = vsel %vm890, %v1438, -inf
        %1440 = vmax.xlane.f32.xlu0 %v1439
        %v1441 = vpop.xlane.xlu0 %1440
        %v1442 = vsub.f32 %v1438, %v1441
        %v1443 = vmul.f32 %v1442, 1.442695
        %v1444 = vpow.pop %v1443
        %v1445 = vsel %vm890, %v1444, 0.0
        %1446 = vadd.xlane.f32.xlu0 %v1445
        %v1447 = vpop.xlane.xlu0 %1446
        %1450 = vrot.lane.b32.xlu0 %v1352, 104
        %v1451 = vpop.permute.xlu0 %1450
        %1452 = vrot.lane.b32.xlu0 %v1353, 104
        %v1453 = vpop.permute.xlu0 %1452
        %v1457 = vsel %vm890, %v1444, 0
        %1459 = vmatprep.subr.mxu0 0.0
        %1460 = vmatpush1.msra.mxu0 %v1451
        %1461 = vmatprep.subr.mxu0 0.0
        %1462 = vmatpush1.msra.mxu0 %v1453
        %1463 = vmatprep.subr.mxu0 0.0
        %1464 = vmatpush1.msra.mxu0 0.0
        %1465 = vmatprep.subr.mxu0 0.0
        %1466 = vmatpush1.msra.mxu0 0.0
        %1467 = vmatprep.subr.mxu0 0.0
        %1468 = vmatpush1.msra.mxu0 0.0
        %1469 = vmatprep.subr.mxu0 0.0
        %1470 = vmatpush1.msra.mxu0 0.0
        %1471 = vmatprep.subr.mxu0 0.0
        %1472 = vmatpush1.msra.mxu0 0.0
        %1473 = vmatprep.subr.mxu0 0.0
        %1474 = vmatpush1.msra.mxu0 0.0
        %1475 = vmatprep.subr.mxu0 0.0
        %1476 = vmatpush1.msra.mxu0 0.0
        %1477 = vmatprep.subr.mxu0 0.0
        %1478 = vmatpush1.msra.mxu0 0.0
        %1479 = vmatprep.subr.mxu0 0.0
        %1480 = vmatpush1.msra.mxu0 0.0
        %1481 = vmatprep.subr.mxu0 0.0
        %1482 = vmatpush1.msra.mxu0 0.0
        %1483 = vmatprep.subr.mxu0 0.0
        %1484 = vmatpush1.msra.mxu0 0.0
        %1485 = vmatprep.subr.mxu0 0.0
        %1486 = vmatpush1.msra.mxu0 0.0
        %1487 = vmatprep.subr.mxu0 0.0
        %1488 = vmatpush1.msra.mxu0 0.0
        %1489 = vmatprep.subr.mxu0 0.0
        %1490 = vmatpush1.msra.mxu0 0.0
        %1491 = vmatprep.subr.mxu0 0.0
        %1492 = vmatpush1.msra.mxu0 0.0
        %1493 = vmatprep.subr.mxu0 0.0
        %1494 = vmatpush1.msra.mxu0 0.0
        %1495 = vmatprep.subr.mxu0 0.0
        %1496 = vmatpush1.msra.mxu0 0.0
        %1497 = vmatprep.subr.mxu0 0.0
        %1498 = vmatpush1.msra.mxu0 0.0
        %1499 = vmatprep.subr.mxu0 0.0
        %1500 = vmatpush1.msra.mxu0 0.0
        %1501 = vmatprep.subr.mxu0 0.0
        %1502 = vmatpush1.msra.mxu0 0.0
        %1503 = vmatprep.subr.mxu0 0.0
        %1504 = vmatpush1.msra.mxu0 0.0
        %1505 = vmatprep.subr.mxu0 0.0
        %1506 = vmatpush1.msra.mxu0 0.0
        %1507 = vmatprep.subr.mxu0 0.0
        %1508 = vmatpush1.msra.mxu0 0.0
        %1509 = vmatprep.subr.mxu0 0.0
        %1510 = vmatpush1.msra.mxu0 0.0
        %1511 = vmatprep.subr.mxu0 0.0
        %1512 = vmatpush1.msra.mxu0 0.0
        %1513 = vmatprep.subr.mxu0 0.0
        %1514 = vmatpush1.msra.mxu0 0.0
        %1515 = vmatprep.subr.mxu0 0.0
        %1516 = vmatpush1.msra.mxu0 0.0
        %1517 = vmatprep.subr.mxu0 0.0
        %1518 = vmatpush1.msra.mxu0 0.0
        %1519 = vmatprep.subr.mxu0 0.0
        %1520 = vmatpush1.msra.mxu0 0.0
        %1521 = vmatprep.subr.mxu0 0.0
        %1522 = vmatpush1.msra.mxu0 0.0
        %1523 = vmatprep.mubr.f32.mxu0 0.0
        %1524 = vmatmul.mubr.f32.gmra.mrb[0].mxu0 %v1457
        %v1525 = vpop.f32.mrb[0].mxu0
        %v1526 = vadd.f32 0.0, %v1525
        %v1527 = vpop.f32.mrb[0].mxu0
        %1528 = vdwg.mxu0
        %v1529 = vrcp.pop %v1447
        %v1530 = vmul.f32 %v1526, %v1529
        %1532 = vrot.lane.b32.xlu0 %v1530, 24
        %v1533 = vpop.permute.xlu0 %1532
        %vm1535 = vcmask 261312
        %1536 = vst.msk [vmem:[#allocation4] sm:$0xff] %vm1535, %v1533
        %v1537 = vld [vmem:[#allocation4] sm:$0xff]
        %v1538 = vld [vmem:[#allocation5] sm:$0xff]
        %v1539 = vld [vmem:[#allocation5 + $0x8] sm:$0xff]
        %v1540 = vld [vmem:[#allocation5 + $0x10] sm:$0xff]
        %v1541 = vld [vmem:[#allocation5 + $0x18] sm:$0xff]
        %v1542 = vld [vmem:[%s6] sm:$0x1]
        %v1544 = vlaneseq
        %v1545 = vshrl.u32 %v1544, 7
        %v1546 = vsub.s32 0, %v1545
        %v1547 = vrot.slane %v1542, %v1546
        %v1550 = vsel %vm685, %v1537, 0
        %1552 = vmatprep.subr.mxu0 0.0
        %1553 = vmatpush1.msra.mxu0 %v1538
        %1554 = vmatprep.subr.mxu0 0.0
        %1555 = vmatpush1.msra.mxu0 %v1539
        %1556 = vmatprep.subr.mxu0 0.0
        %1557 = vmatpush1.msra.mxu0 %v1540
        %1558 = vmatprep.subr.mxu0 0.0
        %1559 = vmatpush1.msra.mxu0 %v1541
        %1560 = vmatprep.subr.mxu0 0.0
        %1561 = vmatpush1.msra.mxu0 0.0
        %1562 = vmatprep.subr.mxu0 0.0
        %1563 = vmatpush1.msra.mxu0 0.0
        %1564 = vmatprep.subr.mxu0 0.0
        %1565 = vmatpush1.msra.mxu0 0.0
        %1566 = vmatprep.subr.mxu0 0.0
        %1567 = vmatpush1.msra.mxu0 0.0
        %1568 = vmatprep.subr.mxu0 0.0
        %1569 = vmatpush1.msra.mxu0 0.0
        %1570 = vmatprep.subr.mxu0 0.0
        %1571 = vmatpush1.msra.mxu0 0.0
        %1572 = vmatprep.subr.mxu0 0.0
        %1573 = vmatpush1.msra.mxu0 0.0
        %1574 = vmatprep.subr.mxu0 0.0
        %1575 = vmatpush1.msra.mxu0 0.0
        %1576 = vmatprep.subr.mxu0 0.0
        %1577 = vmatpush1.msra.mxu0 0.0
        %1578 = vmatprep.subr.mxu0 0.0
        %1579 = vmatpush1.msra.mxu0 0.0
        %1580 = vmatprep.subr.mxu0 0.0
        %1581 = vmatpush1.msra.mxu0 0.0
        %1582 = vmatprep.subr.mxu0 0.0
        %1583 = vmatpush1.msra.mxu0 0.0
        %1584 = vmatprep.subr.mxu0 0.0
        %1585 = vmatpush1.msra.mxu0 0.0
        %1586 = vmatprep.subr.mxu0 0.0
        %1587 = vmatpush1.msra.mxu0 0.0
        %1588 = vmatprep.subr.mxu0 0.0
        %1589 = vmatpush1.msra.mxu0 0.0
        %1590 = vmatprep.subr.mxu0 0.0
        %1591 = vmatpush1.msra.mxu0 0.0
        %1592 = vmatprep.subr.mxu0 0.0
        %1593 = vmatpush1.msra.mxu0 0.0
        %1594 = vmatprep.subr.mxu0 0.0
        %1595 = vmatpush1.msra.mxu0 0.0
        %1596 = vmatprep.subr.mxu0 0.0
        %1597 = vmatpush1.msra.mxu0 0.0
        %1598 = vmatprep.subr.mxu0 0.0
        %1599 = vmatpush1.msra.mxu0 0.0
        %1600 = vmatprep.subr.mxu0 0.0
        %1601 = vmatpush1.msra.mxu0 0.0
        %1602 = vmatprep.subr.mxu0 0.0
        %1603 = vmatpush1.msra.mxu0 0.0
        %1604 = vmatprep.subr.mxu0 0.0
        %1605 = vmatpush1.msra.mxu0 0.0
        %1606 = vmatprep.subr.mxu0 0.0
        %1607 = vmatpush1.msra.mxu0 0.0
        %1608 = vmatprep.subr.mxu0 0.0
        %1609 = vmatpush1.msra.mxu0 0.0
        %1610 = vmatprep.subr.mxu0 0.0
        %1611 = vmatpush1.msra.mxu0 0.0
        %1612 = vmatprep.subr.mxu0 0.0
        %1613 = vmatpush1.msra.mxu0 0.0
        %1614 = vmatprep.subr.mxu0 0.0
        %1615 = vmatpush1.msra.mxu0 0.0
        %1616 = vmatprep.mubr.f32.mxu0 0.0
        %1617 = vmatmul.mubr.f32.gmra.mrb[0].mxu0 %v1550
        %v1618 = vpop.f32.mrb[0].mxu0
        %v1619 = vadd.f32 %v1547, %v1618
        %v1620 = vpop.f32.mrb[0].mxu0
        %1621 = vdwg.mxu0
        %v1622 = vadd.f32 %v682, %v1619
        %v1623 = vld [vmem:[%s13] sm:$0x1]
        %v1624 = vld [vmem:[%s14] sm:$0x1]
        %v1625 = vsel %vm685, %v1622, 0.0
        %1626 = vadd.xlane.f32.xlu0 %v1625
        %v1627 = vpop.xlane.xlu0 %1626
        %v1628 = vmul.f32 %v1627, %v689
        %v1629 = vsub.f32 %v1622, %v1628
        %v1630 = vmul.f32 %v1629, %v1629
        %v1631 = vsel %vm685, %v1630, 0.0
        %1632 = vadd.xlane.f32.xlu0 %v1631
        %v1633 = vpop.xlane.xlu0 %1632
        %v1634 = vmul.f32 %v1633, %v689
        %v1635 = vadd.f32 %v1634, 1e-06
        %v1636 = vrsqrt.pop %v1635
        %v1637 = vmul.f32 %v1635, %v1636
        %vm1638 = vcmp.eq.f32.partialorder %v1635, inf
        %v1639 = vsel %vm1638, %v1635, %v1637
        %vm1640 = vcmp.eq.f32.partialorder %v1635, 0.0
        %v1641 = vand.u32 %v1635, 2147483648
        %v1642 = vsel %vm1640, %v1641, %v1639
        %v1643 = vrcp.pop %v1642
        %v1644 = vmul.f32 %v1629, %v1643
        %v1646 = vlaneseq
        %v1647 = vshrl.u32 %v1646, 7
        %v1648 = vsub.s32 0, %v1647
        %v1649 = vrot.slane %v1623, %v1648
        %v1651 = vmul.f32 %v1644, %v1649
        %v1653 = vlaneseq
        %v1654 = vshrl.u32 %v1653, 7
        %v1655 = vsub.s32 0, %v1654
        %v1656 = vrot.slane %v1624, %v1655
        %v1658 = vadd.f32 %v1651, %v1656
        %v1659 = vld [vmem:[#allocation8] sm:$0xff]
        %v1660 = vld [vmem:[#allocation8 + $0x8] sm:$0xff]
        %v1661 = vld [vmem:[#allocation8 + $0x10] sm:$0xff]
        %v1662 = vld [vmem:[#allocation8 + $0x18] sm:$0xff]
        %v1663 = vld [vmem:[%s10] sm:$0x1]
        %v1665 = vlaneseq
        %v1666 = vshrl.u32 %v1665, 7
        %v1667 = vsub.s32 0, %v1666
        %v1668 = vrot.slane %v1663, %v1667
        %v1671 = vsel %vm685, %v1658, 0
        %1673 = vmatprep.subr.mxu0 0.0
        %1674 = vmatpush1.msra.mxu0 %v1659
        %1675 = vmatprep.subr.mxu0 0.0
        %1676 = vmatpush1.msra.mxu0 %v1660
        %1677 = vmatprep.subr.mxu0 0.0
        %1678 = vmatpush1.msra.mxu0 %v1661
        %1679 = vmatprep.subr.mxu0 0.0
        %1680 = vmatpush1.msra.mxu0 %v1662
        %1681 = vmatprep.subr.mxu0 0.0
        %1682 = vmatpush1.msra.mxu0 0.0
        %1683 = vmatprep.subr.mxu0 0.0
        %1684 = vmatpush1.msra.mxu0 0.0
        %1685 = vmatprep.subr.mxu0 0.0
        %1686 = vmatpush1.msra.mxu0 0.0
        %1687 = vmatprep.subr.mxu0 0.0
        %1688 = vmatpush1.msra.mxu0 0.0
        %1689 = vmatprep.subr.mxu0 0.0
        %1690 = vmatpush1.msra.mxu0 0.0
        %1691 = vmatprep.subr.mxu0 0.0
        %1692 = vmatpush1.msra.mxu0 0.0
        %1693 = vmatprep.subr.mxu0 0.0
        %1694 = vmatpush1.msra.mxu0 0.0
        %1695 = vmatprep.subr.mxu0 0.0
        %1696 = vmatpush1.msra.mxu0 0.0
        %1697 = vmatprep.subr.mxu0 0.0
        %1698 = vmatpush1.msra.mxu0 0.0
        %1699 = vmatprep.subr.mxu0 0.0
        %1700 = vmatpush1.msra.mxu0 0.0
        %1701 = vmatprep.subr.mxu0 0.0
        %1702 = vmatpush1.msra.mxu0 0.0
        %1703 = vmatprep.subr.mxu0 0.0
        %1704 = vmatpush1.msra.mxu0 0.0
        %1705 = vmatprep.subr.mxu0 0.0
        %1706 = vmatpush1.msra.mxu0 0.0
        %1707 = vmatprep.subr.mxu0 0.0
        %1708 = vmatpush1.msra.mxu0 0.0
        %1709 = vmatprep.subr.mxu0 0.0
        %1710 = vmatpush1.msra.mxu0 0.0
        %1711 = vmatprep.subr.mxu0 0.0
        %1712 = vmatpush1.msra.mxu0 0.0
        %1713 = vmatprep.subr.mxu0 0.0
        %1714 = vmatpush1.msra.mxu0 0.0
        %1715 = vmatprep.subr.mxu0 0.0
        %1716 = vmatpush1.msra.mxu0 0.0
        %1717 = vmatprep.subr.mxu0 0.0
        %1718 = vmatpush1.msra.mxu0 0.0
        %1719 = vmatprep.subr.mxu0 0.0
        %1720 = vmatpush1.msra.mxu0 0.0
        %1721 = vmatprep.subr.mxu0 0.0
        %1722 = vmatpush1.msra.mxu0 0.0
        %1723 = vmatprep.subr.mxu0 0.0
        %1724 = vmatpush1.msra.mxu0 0.0
        %1725 = vmatprep.subr.mxu0 0.0
        %1726 = vmatpush1.msra.mxu0 0.0
        %1727 = vmatprep.subr.mxu0 0.0
        %1728 = vmatpush1.msra.mxu0 0.0
        %1729 = vmatprep.subr.mxu0 0.0
        %1730 = vmatpush1.msra.mxu0 0.0
        %1731 = vmatprep.subr.mxu0 0.0
        %1732 = vmatpush1.msra.mxu0 0.0
        %1733 = vmatprep.subr.mxu0 0.0
        %1734 = vmatpush1.msra.mxu0 0.0
        %1735 = vmatprep.subr.mxu0 0.0
        %1736 = vmatpush1.msra.mxu0 0.0
        %1737 = vmatprep.mubr.f32.mxu0 0.0
        %1738 = vmatmul.mubr.f32.gmra.mrb[0].mxu0 %v1671
        %v1739 = vpop.f32.mrb[0].mxu0
        %v1740 = vadd.f32 %v1668, %v1739
        %v1741 = vpop.f32.mrb[0].mxu0
        %1742 = vdwg.mxu0
        %v1743 = vmax.f32 %v1740, 0.0
        %v1744 = vld [vmem:[%s11] sm:$0xff]
        %v1745 = vld [vmem:[%s11 + $0x8] sm:$0xff]
        %v1746 = vld [vmem:[%s11 + $0x10] sm:$0xff]
        %v1747 = vld [vmem:[%s11 + $0x18] sm:$0xff]
        %v1748 = vld [vmem:[%s11 + $0x20] sm:$0xff]
        %v1749 = vld [vmem:[%s11 + $0x28] sm:$0xff]
        %v1750 = vld [vmem:[%s11 + $0x30] sm:$0xff]
        %v1751 = vld [vmem:[%s11 + $0x38] sm:$0xff]
        %v1752 = vld [vmem:[%s12] sm:$0x1]
        %v1754 = vlaneseq
        %v1755 = vshrl.u32 %v1754, 7
        %v1756 = vsub.s32 0, %v1755
        %v1757 = vrot.slane %v1752, %v1756
        %vm1759 = vcmask 523264
        %v1761 = vsel %vm1759, %v1743, 0
        %1763 = vmatprep.subr.mxu0 0.0
        %1764 = vmatpush1.msra.mxu0 %v1744
        %1765 = vmatprep.subr.mxu0 0.0
        %1766 = vmatpush1.msra.mxu0 %v1745
        %1767 = vmatprep.subr.mxu0 0.0
        %1768 = vmatpush1.msra.mxu0 %v1746
        %1769 = vmatprep.subr.mxu0 0.0
        %1770 = vmatpush1.msra.mxu0 %v1747
        %1771 = vmatprep.subr.mxu0 0.0
        %1772 = vmatpush1.msra.mxu0 %v1748
        %1773 = vmatprep.subr.mxu0 0.0
        %1774 = vmatpush1.msra.mxu0 %v1749
        %1775 = vmatprep.subr.mxu0 0.0
        %1776 = vmatpush1.msra.mxu0 %v1750
        %1777 = vmatprep.subr.mxu0 0.0
        %1778 = vmatpush1.msra.mxu0 %v1751
        %1779 = vmatprep.subr.mxu0 0.0
        %1780 = vmatpush1.msra.mxu0 0.0
        %1781 = vmatprep.subr.mxu0 0.0
        %1782 = vmatpush1.msra.mxu0 0.0
        %1783 = vmatprep.subr.mxu0 0.0
        %1784 = vmatpush1.msra.mxu0 0.0
        %1785 = vmatprep.subr.mxu0 0.0
        %1786 = vmatpush1.msra.mxu0 0.0
        %1787 = vmatprep.subr.mxu0 0.0
        %1788 = vmatpush1.msra.mxu0 0.0
        %1789 = vmatprep.subr.mxu0 0.0
        %1790 = vmatpush1.msra.mxu0 0.0
        %1791 = vmatprep.subr.mxu0 0.0
        %1792 = vmatpush1.msra.mxu0 0.0
        %1793 = vmatprep.subr.mxu0 0.0
        %1794 = vmatpush1.msra.mxu0 0.0
        %1795 = vmatprep.subr.mxu0 0.0
        %1796 = vmatpush1.msra.mxu0 0.0
        %1797 = vmatprep.subr.mxu0 0.0
        %1798 = vmatpush1.msra.mxu0 0.0
        %1799 = vmatprep.subr.mxu0 0.0
        %1800 = vmatpush1.msra.mxu0 0.0
        %1801 = vmatprep.subr.mxu0 0.0
        %1802 = vmatpush1.msra.mxu0 0.0
        %1803 = vmatprep.subr.mxu0 0.0
        %1804 = vmatpush1.msra.mxu0 0.0
        %1805 = vmatprep.subr.mxu0 0.0
        %1806 = vmatpush1.msra.mxu0 0.0
        %1807 = vmatprep.subr.mxu0 0.0
        %1808 = vmatpush1.msra.mxu0 0.0
        %1809 = vmatprep.subr.mxu0 0.0
        %1810 = vmatpush1.msra.mxu0 0.0
        %1811 = vmatprep.subr.mxu0 0.0
        %1812 = vmatpush1.msra.mxu0 0.0
        %1813 = vmatprep.subr.mxu0 0.0
        %1814 = vmatpush1.msra.mxu0 0.0
        %1815 = vmatprep.subr.mxu0 0.0
        %1816 = vmatpush1.msra.mxu0 0.0
        %1817 = vmatprep.subr.mxu0 0.0
        %1818 = vmatpush1.msra.mxu0 0.0
        %1819 = vmatprep.subr.mxu0 0.0
        %1820 = vmatpush1.msra.mxu0 0.0
        %1821 = vmatprep.subr.mxu0 0.0
        %1822 = vmatpush1.msra.mxu0 0.0
        %1823 = vmatprep.subr.mxu0 0.0
        %1824 = vmatpush1.msra.mxu0 0.0
        %1825 = vmatprep.subr.mxu0 0.0
        %1826 = vmatpush1.msra.mxu0 0.0
        %1827 = vmatprep.mubr.f32.mxu0 0.0
        %1828 = vmatmul.mubr.f32.gmra.mrb[0].mxu0 %v1761
        %v1829 = vpop.f32.mrb[0].mxu0
        %v1830 = vadd.f32 %v1757, %v1829
        %v1831 = vpop.f32.mrb[0].mxu0
        %1832 = vdwg.mxu0
        %v1833 = vadd.f32 %v1622, %v1830
        %1834 = vst.msk [vmem:[%s531] sm:$0xff] %vm685, %v1833
        %s1835 = sand.u32 %s373, 1
        %s1836 = scalar_lea.sflag [#allocation7], %s1835
        %s1837 = sand.u32 %s373, 1
        %s1838 = smul.addr %s1837, 8
        %s1839 = scalar_lea.vmem [#allocation10], %s1838
        // Predicated region
        $region100: #{tpu_custom_call.1} parent=79 // pred_check
          %p1840 = pneg %p383
        $region101: #{tpu_custom_call.1} parent=79 // pred_check_branch
          %1842 = sbr.rel (%p1840) target = $region103
        $region102: #{tpu_custom_call.1} parent=79 // pred_region
          %s1844 = ssub.s32 128, 128
          %1845 = vsyncadd %s1836, %s1844
          %s1846 = smul.addr %s35, 2
          %s1847 = sadd.s32 %s36, %s1846
          %s1848 = smul.addr %s1847, 128
          %s1849 = scalar_lea.hbm %s15, %s1848
          %s1851 = sshll.u32 %s1839, 4
          %s1852 = int_to_ptr.vmem [resolvable:$true] %s1851
          %1854 = dma.vmem_to_hbm [thread:$0]  %s1852, 128, %s1849, %s1836
        $region103: #{tpu_custom_call.1} parent=79 // pred_fallthru
          _
      $region80: #{tpu_custom_call.1} parent=5 // pred_fallthru
        _
      %p1855 = scmp.le.s32.totalorder 2, %s26
      // Predicated region
      $region104: #{tpu_custom_call.1} parent=5 // pred_check
        %p1856 = pneg %p1855
      $region105: #{tpu_custom_call.1} parent=5 // pred_check_branch
        %1858 = sbr.rel (%p1856) target = $region107
      $region106: #{tpu_custom_call.1} parent=5 // pred_region
        %s1859 = ssub.s32 %s26, 2
        // Predicated region
        $region108: #{tpu_custom_call.1} parent=106 // pred_check
          %p1860 = pneg %p389
        $region109: #{tpu_custom_call.1} parent=106 // pred_check_branch
          %1862 = sbr.rel (%p1860) target = $region111
        $region110: #{tpu_custom_call.1} parent=106 // pred_region
          %s1863 = sand.u32 %s374, 1
          %s1864 = scalar_lea.sflag [#allocation7], %s1863
          %s1865 = sand.u32 %s374, 1
          %s1866 = smul.addr %s1865, 8
          %s1867 = scalar_lea.vmem [#allocation10], %s1866
          %1868 = dma.done %s1864, 128
        $region111: #{tpu_custom_call.1} parent=106 // pred_fallthru
          _
      $region107: #{tpu_custom_call.1} parent=5 // pred_fallthru
        _
    $region6: #{tpu_custom_call.1} parent=1 // loop_footer
      %s30 = sadd.s32 1, %s26
    $region7: #{tpu_custom_call.1} parent=1 // loop_footer_branch
      %25 = sbr.rel target = $region3
    $region8: #{tpu_custom_call.1} parent=1 // loop_exit
      _
    %1869 = vsyncpa [#allocation6], 1
    %s1870 = scalar_lea.sflag [#allocation6], 1
    %1871 = vsyncpa %s1870, 1
    %1872 = vsyncpa [#allocation9], 1
    %1873 = vsyncpa [#allocation7], 1
    %s1874 = scalar_lea.sflag [#allocation7], 1
    %1875 = vsyncpa %s1874, 1

</llo_original>
